<compile_context>
chip_gen: v7x
topology: tpu7x:2x2x1
jax: 0.10.0
libtpu: 0.0.40
codegen_flags: <defaults>
</compile_context>

<pallas_src>
import functools
import math

import jax
import jax.numpy as jnp
import numpy as np
from jax.experimental import pallas as pl
from jax.experimental.pallas import tpu as pltpu


def _round_up(n, m):
    return ((n + m - 1) // m) * m


# ----------------------------- Pallas kernel -----------------------------------------
def attention_q_kernel(x_ref, abias_ref, w_in_ref,
                       wqkv_ref, wo_ref, w1_ref, b1_ref, w2_ref, b2_ref,
                       wm1_ref, bm1_ref, wm2_ref, bm2_ref,
                       o_ref):
    # x_ref block: (TILE_G, S, R) -> TILE_G graphs per grid step.
    TG, S, R = x_ref.shape
    E = w_in_ref.shape[-1]
    md = w_in_ref.dtype                     # matmul operand dtype (f32 default, bf16 opt)
    scale = 1.0 / math.sqrt(E)

    # Input projection. The one-hot agent id and b_in are pre-folded into a per-graph
    # bias row (abias), so x carries only the resource features.
    x = x_ref[...].reshape(TG * S, R)
    h = jnp.dot(x.astype(md), w_in_ref[...], preferred_element_type=jnp.float32)
    h = (h.reshape(TG, S, E) + abias_ref[...][:, None, :]).reshape(TG * S, E)

    n_layers = wqkv_ref.shape[0]            # static
    for l in range(n_layers):
        # Fused Q/K/V projection: one (TG*S, E) x (E, 3E) matmul per layer.
        qkv = jnp.dot(h.astype(md), wqkv_ref[l], preferred_element_type=jnp.float32)
        q = qkv[:, :E].reshape(TG, S, E)
        k = qkv[:, E:2 * E].reshape(TG, S, E)
        v = qkv[:, 2 * E:].reshape(TG, S, E)

        # Per-graph scaled dot-product attention; contract last dims of q and k
        # directly (transposed-RHS dimension numbers, no explicit .T / XLU transpose).
        s = jax.lax.dot_general(q.astype(md), k.astype(md),
                                (((2,), (2,)), ((0,), (0,))),
                                preferred_element_type=jnp.float32) * scale  # (TG,S,S)
        s = s - jnp.max(s, axis=-1, keepdims=True)
        p = jnp.exp(s)
        p = p * pl.reciprocal(jnp.sum(p, axis=-1, keepdims=True), approx=True)
        attn = jax.lax.dot_general(p.astype(md), v.astype(md),
                                   (((2,), (1,)), ((0,), (0,))),
                                   preferred_element_type=jnp.float32)       # (TG,S,E)

        h = h + jnp.dot(attn.reshape(TG * S, E).astype(md), wo_ref[l],
                        preferred_element_type=jnp.float32)
        # Position-wise FFN with residual (weights shared across graphs -> one big dot).
        ff = jnp.maximum(
            jnp.dot(h.astype(md), w1_ref[l], preferred_element_type=jnp.float32)
            + b1_ref[l], 0.0)
        h = h + jnp.dot(ff.astype(md), w2_ref[l],
                        preferred_element_type=jnp.float32) + b2_ref[l]

    # Graph embedding: mean pool over entities.
    g = jnp.mean(h.reshape(TG, S, E), axis=1)                                # (TG, E)

    # q_net MLP: embed_dim -> hidden -> n_actions, all TILE_G graphs at once.
    hid = jnp.maximum(
        jnp.dot(g.astype(md), wm1_ref[...], preferred_element_type=jnp.float32)
        + bm1_ref[...], 0.0)
    o_ref[...] = (jnp.dot(hid.astype(md), wm2_ref[...],
                          preferred_element_type=jnp.float32) + bm2_ref[...])  # (TG, A)


# ----------------------------- wrapper ------------------------------------------------
def attention_q_forward(state, params, *, tile_g=128, matmul_dtype=jnp.float32):
    """state: (*batch, n_agents, n_entities, resource_dim) -> (*batch, n_agents, n_actions)."""
    n_agents = params['n_agents']
    S = state.shape[-2]
    R = state.shape[-1]
    batch_shape = tuple(state.shape[:-2])           # == (*batch, n_agents), matches torch
    G = int(np.prod(batch_shape))

    x = state.reshape(G, S, R).astype(jnp.float32)

    # Fold one-hot agent id through the input projection:
    #   [state, onehot(a)] @ w_in == state @ w_in[:R] + w_in[R + a]
    agent_idx = jnp.arange(G, dtype=jnp.int32) % n_agents
    abias = (params['w_in'][R:][agent_idx] + params['b_in']).astype(jnp.float32)  # (G, E)

    E = params['w_in'].shape[1]
    A = params['wm2'].shape[1]

    # Fuse Q/K/V weights into one (n_layers, E, 3E) matrix per layer.
    wqkv = jnp.concatenate([params['wq'], params['wk'], params['wv']], axis=-1)

    # Pick TILE_G so each grid step feeds the MXU TILE_G*S rows; pad G up to a multiple.
    tile_g = _round_up(max(tile_g, 8), 8)
    TG = min(tile_g, _round_up(G, 8))
    G_pad = _round_up(G, TG)
    if G_pad != G:
        x = jnp.pad(x, ((0, G_pad - G), (0, 0), (0, 0)))
        abias = jnp.pad(abias, ((0, G_pad - G), (0, 0)))

    def cast_w(w):
        return w.astype(matmul_dtype)

    weights = [
        cast_w(params['w_in'][:R]),          # w_in (resource part only)
        cast_w(wqkv),                        # fused qkv
        cast_w(params['wo']),
        cast_w(params['w1']), params['b1'].astype(jnp.float32),
        cast_w(params['w2']), params['b2'].astype(jnp.float32),
        cast_w(params['wm1']), params['bm1'].astype(jnp.float32),
        cast_w(params['wm2']), params['bm2'].astype(jnp.float32),
    ]

    def full_spec(arr):
        nd = arr.ndim
        return pl.BlockSpec(arr.shape, lambda g, _nd=nd: (0,) * _nd)

    in_specs = [
        pl.BlockSpec((TG, S, R), lambda g: (g, 0, 0)),
        pl.BlockSpec((TG, E), lambda g: (g, 0)),
    ] + [full_spec(w) for w in weights]

    out = pl.pallas_call(
        attention_q_kernel,
        out_shape=jax.ShapeDtypeStruct((G_pad, A), jnp.float32),
        grid=(G_pad // TG,),
        in_specs=in_specs,
        out_specs=pl.BlockSpec((TG, A), lambda g: (g, 0)),   # lane/row-dense output slab
        compiler_params=pltpu.CompilerParams(dimension_semantics=("parallel",)),
    )(x, abias, *weights)

    return out[:G].reshape(*batch_shape, A)


# ----------------------------- deterministic parameter init ---------------------------
def init_params(key, *, resource_dim, n_agents, embed_dim, n_layers, ff_dim,
                q_hidden, n_actions):
    F = resource_dim + n_agents
    ks = jax.random.split(key, 14)

    def w(k, shape, fan_in):
        return jax.random.normal(k, shape, jnp.float32) / np.sqrt(fan_in)

    return dict(
        n_agents=n_agents,
        w_in=w(ks[0], (F, embed_dim), F),
        b_in=0.01 * jax.random.normal(ks[1], (1, embed_dim), jnp.float32),
        wq=w(ks[2], (n_layers, embed_dim, embed_dim), embed_dim),
        wk=w(ks[3], (n_layers, embed_dim, embed_dim), embed_dim),
        wv=w(ks[4], (n_layers, embed_dim, embed_dim), embed_dim),
        wo=w(ks[5], (n_layers, embed_dim, embed_dim), embed_dim),
        w1=w(ks[6], (n_layers, embed_dim, ff_dim), embed_dim),
        b1=0.01 * jax.random.normal(ks[7], (n_layers, 1, ff_dim), jnp.float32),
        w2=w(ks[8], (n_layers, ff_dim, embed_dim), ff_dim),
        b2=0.01 * jax.random.normal(ks[9], (n_layers, 1, embed_dim), jnp.float32),
        wm1=w(ks[10], (embed_dim, q_hidden), embed_dim),
        bm1=0.01 * jax.random.normal(ks[11], (1, q_hidden), jnp.float32),
        wm2=w(ks[12], (q_hidden, n_actions), q_hidden),
        bm2=0.01 * jax.random.normal(ks[13], (1, n_actions), jnp.float32),
    )


# ----------------------------- pure-JAX reference (for checking) ----------------------
def reference_forward(state, params):
    n_agents = params['n_agents']
    S = state.shape[-2]
    batch_shape = tuple(state.shape[:-2])
    agent_id = jnp.eye(n_agents, dtype=state.dtype)
    aid = jnp.broadcast_to(agent_id[:, None, :], batch_shape + (S, n_agents))
    x = jnp.concatenate([state, aid], axis=-1).reshape(-1, S, state.shape[-1] + n_agents)
    x = x.astype(jnp.float32)

    dot = functools.partial(jnp.matmul, precision=jax.lax.Precision.HIGHEST)
    h = dot(x, params['w_in']) + params['b_in']
    E = h.shape[-1]
    for l in range(params['wq'].shape[0]):
        q = dot(h, params['wq'][l])
        k = dot(h, params['wk'][l])
        v = dot(h, params['wv'][l])
        s = dot(q, jnp.swapaxes(k, -1, -2)) / np.sqrt(E)
        p = jax.nn.softmax(s, axis=-1)
        h = h + dot(dot(p, v), params['wo'][l])
        ff = jax.nn.relu(dot(h, params['w1'][l]) + params['b1'][l])
        h = h + dot(ff, params['w2'][l]) + params['b2'][l]
    g = jnp.mean(h, axis=-2)
    hid = jax.nn.relu(dot(g, params['wm1']) + params['bm1'])
    qv = dot(hid, params['wm2']) + params['bm2']
    return qv.reshape(*batch_shape, -1)


# ----------------------------- demo ----------------------------------------------------
if __name__ == "__main__":
    batch = 2
    n_agents = 3
    n_entities = 8        # set/graph size the encoder attends over
    resource_dim = 5
    embed_dim = 32
    n_layers = 2          # config.number_graph_encoder_layers
    ff_dim = 64
    q_hidden = 64         # config.q_layer hidden size
    n_actions = 4

    key = jax.random.PRNGKey(0)
    k_state, k_params = jax.random.split(key)
    state = jax.random.normal(
        k_state, (batch, n_agents, n_entities, resource_dim), jnp.float32)
    params = init_params(
        k_params, resource_dim=resource_dim, n_agents=n_agents, embed_dim=embed_dim,
        n_layers=n_layers, ff_dim=ff_dim, q_hidden=q_hidden, n_actions=n_actions)

    # Default keeps matmul operands in f32. On v6e/v7x pass matmul_dtype=jnp.bfloat16
    # for ~2-3x MXU throughput (accumulation stays f32).
    out = attention_q_forward(state, params, tile_g=128)
    out = jax.block_until_ready(out)

    ref = reference_forward(state, params)
    assert out.shape == (batch, n_agents, n_actions), out.shape
    np.testing.assert_allclose(np.asarray(out), np.asarray(ref), rtol=1e-2, atol=1e-2)

    print("KERNEL_OK")
</pallas_src>

<mosaic_0001>
module attributes {stable_mosaic.version = 11 : i64} {
  func.func @attention_q_kernel(%arg0: i32, %arg1: memref<8x8x5xf32, #tpu.memory_space<vmem>>, %arg2: memref<8x32xf32, #tpu.memory_space<vmem>>, %arg3: memref<5x32xf32, #tpu.memory_space<vmem>>, %arg4: memref<2x32x96xf32, #tpu.memory_space<vmem>>, %arg5: memref<2x32x32xf32, #tpu.memory_space<vmem>>, %arg6: memref<2x32x64xf32, #tpu.memory_space<vmem>>, %arg7: memref<2x1x64xf32, #tpu.memory_space<vmem>>, %arg8: memref<2x64x32xf32, #tpu.memory_space<vmem>>, %arg9: memref<2x1x32xf32, #tpu.memory_space<vmem>>, %arg10: memref<32x64xf32, #tpu.memory_space<vmem>>, %arg11: memref<1x64xf32, #tpu.memory_space<vmem>>, %arg12: memref<64x4xf32, #tpu.memory_space<vmem>>, %arg13: memref<1x4xf32, #tpu.memory_space<vmem>>, %arg14: memref<8x4xf32, #tpu.memory_space<vmem>>) attributes {dimension_semantics = [#tpu.dimension_semantics<parallel>], iteration_bounds = array<i64: 1>, scalar_prefetch = 0 : i64, scratch_operands = 0 : i64, tpu.core_type = #tpu.core_type<tc>, window_params = [{transform_indices = @transform_0, window_bounds = array<i64: 8, 8, 5>}, {transform_indices = @transform_1, window_bounds = array<i64: 8, 32>}, {pipeline_mode = #tpu.pipeline_mode<synchronous>, transform_indices = @transform_2, window_bounds = array<i64: 5, 32>}, {pipeline_mode = #tpu.pipeline_mode<synchronous>, transform_indices = @transform_3, window_bounds = array<i64: 2, 32, 96>}, {pipeline_mode = #tpu.pipeline_mode<synchronous>, transform_indices = @transform_4, window_bounds = array<i64: 2, 32, 32>}, {pipeline_mode = #tpu.pipeline_mode<synchronous>, transform_indices = @transform_5, window_bounds = array<i64: 2, 32, 64>}, {pipeline_mode = #tpu.pipeline_mode<synchronous>, transform_indices = @transform_6, window_bounds = array<i64: 2, 1, 64>}, {pipeline_mode = #tpu.pipeline_mode<synchronous>, transform_indices = @transform_7, window_bounds = array<i64: 2, 64, 32>}, {pipeline_mode = #tpu.pipeline_mode<synchronous>, transform_indices = @transform_8, window_bounds = array<i64: 2, 1, 32>}, {pipeline_mode = #tpu.pipeline_mode<synchronous>, transform_indices = @transform_9, window_bounds = array<i64: 32, 64>}, {pipeline_mode = #tpu.pipeline_mode<synchronous>, transform_indices = @transform_10, window_bounds = array<i64: 1, 64>}, {pipeline_mode = #tpu.pipeline_mode<synchronous>, transform_indices = @transform_11, window_bounds = array<i64: 64, 4>}, {pipeline_mode = #tpu.pipeline_mode<synchronous>, transform_indices = @transform_12, window_bounds = array<i64: 1, 4>}, {transform_indices = @transform_13, window_bounds = array<i64: 8, 4>}]} {
    %c0 = arith.constant 0 : index
    %c0_0 = arith.constant 0 : index
    %c0_1 = arith.constant 0 : index
    %0 = vector.load %arg1[%c0, %c0_0, %c0_1] : memref<8x8x5xf32, #tpu.memory_space<vmem>>, vector<8x8x5xf32>
    %1 = vector.shape_cast %0 : vector<8x8x5xf32> to vector<64x5xf32>
    %c0_2 = arith.constant 0 : index
    %c0_3 = arith.constant 0 : index
    %2 = vector.load %arg3[%c0_2, %c0_3] : memref<5x32xf32, #tpu.memory_space<vmem>>, vector<5x32xf32>
    %cst = arith.constant dense<0.000000e+00> : vector<64x32xf32>
    %3 = tpu.matmul %1, %2, %cst {dimension_numbers = #tpu.dot_dimension_numbers<[1], [0], [0], [1], [0, 0, 1, 1], [], []>} : vector<64x5xf32>, vector<5x32xf32>, vector<64x32xf32> -> vector<64x32xf32>
    %4 = vector.shape_cast %3 : vector<64x32xf32> to vector<8x8x32xf32>
    %c0_4 = arith.constant 0 : index
    %c0_5 = arith.constant 0 : index
    %5 = vector.load %arg2[%c0_4, %c0_5] : memref<8x32xf32, #tpu.memory_space<vmem>>, vector<8x32xf32>
    %6 = vector.shape_cast %5 : vector<8x32xf32> to vector<8x1x32xf32>
    %7 = vector.broadcast %6 : vector<8x1x32xf32> to vector<8x8x32xf32>
    %8 = arith.addf %4, %7 : vector<8x8x32xf32>
    %9 = vector.shape_cast %8 : vector<8x8x32xf32> to vector<64x32xf32>
    %c0_6 = arith.constant 0 : index
    %c0_7 = arith.constant 0 : index
    %c0_8 = arith.constant 0 : index
    %10 = vector.load %arg4[%c0_6, %c0_7, %c0_8] : memref<2x32x96xf32, #tpu.memory_space<vmem>>, vector<1x32x96xf32>
    %11 = vector.shape_cast %10 : vector<1x32x96xf32> to vector<32x96xf32>
    %cst_9 = arith.constant dense<0.000000e+00> : vector<64x96xf32>
    %12 = tpu.matmul %9, %11, %cst_9 {dimension_numbers = #tpu.dot_dimension_numbers<[1], [0], [0], [1], [0, 0, 1, 1], [], []>} : vector<64x32xf32>, vector<32x96xf32>, vector<64x96xf32> -> vector<64x96xf32>
    %13 = vector.extract_strided_slice %12 {offsets = [0, 0], sizes = [64, 32], strides = [1, 1]} : vector<64x96xf32> to vector<64x32xf32>
    %14 = vector.shape_cast %13 : vector<64x32xf32> to vector<8x8x32xf32>
    %15 = vector.extract_strided_slice %12 {offsets = [0, 32], sizes = [64, 32], strides = [1, 1]} : vector<64x96xf32> to vector<64x32xf32>
    %16 = vector.shape_cast %15 : vector<64x32xf32> to vector<8x8x32xf32>
    %17 = vector.extract_strided_slice %12 {offsets = [0, 64], sizes = [64, 32], strides = [1, 1]} : vector<64x96xf32> to vector<64x32xf32>
    %18 = vector.shape_cast %17 : vector<64x32xf32> to vector<8x8x32xf32>
    %cst_10 = arith.constant dense<0.000000e+00> : vector<8x8x8xf32>
    %19 = tpu.matmul %14, %16, %cst_10 {dimension_numbers = #tpu.dot_dimension_numbers<[2], [2], [1], [1], [0, 0, 0, 1, 1, 1], [0], [0]>} : vector<8x8x32xf32>, vector<8x8x32xf32>, vector<8x8x8xf32> -> vector<8x8x8xf32>
    %cst_11 = arith.constant 0.176776692 : f32
    %20 = vector.broadcast %cst_11 : f32 to vector<8x8x8xf32>
    %21 = arith.mulf %19, %20 : vector<8x8x8xf32>
    %cst_12 = arith.constant dense<0xFF800000> : vector<8x8xf32>
    %22 = vector.multi_reduction <maximumf>, %21, %cst_12 [2] : vector<8x8x8xf32> to vector<8x8xf32>
    %23 = vector.shape_cast %22 : vector<8x8xf32> to vector<8x8x1xf32>
    %24 = vector.broadcast %23 : vector<8x8x1xf32> to vector<8x8x8xf32>
    %25 = arith.subf %21, %24 : vector<8x8x8xf32>
    %26 = math.exp %25 : vector<8x8x8xf32>
    %cst_13 = arith.constant dense<0.000000e+00> : vector<8x8xf32>
    %27 = vector.multi_reduction <add>, %26, %cst_13 [2] : vector<8x8x8xf32> to vector<8x8xf32>
    %28 = vector.shape_cast %27 : vector<8x8xf32> to vector<8x8x1xf32>
    %29 = tpu.reciprocal %28 {approx = true} : vector<8x8x1xf32> -> vector<8x8x1xf32>
    %30 = vector.broadcast %29 : vector<8x8x1xf32> to vector<8x8x8xf32>
    %31 = arith.mulf %26, %30 : vector<8x8x8xf32>
    %cst_14 = arith.constant dense<0.000000e+00> : vector<8x8x32xf32>
    %32 = tpu.matmul %31, %18, %cst_14 {dimension_numbers = #tpu.dot_dimension_numbers<[2], [1], [1], [2], [0, 0, 0, 1, 1, 2], [0], [0]>} : vector<8x8x8xf32>, vector<8x8x32xf32>, vector<8x8x32xf32> -> vector<8x8x32xf32>
    %33 = vector.shape_cast %32 : vector<8x8x32xf32> to vector<64x32xf32>
    %c0_15 = arith.constant 0 : index
    %c0_16 = arith.constant 0 : index
    %c0_17 = arith.constant 0 : index
    %34 = vector.load %arg5[%c0_15, %c0_16, %c0_17] : memref<2x32x32xf32, #tpu.memory_space<vmem>>, vector<1x32x32xf32>
    %35 = vector.shape_cast %34 : vector<1x32x32xf32> to vector<32x32xf32>
    %cst_18 = arith.constant dense<0.000000e+00> : vector<64x32xf32>
    %36 = tpu.matmul %33, %35, %cst_18 {dimension_numbers = #tpu.dot_dimension_numbers<[1], [0], [0], [1], [0, 0, 1, 1], [], []>} : vector<64x32xf32>, vector<32x32xf32>, vector<64x32xf32> -> vector<64x32xf32>
    %37 = arith.addf %9, %36 : vector<64x32xf32>
    %c0_19 = arith.constant 0 : index
    %c0_20 = arith.constant 0 : index
    %c0_21 = arith.constant 0 : index
    %38 = vector.load %arg6[%c0_19, %c0_20, %c0_21] : memref<2x32x64xf32, #tpu.memory_space<vmem>>, vector<1x32x64xf32>
    %39 = vector.shape_cast %38 : vector<1x32x64xf32> to vector<32x64xf32>
    %cst_22 = arith.constant dense<0.000000e+00> : vector<64x64xf32>
    %40 = tpu.matmul %37, %39, %cst_22 {dimension_numbers = #tpu.dot_dimension_numbers<[1], [0], [0], [1], [0, 0, 1, 1], [], []>} : vector<64x32xf32>, vector<32x64xf32>, vector<64x64xf32> -> vector<64x64xf32>
    %c0_23 = arith.constant 0 : index
    %c0_24 = arith.constant 0 : index
    %c0_25 = arith.constant 0 : index
    %41 = vector.load %arg7[%c0_23, %c0_24, %c0_25] : memref<2x1x64xf32, #tpu.memory_space<vmem>>, vector<1x1x64xf32>
    %42 = vector.shape_cast %41 : vector<1x1x64xf32> to vector<1x64xf32>
    %43 = vector.broadcast %42 : vector<1x64xf32> to vector<64x64xf32>
    %44 = arith.addf %40, %43 : vector<64x64xf32>
    %cst_26 = arith.constant 0.000000e+00 : f32
    %45 = vector.broadcast %cst_26 : f32 to vector<64x64xf32>
    %46 = arith.maximumf %44, %45 : vector<64x64xf32>
    %c0_27 = arith.constant 0 : index
    %c0_28 = arith.constant 0 : index
    %c0_29 = arith.constant 0 : index
    %47 = vector.load %arg8[%c0_27, %c0_28, %c0_29] : memref<2x64x32xf32, #tpu.memory_space<vmem>>, vector<1x64x32xf32>
    %48 = vector.shape_cast %47 : vector<1x64x32xf32> to vector<64x32xf32>
    %cst_30 = arith.constant dense<0.000000e+00> : vector<64x32xf32>
    %49 = tpu.matmul %46, %48, %cst_30 {dimension_numbers = #tpu.dot_dimension_numbers<[1], [0], [0], [1], [0, 0, 1, 1], [], []>} : vector<64x64xf32>, vector<64x32xf32>, vector<64x32xf32> -> vector<64x32xf32>
    %50 = arith.addf %37, %49 : vector<64x32xf32>
    %c0_31 = arith.constant 0 : index
    %c0_32 = arith.constant 0 : index
    %c0_33 = arith.constant 0 : index
    %51 = vector.load %arg9[%c0_31, %c0_32, %c0_33] : memref<2x1x32xf32, #tpu.memory_space<vmem>>, vector<1x1x32xf32>
    %52 = vector.shape_cast %51 : vector<1x1x32xf32> to vector<1x32xf32>
    %53 = vector.broadcast %52 : vector<1x32xf32> to vector<64x32xf32>
    %54 = arith.addf %50, %53 : vector<64x32xf32>
    %c1 = arith.constant 1 : index
    %c0_34 = arith.constant 0 : index
    %c0_35 = arith.constant 0 : index
    %55 = vector.load %arg4[%c1, %c0_34, %c0_35] : memref<2x32x96xf32, #tpu.memory_space<vmem>>, vector<1x32x96xf32>
    %56 = vector.shape_cast %55 : vector<1x32x96xf32> to vector<32x96xf32>
    %cst_36 = arith.constant dense<0.000000e+00> : vector<64x96xf32>
    %57 = tpu.matmul %54, %56, %cst_36 {dimension_numbers = #tpu.dot_dimension_numbers<[1], [0], [0], [1], [0, 0, 1, 1], [], []>} : vector<64x32xf32>, vector<32x96xf32>, vector<64x96xf32> -> vector<64x96xf32>
    %58 = vector.extract_strided_slice %57 {offsets = [0, 0], sizes = [64, 32], strides = [1, 1]} : vector<64x96xf32> to vector<64x32xf32>
    %59 = vector.shape_cast %58 : vector<64x32xf32> to vector<8x8x32xf32>
    %60 = vector.extract_strided_slice %57 {offsets = [0, 32], sizes = [64, 32], strides = [1, 1]} : vector<64x96xf32> to vector<64x32xf32>
    %61 = vector.shape_cast %60 : vector<64x32xf32> to vector<8x8x32xf32>
    %62 = vector.extract_strided_slice %57 {offsets = [0, 64], sizes = [64, 32], strides = [1, 1]} : vector<64x96xf32> to vector<64x32xf32>
    %63 = vector.shape_cast %62 : vector<64x32xf32> to vector<8x8x32xf32>
    %cst_37 = arith.constant dense<0.000000e+00> : vector<8x8x8xf32>
    %64 = tpu.matmul %59, %61, %cst_37 {dimension_numbers = #tpu.dot_dimension_numbers<[2], [2], [1], [1], [0, 0, 0, 1, 1, 1], [0], [0]>} : vector<8x8x32xf32>, vector<8x8x32xf32>, vector<8x8x8xf32> -> vector<8x8x8xf32>
    %cst_38 = arith.constant 0.176776692 : f32
    %65 = vector.broadcast %cst_38 : f32 to vector<8x8x8xf32>
    %66 = arith.mulf %64, %65 : vector<8x8x8xf32>
    %cst_39 = arith.constant dense<0xFF800000> : vector<8x8xf32>
    %67 = vector.multi_reduction <maximumf>, %66, %cst_39 [2] : vector<8x8x8xf32> to vector<8x8xf32>
    %68 = vector.shape_cast %67 : vector<8x8xf32> to vector<8x8x1xf32>
    %69 = vector.broadcast %68 : vector<8x8x1xf32> to vector<8x8x8xf32>
    %70 = arith.subf %66, %69 : vector<8x8x8xf32>
    %71 = math.exp %70 : vector<8x8x8xf32>
    %cst_40 = arith.constant dense<0.000000e+00> : vector<8x8xf32>
    %72 = vector.multi_reduction <add>, %71, %cst_40 [2] : vector<8x8x8xf32> to vector<8x8xf32>
    %73 = vector.shape_cast %72 : vector<8x8xf32> to vector<8x8x1xf32>
    %74 = tpu.reciprocal %73 {approx = true} : vector<8x8x1xf32> -> vector<8x8x1xf32>
    %75 = vector.broadcast %74 : vector<8x8x1xf32> to vector<8x8x8xf32>
    %76 = arith.mulf %71, %75 : vector<8x8x8xf32>
    %cst_41 = arith.constant dense<0.000000e+00> : vector<8x8x32xf32>
    %77 = tpu.matmul %76, %63, %cst_41 {dimension_numbers = #tpu.dot_dimension_numbers<[2], [1], [1], [2], [0, 0, 0, 1, 1, 2], [0], [0]>} : vector<8x8x8xf32>, vector<8x8x32xf32>, vector<8x8x32xf32> -> vector<8x8x32xf32>
    %78 = vector.shape_cast %77 : vector<8x8x32xf32> to vector<64x32xf32>
    %c1_42 = arith.constant 1 : index
    %c0_43 = arith.constant 0 : index
    %c0_44 = arith.constant 0 : index
    %79 = vector.load %arg5[%c1_42, %c0_43, %c0_44] : memref<2x32x32xf32, #tpu.memory_space<vmem>>, vector<1x32x32xf32>
    %80 = vector.shape_cast %79 : vector<1x32x32xf32> to vector<32x32xf32>
    %cst_45 = arith.constant dense<0.000000e+00> : vector<64x32xf32>
    %81 = tpu.matmul %78, %80, %cst_45 {dimension_numbers = #tpu.dot_dimension_numbers<[1], [0], [0], [1], [0, 0, 1, 1], [], []>} : vector<64x32xf32>, vector<32x32xf32>, vector<64x32xf32> -> vector<64x32xf32>
    %82 = arith.addf %54, %81 : vector<64x32xf32>
    %c1_46 = arith.constant 1 : index
    %c0_47 = arith.constant 0 : index
    %c0_48 = arith.constant 0 : index
    %83 = vector.load %arg6[%c1_46, %c0_47, %c0_48] : memref<2x32x64xf32, #tpu.memory_space<vmem>>, vector<1x32x64xf32>
    %84 = vector.shape_cast %83 : vector<1x32x64xf32> to vector<32x64xf32>
    %cst_49 = arith.constant dense<0.000000e+00> : vector<64x64xf32>
    %85 = tpu.matmul %82, %84, %cst_49 {dimension_numbers = #tpu.dot_dimension_numbers<[1], [0], [0], [1], [0, 0, 1, 1], [], []>} : vector<64x32xf32>, vector<32x64xf32>, vector<64x64xf32> -> vector<64x64xf32>
    %c1_50 = arith.constant 1 : index
    %c0_51 = arith.constant 0 : index
    %c0_52 = arith.constant 0 : index
    %86 = vector.load %arg7[%c1_50, %c0_51, %c0_52] : memref<2x1x64xf32, #tpu.memory_space<vmem>>, vector<1x1x64xf32>
    %87 = vector.shape_cast %86 : vector<1x1x64xf32> to vector<1x64xf32>
    %88 = vector.broadcast %87 : vector<1x64xf32> to vector<64x64xf32>
    %89 = arith.addf %85, %88 : vector<64x64xf32>
    %cst_53 = arith.constant 0.000000e+00 : f32
    %90 = vector.broadcast %cst_53 : f32 to vector<64x64xf32>
    %91 = arith.maximumf %89, %90 : vector<64x64xf32>
    %c1_54 = arith.constant 1 : index
    %c0_55 = arith.constant 0 : index
    %c0_56 = arith.constant 0 : index
    %92 = vector.load %arg8[%c1_54, %c0_55, %c0_56] : memref<2x64x32xf32, #tpu.memory_space<vmem>>, vector<1x64x32xf32>
    %93 = vector.shape_cast %92 : vector<1x64x32xf32> to vector<64x32xf32>
    %cst_57 = arith.constant dense<0.000000e+00> : vector<64x32xf32>
    %94 = tpu.matmul %91, %93, %cst_57 {dimension_numbers = #tpu.dot_dimension_numbers<[1], [0], [0], [1], [0, 0, 1, 1], [], []>} : vector<64x64xf32>, vector<64x32xf32>, vector<64x32xf32> -> vector<64x32xf32>
    %95 = arith.addf %82, %94 : vector<64x32xf32>
    %c1_58 = arith.constant 1 : index
    %c0_59 = arith.constant 0 : index
    %c0_60 = arith.constant 0 : index
    %96 = vector.load %arg9[%c1_58, %c0_59, %c0_60] : memref<2x1x32xf32, #tpu.memory_space<vmem>>, vector<1x1x32xf32>
    %97 = vector.shape_cast %96 : vector<1x1x32xf32> to vector<1x32xf32>
    %98 = vector.broadcast %97 : vector<1x32xf32> to vector<64x32xf32>
    %99 = arith.addf %95, %98 : vector<64x32xf32>
    %100 = vector.shape_cast %99 : vector<64x32xf32> to vector<8x8x32xf32>
    %cst_61 = arith.constant dense<0.000000e+00> : vector<8x32xf32>
    %101 = vector.multi_reduction <add>, %100, %cst_61 [1] : vector<8x8x32xf32> to vector<8x32xf32>
    %cst_62 = arith.constant 8.000000e+00 : f32
    %102 = vector.broadcast %cst_62 : f32 to vector<8x32xf32>
    %103 = arith.divf %101, %102 : vector<8x32xf32>
    %c0_63 = arith.constant 0 : index
    %c0_64 = arith.constant 0 : index
    %104 = vector.load %arg10[%c0_63, %c0_64] : memref<32x64xf32, #tpu.memory_space<vmem>>, vector<32x64xf32>
    %cst_65 = arith.constant dense<0.000000e+00> : vector<8x64xf32>
    %105 = tpu.matmul %103, %104, %cst_65 {dimension_numbers = #tpu.dot_dimension_numbers<[1], [0], [0], [1], [0, 0, 1, 1], [], []>} : vector<8x32xf32>, vector<32x64xf32>, vector<8x64xf32> -> vector<8x64xf32>
    %c0_66 = arith.constant 0 : index
    %c0_67 = arith.constant 0 : index
    %106 = vector.load %arg11[%c0_66, %c0_67] : memref<1x64xf32, #tpu.memory_space<vmem>>, vector<1x64xf32>
    %107 = vector.broadcast %106 : vector<1x64xf32> to vector<8x64xf32>
    %108 = arith.addf %105, %107 : vector<8x64xf32>
    %cst_68 = arith.constant 0.000000e+00 : f32
    %109 = vector.broadcast %cst_68 : f32 to vector<8x64xf32>
    %110 = arith.maximumf %108, %109 : vector<8x64xf32>
    %c0_69 = arith.constant 0 : index
    %c0_70 = arith.constant 0 : index
    %111 = vector.load %arg12[%c0_69, %c0_70] : memref<64x4xf32, #tpu.memory_space<vmem>>, vector<64x4xf32>
    %cst_71 = arith.constant dense<0.000000e+00> : vector<8x4xf32>
    %112 = tpu.matmul %110, %111, %cst_71 {dimension_numbers = #tpu.dot_dimension_numbers<[1], [0], [0], [1], [0, 0, 1, 1], [], []>} : vector<8x64xf32>, vector<64x4xf32>, vector<8x4xf32> -> vector<8x4xf32>
    %c0_72 = arith.constant 0 : index
    %c0_73 = arith.constant 0 : index
    %113 = vector.load %arg13[%c0_72, %c0_73] : memref<1x4xf32, #tpu.memory_space<vmem>>, vector<1x4xf32>
    %114 = vector.broadcast %113 : vector<1x4xf32> to vector<8x4xf32>
    %115 = arith.addf %112, %114 : vector<8x4xf32>
    %c0_74 = arith.constant 0 : index
    %c0_75 = arith.constant 0 : index
    %116 = vector.load %arg14[%c0_74, %c0_75] : memref<8x4xf32, #tpu.memory_space<vmem>>, vector<8x4xf32>
    tpu.vector_store %arg14[%c0_74, %c0_75], %115 {strides = array<i32>} : memref<8x4xf32, #tpu.memory_space<vmem>>, vector<8x4xf32>,
    return
  }
  func.func @transform_0(%arg0: i32) -> (i32, i32, i32) {
    %c0_i32 = arith.constant 0 : i32
    %c0_i32_0 = arith.constant 0 : i32
    %c0_i32_1 = arith.constant 0 : i32
    return %arg0, %c0_i32, %c0_i32_0 : i32, i32, i32
  }
  func.func @transform_1(%arg0: i32) -> (i32, i32) {
    %c0_i32 = arith.constant 0 : i32
    %c0_i32_0 = arith.constant 0 : i32
    return %arg0, %c0_i32 : i32, i32
  }
  func.func @transform_2(%arg0: i32) -> (i32, i32) {
    %c0_i32 = arith.constant 0 : i32
    %c0_i32_0 = arith.constant 0 : i32
    %c0_i32_1 = arith.constant 0 : i32
    return %c0_i32, %c0_i32_0 : i32, i32
  }
  func.func @transform_3(%arg0: i32) -> (i32, i32, i32) {
    %c0_i32 = arith.constant 0 : i32
    %c0_i32_0 = arith.constant 0 : i32
    %c0_i32_1 = arith.constant 0 : i32
    %c0_i32_2 = arith.constant 0 : i32
    return %c0_i32, %c0_i32_0, %c0_i32_1 : i32, i32, i32
  }
  func.func @transform_4(%arg0: i32) -> (i32, i32, i32) {
    %c0_i32 = arith.constant 0 : i32
    %c0_i32_0 = arith.constant 0 : i32
    %c0_i32_1 = arith.constant 0 : i32
    %c0_i32_2 = arith.constant 0 : i32
    return %c0_i32, %c0_i32_0, %c0_i32_1 : i32, i32, i32
  }
  func.func @transform_5(%arg0: i32) -> (i32, i32, i32) {
    %c0_i32 = arith.constant 0 : i32
    %c0_i32_0 = arith.constant 0 : i32
    %c0_i32_1 = arith.constant 0 : i32
    %c0_i32_2 = arith.constant 0 : i32
    return %c0_i32, %c0_i32_0, %c0_i32_1 : i32, i32, i32
  }
  func.func @transform_6(%arg0: i32) -> (i32, i32, i32) {
    %c0_i32 = arith.constant 0 : i32
    %c0_i32_0 = arith.constant 0 : i32
    %c0_i32_1 = arith.constant 0 : i32
    %c0_i32_2 = arith.constant 0 : i32
    return %c0_i32, %c0_i32_0, %c0_i32_1 : i32, i32, i32
  }
  func.func @transform_7(%arg0: i32) -> (i32, i32, i32) {
    %c0_i32 = arith.constant 0 : i32
    %c0_i32_0 = arith.constant 0 : i32
    %c0_i32_1 = arith.constant 0 : i32
    %c0_i32_2 = arith.constant 0 : i32
    return %c0_i32, %c0_i32_0, %c0_i32_1 : i32, i32, i32
  }
  func.func @transform_8(%arg0: i32) -> (i32, i32, i32) {
    %c0_i32 = arith.constant 0 : i32
    %c0_i32_0 = arith.constant 0 : i32
    %c0_i32_1 = arith.constant 0 : i32
    %c0_i32_2 = arith.constant 0 : i32
    return %c0_i32, %c0_i32_0, %c0_i32_1 : i32, i32, i32
  }
  func.func @transform_9(%arg0: i32) -> (i32, i32) {
    %c0_i32 = arith.constant 0 : i32
    %c0_i32_0 = arith.constant 0 : i32
    %c0_i32_1 = arith.constant 0 : i32
    return %c0_i32, %c0_i32_0 : i32, i32
  }
  func.func @transform_10(%arg0: i32) -> (i32, i32) {
    %c0_i32 = arith.constant 0 : i32
    %c0_i32_0 = arith.constant 0 : i32
    %c0_i32_1 = arith.constant 0 : i32
    return %c0_i32, %c0_i32_0 : i32, i32
  }
  func.func @transform_11(%arg0: i32) -> (i32, i32) {
    %c0_i32 = arith.constant 0 : i32
    %c0_i32_0 = arith.constant 0 : i32
    %c0_i32_1 = arith.constant 0 : i32
    return %c0_i32, %c0_i32_0 : i32, i32
  }
  func.func @transform_12(%arg0: i32) -> (i32, i32) {
    %c0_i32 = arith.constant 0 : i32
    %c0_i32_0 = arith.constant 0 : i32
    %c0_i32_1 = arith.constant 0 : i32
    return %c0_i32, %c0_i32_0 : i32, i32
  }
  func.func @transform_13(%arg0: i32) -> (i32, i32) {
    %c0_i32 = arith.constant 0 : i32
    %c0_i32_0 = arith.constant 0 : i32
    return %arg0, %c0_i32 : i32, i32
  }
}

</mosaic_0001>

<llo_original>
// kernel: tpu_custom_call.1
$region0: #{tpu_custom_call.1}
  #allocation0 [shape = 'u32[]', space=smem, size = 0x4, offset = 0x4, fixed_abs, tag = 'smem constant byte address 0x4 - core index']
  #allocation1 [shape = 'u32[144,128]{1,0:T(1,128)}', space=vmem, size = 0x12000, scoped, tag = 'internal scratch']
  %s0 = inlined_call_operand.vmem [shape: f32[8,8,5], index: 0, kind: input, shape index: {}]
  %s1 = inlined_call_operand.vmem [shape: f32[8,32], index: 1, kind: input, shape index: {}]
  %s2 = inlined_call_operand.vmem [shape: f32[5,32], index: 2, kind: input, shape index: {}]
  %s3 = inlined_call_operand.vmem [shape: f32[2,32,96], index: 3, kind: input, shape index: {}]
  %s4 = inlined_call_operand.vmem [shape: f32[2,32,32], index: 4, kind: input, shape index: {}]
  %s5 = inlined_call_operand.vmem [shape: f32[2,32,64], index: 5, kind: input, shape index: {}]
  %s6 = inlined_call_operand.vmem [shape: f32[2,1,64], index: 6, kind: input, shape index: {}]
  %s7 = inlined_call_operand.vmem [shape: f32[2,64,32], index: 7, kind: input, shape index: {}]
  %s8 = inlined_call_operand.vmem [shape: f32[2,1,32], index: 8, kind: input, shape index: {}]
  %s9 = inlined_call_operand.vmem [shape: f32[32,64], index: 9, kind: input, shape index: {}]
  %s10 = inlined_call_operand.vmem [shape: f32[1,64], index: 10, kind: input, shape index: {}]
  %s11 = inlined_call_operand.vmem [shape: f32[64,4], index: 11, kind: input, shape index: {}]
  %s12 = inlined_call_operand.vmem [shape: f32[1,4], index: 12, kind: input, shape index: {}]
  %s13 = inlined_call_operand.vmem [shape: f32[8,4], index: 13, kind: output, shape index: {}]
  %s14 = sld [smem:[#allocation0]]
  $region62: #{tpu_custom_call.1} parent=0
    _
  %s16 = ssub.s32 1, %s14
  %s17 = scalar_select 0, %s16, %s14
  // Predicated region
  $region2: #{tpu_custom_call.1} parent=0 // pred_check
    _
  $region3: #{tpu_custom_call.1} parent=0 // pred_check_branch
    %19 = sbr.rel (0) target = $region5
  $region4: #{tpu_custom_call.1} parent=0 // pred_region
    _
  $region5: #{tpu_custom_call.1} parent=0 // pred_fallthru
    _
  // Predicated region
  $region6: #{tpu_custom_call.1} parent=0 // pred_check
    _
  $region7: #{tpu_custom_call.1} parent=0 // pred_check_branch
    %21 = sbr.rel (0) target = $region9
  $region8: #{tpu_custom_call.1} parent=0 // pred_region
    _
  $region9: #{tpu_custom_call.1} parent=0 // pred_fallthru
    _
  // Predicated region
  $region10: #{tpu_custom_call.1} parent=0 // pred_check
    _
  $region11: #{tpu_custom_call.1} parent=0 // pred_check_branch
    %23 = sbr.rel (0) target = $region13
  $region12: #{tpu_custom_call.1} parent=0 // pred_region
    _
  $region13: #{tpu_custom_call.1} parent=0 // pred_fallthru
    _
  // Predicated region
  $region14: #{tpu_custom_call.1} parent=0 // pred_check
    _
  $region15: #{tpu_custom_call.1} parent=0 // pred_check_branch
    %25 = sbr.rel (0) target = $region17
  $region16: #{tpu_custom_call.1} parent=0 // pred_region
    _
  $region17: #{tpu_custom_call.1} parent=0 // pred_fallthru
    _
  // Predicated region
  $region18: #{tpu_custom_call.1} parent=0 // pred_check
    _
  $region19: #{tpu_custom_call.1} parent=0 // pred_check_branch
    %27 = sbr.rel (0) target = $region21
  $region20: #{tpu_custom_call.1} parent=0 // pred_region
    _
  $region21: #{tpu_custom_call.1} parent=0 // pred_fallthru
    _
  // Predicated region
  $region22: #{tpu_custom_call.1} parent=0 // pred_check
    _
  $region23: #{tpu_custom_call.1} parent=0 // pred_check_branch
    %29 = sbr.rel (0) target = $region25
  $region24: #{tpu_custom_call.1} parent=0 // pred_region
    _
  $region25: #{tpu_custom_call.1} parent=0 // pred_fallthru
    _
  // Predicated region
  $region26: #{tpu_custom_call.1} parent=0 // pred_check
    _
  $region27: #{tpu_custom_call.1} parent=0 // pred_check_branch
    %31 = sbr.rel (0) target = $region29
  $region28: #{tpu_custom_call.1} parent=0 // pred_region
    _
  $region29: #{tpu_custom_call.1} parent=0 // pred_fallthru
    _
  // Predicated region
  $region30: #{tpu_custom_call.1} parent=0 // pred_check
    _
  $region31: #{tpu_custom_call.1} parent=0 // pred_check_branch
    %33 = sbr.rel (0) target = $region33
  $region32: #{tpu_custom_call.1} parent=0 // pred_region
    _
  $region33: #{tpu_custom_call.1} parent=0 // pred_fallthru
    _
  // Predicated region
  $region34: #{tpu_custom_call.1} parent=0 // pred_check
    _
  $region35: #{tpu_custom_call.1} parent=0 // pred_check_branch
    %35 = sbr.rel (0) target = $region37
  $region36: #{tpu_custom_call.1} parent=0 // pred_region
    _
  $region37: #{tpu_custom_call.1} parent=0 // pred_fallthru
    _
  // Predicated region
  $region38: #{tpu_custom_call.1} parent=0 // pred_check
    _
  $region39: #{tpu_custom_call.1} parent=0 // pred_check_branch
    %37 = sbr.rel (0) target = $region41
  $region40: #{tpu_custom_call.1} parent=0 // pred_region
    _
  $region41: #{tpu_custom_call.1} parent=0 // pred_fallthru
    _
  // Predicated region
  $region42: #{tpu_custom_call.1} parent=0 // pred_check
    _
  $region43: #{tpu_custom_call.1} parent=0 // pred_check_branch
    %39 = sbr.rel (0) target = $region45
  $region44: #{tpu_custom_call.1} parent=0 // pred_region
    _
  $region45: #{tpu_custom_call.1} parent=0 // pred_fallthru
    _
  // Predicated region
  $region46: #{tpu_custom_call.1} parent=0 // pred_check
    _
  $region47: #{tpu_custom_call.1} parent=0 // pred_check_branch
    %41 = sbr.rel (0) target = $region49
  $region48: #{tpu_custom_call.1} parent=0 // pred_region
    _
  $region49: #{tpu_custom_call.1} parent=0 // pred_fallthru
    _
  // Predicated region
  $region50: #{tpu_custom_call.1} parent=0 // pred_check
    _
  $region51: #{tpu_custom_call.1} parent=0 // pred_check_branch
    %43 = sbr.rel (0) target = $region53
  $region52: #{tpu_custom_call.1} parent=0 // pred_region
    _
  $region53: #{tpu_custom_call.1} parent=0 // pred_fallthru
    _
  %v44 = vld [vmem:[%s0] sm:$0xff]
  %v45 = vld [vmem:[%s0 + $0x8] sm:$0xff]
  %v46 = vld [vmem:[%s0 + $0x10] sm:$0xff]
  %v47 = vld [vmem:[%s0 + $0x18] sm:$0xff]
  %v48 = vld [vmem:[%s0 + $0x20] sm:$0xff]
  %v49 = vld [vmem:[%s0 + $0x28] sm:$0xff]
  %v50 = vld [vmem:[%s0 + $0x30] sm:$0xff]
  %v51 = vld [vmem:[%s0 + $0x38] sm:$0xff]
  %v52 = vld [vmem:[%s2] sm:$0x1f]
  %vm53 = vcmask 39936
  %v55 = vsel %vm53, %v44, 0
  %v58 = vsel %vm53, %v45, 0
  %v61 = vsel %vm53, %v46, 0
  %v64 = vsel %vm53, %v47, 0
  %v67 = vsel %vm53, %v48, 0
  %v70 = vsel %vm53, %v49, 0
  %v73 = vsel %vm53, %v50, 0
  %v76 = vsel %vm53, %v51, 0
  %vm78 = vcmask 1044480
  %v80 = vsel %vm78, %v52, 0
  %82 = vmatprep.subr.mxu0 0.0
  %83 = vmatpush1.msra.mxu0 %v80
  %84 = vmatprep.subr.mxu0 0.0
  %85 = vmatpush1.msra.mxu0 0.0
  %86 = vmatprep.subr.mxu0 0.0
  %87 = vmatpush1.msra.mxu0 0.0
  %88 = vmatprep.subr.mxu0 0.0
  %89 = vmatpush1.msra.mxu0 0.0
  %90 = vmatprep.subr.mxu0 0.0
  %91 = vmatpush1.msra.mxu0 0.0
  %92 = vmatprep.subr.mxu0 0.0
  %93 = vmatpush1.msra.mxu0 0.0
  %94 = vmatprep.subr.mxu0 0.0
  %95 = vmatpush1.msra.mxu0 0.0
  %96 = vmatprep.subr.mxu0 0.0
  %97 = vmatpush1.msra.mxu0 0.0
  %98 = vmatprep.subr.mxu0 0.0
  %99 = vmatpush1.msra.mxu0 0.0
  %100 = vmatprep.subr.mxu0 0.0
  %101 = vmatpush1.msra.mxu0 0.0
  %102 = vmatprep.subr.mxu0 0.0
  %103 = vmatpush1.msra.mxu0 0.0
  %104 = vmatprep.subr.mxu0 0.0
  %105 = vmatpush1.msra.mxu0 0.0
  %106 = vmatprep.subr.mxu0 0.0
  %107 = vmatpush1.msra.mxu0 0.0
  %108 = vmatprep.subr.mxu0 0.0
  %109 = vmatpush1.msra.mxu0 0.0
  %110 = vmatprep.subr.mxu0 0.0
  %111 = vmatpush1.msra.mxu0 0.0
  %112 = vmatprep.subr.mxu0 0.0
  %113 = vmatpush1.msra.mxu0 0.0
  %114 = vmatprep.subr.mxu0 0.0
  %115 = vmatpush1.msra.mxu0 0.0
  %116 = vmatprep.subr.mxu0 0.0
  %117 = vmatpush1.msra.mxu0 0.0
  %118 = vmatprep.subr.mxu0 0.0
  %119 = vmatpush1.msra.mxu0 0.0
  %120 = vmatprep.subr.mxu0 0.0
  %121 = vmatpush1.msra.mxu0 0.0
  %122 = vmatprep.subr.mxu0 0.0
  %123 = vmatpush1.msra.mxu0 0.0
  %124 = vmatprep.subr.mxu0 0.0
  %125 = vmatpush1.msra.mxu0 0.0
  %126 = vmatprep.subr.mxu0 0.0
  %127 = vmatpush1.msra.mxu0 0.0
  %128 = vmatprep.subr.mxu0 0.0
  %129 = vmatpush1.msra.mxu0 0.0
  %130 = vmatprep.subr.mxu0 0.0
  %131 = vmatpush1.msra.mxu0 0.0
  %132 = vmatprep.subr.mxu0 0.0
  %133 = vmatpush1.msra.mxu0 0.0
  %134 = vmatprep.subr.mxu0 0.0
  %135 = vmatpush1.msra.mxu0 0.0
  %136 = vmatprep.subr.mxu0 0.0
  %137 = vmatpush1.msra.mxu0 0.0
  %138 = vmatprep.subr.mxu0 0.0
  %139 = vmatpush1.msra.mxu0 0.0
  %140 = vmatprep.subr.mxu0 0.0
  %141 = vmatpush1.msra.mxu0 0.0
  %142 = vmatprep.subr.mxu0 0.0
  %143 = vmatpush1.msra.mxu0 0.0
  %144 = vmatprep.subr.mxu0 0.0
  %145 = vmatpush1.msra.mxu0 0.0
  %146 = vmatprep.mubr.f32.mxu0 0.0
  %147 = vmatmul.mubr.f32.gmra.mrb[0].mxu0 %v55
  %v148 = vpop.f32.mrb[0].mxu0
  %v149 = vadd.f32 0.0, %v148
  %v150 = vpop.f32.mrb[0].mxu0
  %151 = vmatprep.mubr.f32.mxu0 0.0
  %152 = vmatmul.mubr.f32.gmra.mrb[0].mxu0 %v58
  %v153 = vpop.f32.mrb[0].mxu0
  %v154 = vadd.f32 0.0, %v153
  %v155 = vpop.f32.mrb[0].mxu0
  %156 = vmatprep.mubr.f32.mxu0 0.0
  %157 = vmatmul.mubr.f32.gmra.mrb[0].mxu0 %v61
  %v158 = vpop.f32.mrb[0].mxu0
  %v159 = vadd.f32 0.0, %v158
  %v160 = vpop.f32.mrb[0].mxu0
  %161 = vmatprep.mubr.f32.mxu0 0.0
  %162 = vmatmul.mubr.f32.gmra.mrb[0].mxu0 %v64
  %v163 = vpop.f32.mrb[0].mxu0
  %v164 = vadd.f32 0.0, %v163
  %v165 = vpop.f32.mrb[0].mxu0
  %166 = vmatprep.mubr.f32.mxu0 0.0
  %167 = vmatmul.mubr.f32.gmra.mrb[0].mxu0 %v67
  %v168 = vpop.f32.mrb[0].mxu0
  %v169 = vadd.f32 0.0, %v168
  %v170 = vpop.f32.mrb[0].mxu0
  %171 = vmatprep.mubr.f32.mxu0 0.0
  %172 = vmatmul.mubr.f32.gmra.mrb[0].mxu0 %v70
  %v173 = vpop.f32.mrb[0].mxu0
  %v174 = vadd.f32 0.0, %v173
  %v175 = vpop.f32.mrb[0].mxu0
  %176 = vmatprep.mubr.f32.mxu0 0.0
  %177 = vmatmul.mubr.f32.gmra.mrb[0].mxu0 %v73
  %v178 = vpop.f32.mrb[0].mxu0
  %v179 = vadd.f32 0.0, %v178
  %v180 = vpop.f32.mrb[0].mxu0
  %181 = vmatprep.mubr.f32.mxu0 0.0
  %182 = vmatmul.mubr.f32.gmra.mrb[0].mxu0 %v76
  %v183 = vpop.f32.mrb[0].mxu0
  %v184 = vadd.f32 0.0, %v183
  %v185 = vpop.f32.mrb[0].mxu0
  %186 = vdwg.mxu0
  %v187 = vld [vmem:[%s1] sm:$0xff]
  %v189 = vcombine.high %v187, %v187
  %v191 = vunpack.c.l.s4 1966171168
  %v192 = vunpack.c.0.s8 %v191
  %v193 = vlaneseq
  %v194 = vshrl.u32 %v193, 7
  %v195 = vsub.s32 %v192, %v194
  %v196 = vrot.slane %v187, %v195
  %v198 = vunpack.c.l.s4 1966171168
  %v199 = vunpack.c.0.s8 %v198
  %v200 = vlaneseq
  %v201 = vshrl.u32 %v200, 7
  %v202 = vsub.s32 %v199, %v201
  %v203 = vrot.slane %v189, %v202
  %v204 = vcombine.high %v196, %v196
  %v205 = vcombine.high %v203, %v203
  %v207 = vunpack.c.l.s4 1966171168
  %v208 = vunpack.c.0.s8 %v207
  %v209 = vlaneseq
  %v210 = vshrl.u32 %v209, 7
  %v211 = vsub.s32 %v208, %v210
  %v212 = vrot.slane %v196, %v211
  %v214 = vunpack.c.l.s4 1966171168
  %v215 = vunpack.c.0.s8 %v214
  %v216 = vlaneseq
  %v217 = vshrl.u32 %v216, 7
  %v218 = vsub.s32 %v215, %v217
  %v219 = vrot.slane %v203, %v218
  %v221 = vunpack.c.l.s4 1966171168
  %v222 = vunpack.c.0.s8 %v221
  %v223 = vlaneseq
  %v224 = vshrl.u32 %v223, 7
  %v225 = vsub.s32 %v222, %v224
  %v226 = vrot.slane %v204, %v225
  %v228 = vunpack.c.l.s4 1966171168
  %v229 = vunpack.c.0.s8 %v228
  %v230 = vlaneseq
  %v231 = vshrl.u32 %v230, 7
  %v232 = vsub.s32 %v229, %v231
  %v233 = vrot.slane %v205, %v232
  %v234 = vcombine.high %v212, %v212
  %v235 = vcombine.high %v219, %v219
  %v236 = vcombine.high %v226, %v226
  %v237 = vcombine.high %v233, %v233
  %v238 = vlaneseq
  %v239 = vshrl.u32 %v238, 7
  %v240 = vsub.s32 0, %v239
  %v241 = vrot.slane %v212, %v240
  %v242 = vlaneseq
  %v243 = vshrl.u32 %v242, 7
  %v244 = vsub.s32 0, %v243
  %v245 = vrot.slane %v226, %v244
  %v246 = vlaneseq
  %v247 = vshrl.u32 %v246, 7
  %v248 = vsub.s32 0, %v247
  %v249 = vrot.slane %v234, %v248
  %v250 = vlaneseq
  %v251 = vshrl.u32 %v250, 7
  %v252 = vsub.s32 0, %v251
  %v253 = vrot.slane %v236, %v252
  %v254 = vlaneseq
  %v255 = vshrl.u32 %v254, 7
  %v256 = vsub.s32 0, %v255
  %v257 = vrot.slane %v219, %v256
  %v258 = vlaneseq
  %v259 = vshrl.u32 %v258, 7
  %v260 = vsub.s32 0, %v259
  %v261 = vrot.slane %v233, %v260
  %v262 = vlaneseq
  %v263 = vshrl.u32 %v262, 7
  %v264 = vsub.s32 0, %v263
  %v265 = vrot.slane %v235, %v264
  %v266 = vlaneseq
  %v267 = vshrl.u32 %v266, 7
  %v268 = vsub.s32 0, %v267
  %v269 = vrot.slane %v237, %v268
  %v278 = vadd.f32 %v149, %v241
  %v279 = vadd.f32 %v154, %v245
  %v280 = vadd.f32 %v159, %v249
  %v281 = vadd.f32 %v164, %v253
  %v282 = vadd.f32 %v169, %v257
  %v283 = vadd.f32 %v174, %v261
  %v284 = vadd.f32 %v179, %v265
  %v285 = vadd.f32 %v184, %v269
  %v286 = vld [vmem:[%s3] sm:$0xff]
  %v287 = vld [vmem:[%s3 + $0x8] sm:$0xff]
  %v288 = vld [vmem:[%s3 + $0x10] sm:$0xff]
  %v289 = vld [vmem:[%s3 + $0x18] sm:$0xff]
  %vm290 = vcmask 261120
  %v292 = vsel %vm290, %v278, 0
  %v295 = vsel %vm290, %v279, 0
  %v298 = vsel %vm290, %v280, 0
  %v301 = vsel %vm290, %v281, 0
  %v304 = vsel %vm290, %v282, 0
  %v307 = vsel %vm290, %v283, 0
  %v310 = vsel %vm290, %v284, 0
  %v313 = vsel %vm290, %v285, 0
  %315 = vmatprep.subr.mxu0 0.0
  %316 = vmatpush1.msra.mxu0 %v286
  %317 = vmatprep.subr.mxu0 0.0
  %318 = vmatpush1.msra.mxu0 %v287
  %319 = vmatprep.subr.mxu0 0.0
  %320 = vmatpush1.msra.mxu0 %v288
  %321 = vmatprep.subr.mxu0 0.0
  %322 = vmatpush1.msra.mxu0 %v289
  %323 = vmatprep.subr.mxu0 0.0
  %324 = vmatpush1.msra.mxu0 0.0
  %325 = vmatprep.subr.mxu0 0.0
  %326 = vmatpush1.msra.mxu0 0.0
  %327 = vmatprep.subr.mxu0 0.0
  %328 = vmatpush1.msra.mxu0 0.0
  %329 = vmatprep.subr.mxu0 0.0
  %330 = vmatpush1.msra.mxu0 0.0
  %331 = vmatprep.subr.mxu0 0.0
  %332 = vmatpush1.msra.mxu0 0.0
  %333 = vmatprep.subr.mxu0 0.0
  %334 = vmatpush1.msra.mxu0 0.0
  %335 = vmatprep.subr.mxu0 0.0
  %336 = vmatpush1.msra.mxu0 0.0
  %337 = vmatprep.subr.mxu0 0.0
  %338 = vmatpush1.msra.mxu0 0.0
  %339 = vmatprep.subr.mxu0 0.0
  %340 = vmatpush1.msra.mxu0 0.0
  %341 = vmatprep.subr.mxu0 0.0
  %342 = vmatpush1.msra.mxu0 0.0
  %343 = vmatprep.subr.mxu0 0.0
  %344 = vmatpush1.msra.mxu0 0.0
  %345 = vmatprep.subr.mxu0 0.0
  %346 = vmatpush1.msra.mxu0 0.0
  %347 = vmatprep.subr.mxu0 0.0
  %348 = vmatpush1.msra.mxu0 0.0
  %349 = vmatprep.subr.mxu0 0.0
  %350 = vmatpush1.msra.mxu0 0.0
  %351 = vmatprep.subr.mxu0 0.0
  %352 = vmatpush1.msra.mxu0 0.0
  %353 = vmatprep.subr.mxu0 0.0
  %354 = vmatpush1.msra.mxu0 0.0
  %355 = vmatprep.subr.mxu0 0.0
  %356 = vmatpush1.msra.mxu0 0.0
  %357 = vmatprep.subr.mxu0 0.0
  %358 = vmatpush1.msra.mxu0 0.0
  %359 = vmatprep.subr.mxu0 0.0
  %360 = vmatpush1.msra.mxu0 0.0
  %361 = vmatprep.subr.mxu0 0.0
  %362 = vmatpush1.msra.mxu0 0.0
  %363 = vmatprep.subr.mxu0 0.0
  %364 = vmatpush1.msra.mxu0 0.0
  %365 = vmatprep.subr.mxu0 0.0
  %366 = vmatpush1.msra.mxu0 0.0
  %367 = vmatprep.subr.mxu0 0.0
  %368 = vmatpush1.msra.mxu0 0.0
  %369 = vmatprep.subr.mxu0 0.0
  %370 = vmatpush1.msra.mxu0 0.0
  %371 = vmatprep.subr.mxu0 0.0
  %372 = vmatpush1.msra.mxu0 0.0
  %373 = vmatprep.subr.mxu0 0.0
  %374 = vmatpush1.msra.mxu0 0.0
  %375 = vmatprep.subr.mxu0 0.0
  %376 = vmatpush1.msra.mxu0 0.0
  %377 = vmatprep.subr.mxu0 0.0
  %378 = vmatpush1.msra.mxu0 0.0
  %379 = vmatprep.mubr.f32.mxu0 0.0
  %380 = vmatmul.mubr.f32.gmra.mrb[0].mxu0 %v292
  %v381 = vpop.f32.mrb[0].mxu0
  %v382 = vadd.f32 0.0, %v381
  %v383 = vpop.f32.mrb[0].mxu0
  %384 = vmatprep.mubr.f32.mxu0 0.0
  %385 = vmatmul.mubr.f32.gmra.mrb[0].mxu0 %v295
  %v386 = vpop.f32.mrb[0].mxu0
  %v387 = vadd.f32 0.0, %v386
  %v388 = vpop.f32.mrb[0].mxu0
  %389 = vmatprep.mubr.f32.mxu0 0.0
  %390 = vmatmul.mubr.f32.gmra.mrb[0].mxu0 %v298
  %v391 = vpop.f32.mrb[0].mxu0
  %v392 = vadd.f32 0.0, %v391
  %v393 = vpop.f32.mrb[0].mxu0
  %394 = vmatprep.mubr.f32.mxu0 0.0
  %395 = vmatmul.mubr.f32.gmra.mrb[0].mxu0 %v301
  %v396 = vpop.f32.mrb[0].mxu0
  %v397 = vadd.f32 0.0, %v396
  %v398 = vpop.f32.mrb[0].mxu0
  %399 = vmatprep.mubr.f32.mxu0 0.0
  %400 = vmatmul.mubr.f32.gmra.mrb[0].mxu0 %v304
  %v401 = vpop.f32.mrb[0].mxu0
  %v402 = vadd.f32 0.0, %v401
  %v403 = vpop.f32.mrb[0].mxu0
  %404 = vmatprep.mubr.f32.mxu0 0.0
  %405 = vmatmul.mubr.f32.gmra.mrb[0].mxu0 %v307
  %v406 = vpop.f32.mrb[0].mxu0
  %v407 = vadd.f32 0.0, %v406
  %v408 = vpop.f32.mrb[0].mxu0
  %409 = vmatprep.mubr.f32.mxu0 0.0
  %410 = vmatmul.mubr.f32.gmra.mrb[0].mxu0 %v310
  %v411 = vpop.f32.mrb[0].mxu0
  %v412 = vadd.f32 0.0, %v411
  %v413 = vpop.f32.mrb[0].mxu0
  %414 = vmatprep.mubr.f32.mxu0 0.0
  %415 = vmatmul.mubr.f32.gmra.mrb[0].mxu0 %v313
  %v416 = vpop.f32.mrb[0].mxu0
  %v417 = vadd.f32 0.0, %v416
  %v418 = vpop.f32.mrb[0].mxu0
  %419 = vdwg.mxu0
  %421 = vrot.lane.b32.xlu0 %v382, 96
  %v422 = vpop.permute.xlu0 %421
  %v423 = vsel %vm290, %v382, 0
  %v425 = vsel %vm290, %v422, 0
  %427 = vmatprep.subr.mxu0 0.0
  %428 = vmatpush1.xpose.msra.mxu0 %v425
  %429 = vmatprep.subr.mxu0 0.0
  %430 = vmatpush1.xpose.msra.mxu0 0.0
  %431 = vmatprep.subr.mxu0 0.0
  %432 = vmatpush1.xpose.msra.mxu0 0.0
  %433 = vmatprep.subr.mxu0 0.0
  %434 = vmatpush1.xpose.msra.mxu0 0.0
  %435 = vmatprep.subr.mxu0 0.0
  %436 = vmatpush1.xpose.msra.mxu0 0.0
  %437 = vmatprep.subr.mxu0 0.0
  %438 = vmatpush1.xpose.msra.mxu0 0.0
  %439 = vmatprep.subr.mxu0 0.0
  %440 = vmatpush1.xpose.msra.mxu0 0.0
  %441 = vmatprep.subr.mxu0 0.0
  %442 = vmatpush1.xpose.msra.mxu0 0.0
  %443 = vmatprep.subr.mxu0 0.0
  %444 = vmatpush1.xpose.msra.mxu0 0.0
  %445 = vmatprep.subr.mxu0 0.0
  %446 = vmatpush1.xpose.msra.mxu0 0.0
  %447 = vmatprep.subr.mxu0 0.0
  %448 = vmatpush1.xpose.msra.mxu0 0.0
  %449 = vmatprep.subr.mxu0 0.0
  %450 = vmatpush1.xpose.msra.mxu0 0.0
  %451 = vmatprep.subr.mxu0 0.0
  %452 = vmatpush1.xpose.msra.mxu0 0.0
  %453 = vmatprep.subr.mxu0 0.0
  %454 = vmatpush1.xpose.msra.mxu0 0.0
  %455 = vmatprep.subr.mxu0 0.0
  %456 = vmatpush1.xpose.msra.mxu0 0.0
  %457 = vmatprep.subr.mxu0 0.0
  %458 = vmatpush1.xpose.msra.mxu0 0.0
  %459 = vmatprep.subr.mxu0 0.0
  %460 = vmatpush1.xpose.msra.mxu0 0.0
  %461 = vmatprep.subr.mxu0 0.0
  %462 = vmatpush1.xpose.msra.mxu0 0.0
  %463 = vmatprep.subr.mxu0 0.0
  %464 = vmatpush1.xpose.msra.mxu0 0.0
  %465 = vmatprep.subr.mxu0 0.0
  %466 = vmatpush1.xpose.msra.mxu0 0.0
  %467 = vmatprep.subr.mxu0 0.0
  %468 = vmatpush1.xpose.msra.mxu0 0.0
  %469 = vmatprep.subr.mxu0 0.0
  %470 = vmatpush1.xpose.msra.mxu0 0.0
  %471 = vmatprep.subr.mxu0 0.0
  %472 = vmatpush1.xpose.msra.mxu0 0.0
  %473 = vmatprep.subr.mxu0 0.0
  %474 = vmatpush1.xpose.msra.mxu0 0.0
  %475 = vmatprep.subr.mxu0 0.0
  %476 = vmatpush1.xpose.msra.mxu0 0.0
  %477 = vmatprep.subr.mxu0 0.0
  %478 = vmatpush1.xpose.msra.mxu0 0.0
  %479 = vmatprep.subr.mxu0 0.0
  %480 = vmatpush1.xpose.msra.mxu0 0.0
  %481 = vmatprep.subr.mxu0 0.0
  %482 = vmatpush1.xpose.msra.mxu0 0.0
  %483 = vmatprep.subr.mxu0 0.0
  %484 = vmatpush1.xpose.msra.mxu0 0.0
  %485 = vmatprep.subr.mxu0 0.0
  %486 = vmatpush1.xpose.msra.mxu0 0.0
  %487 = vmatprep.subr.mxu0 0.0
  %488 = vmatpush1.xpose.msra.mxu0 0.0
  %489 = vmatprep.subr.mxu0 0.0
  %490 = vmatpush1.xpose.msra.mxu0 0.0
  %491 = vmatprep.mubr.f32.mxu0 0.0
  %492 = vmatmul.mubr.f32.gmra.mrb[0].mxu0 %v423
  %v493 = vpop.f32.mrb[0].mxu0
  %v494 = vadd.f32 0.0, %v493
  %v495 = vpop.f32.mrb[0].mxu0
  %496 = vdwg.mxu0
  %498 = vrot.lane.b32.xlu0 %v387, 96
  %v499 = vpop.permute.xlu0 %498
  %v500 = vsel %vm290, %v387, 0
  %v502 = vsel %vm290, %v499, 0
  %504 = vmatprep.subr.mxu0 0.0
  %505 = vmatpush1.xpose.msra.mxu0 %v502
  %506 = vmatprep.subr.mxu0 0.0
  %507 = vmatpush1.xpose.msra.mxu0 0.0
  %508 = vmatprep.subr.mxu0 0.0
  %509 = vmatpush1.xpose.msra.mxu0 0.0
  %510 = vmatprep.subr.mxu0 0.0
  %511 = vmatpush1.xpose.msra.mxu0 0.0
  %512 = vmatprep.subr.mxu0 0.0
  %513 = vmatpush1.xpose.msra.mxu0 0.0
  %514 = vmatprep.subr.mxu0 0.0
  %515 = vmatpush1.xpose.msra.mxu0 0.0
  %516 = vmatprep.subr.mxu0 0.0
  %517 = vmatpush1.xpose.msra.mxu0 0.0
  %518 = vmatprep.subr.mxu0 0.0
  %519 = vmatpush1.xpose.msra.mxu0 0.0
  %520 = vmatprep.subr.mxu0 0.0
  %521 = vmatpush1.xpose.msra.mxu0 0.0
  %522 = vmatprep.subr.mxu0 0.0
  %523 = vmatpush1.xpose.msra.mxu0 0.0
  %524 = vmatprep.subr.mxu0 0.0
  %525 = vmatpush1.xpose.msra.mxu0 0.0
  %526 = vmatprep.subr.mxu0 0.0
  %527 = vmatpush1.xpose.msra.mxu0 0.0
  %528 = vmatprep.subr.mxu0 0.0
  %529 = vmatpush1.xpose.msra.mxu0 0.0
  %530 = vmatprep.subr.mxu0 0.0
  %531 = vmatpush1.xpose.msra.mxu0 0.0
  %532 = vmatprep.subr.mxu0 0.0
  %533 = vmatpush1.xpose.msra.mxu0 0.0
  %534 = vmatprep.subr.mxu0 0.0
  %535 = vmatpush1.xpose.msra.mxu0 0.0
  %536 = vmatprep.subr.mxu0 0.0
  %537 = vmatpush1.xpose.msra.mxu0 0.0
  %538 = vmatprep.subr.mxu0 0.0
  %539 = vmatpush1.xpose.msra.mxu0 0.0
  %540 = vmatprep.subr.mxu0 0.0
  %541 = vmatpush1.xpose.msra.mxu0 0.0
  %542 = vmatprep.subr.mxu0 0.0
  %543 = vmatpush1.xpose.msra.mxu0 0.0
  %544 = vmatprep.subr.mxu0 0.0
  %545 = vmatpush1.xpose.msra.mxu0 0.0
  %546 = vmatprep.subr.mxu0 0.0
  %547 = vmatpush1.xpose.msra.mxu0 0.0
  %548 = vmatprep.subr.mxu0 0.0
  %549 = vmatpush1.xpose.msra.mxu0 0.0
  %550 = vmatprep.subr.mxu0 0.0
  %551 = vmatpush1.xpose.msra.mxu0 0.0
  %552 = vmatprep.subr.mxu0 0.0
  %553 = vmatpush1.xpose.msra.mxu0 0.0
  %554 = vmatprep.subr.mxu0 0.0
  %555 = vmatpush1.xpose.msra.mxu0 0.0
  %556 = vmatprep.subr.mxu0 0.0
  %557 = vmatpush1.xpose.msra.mxu0 0.0
  %558 = vmatprep.subr.mxu0 0.0
  %559 = vmatpush1.xpose.msra.mxu0 0.0
  %560 = vmatprep.subr.mxu0 0.0
  %561 = vmatpush1.xpose.msra.mxu0 0.0
  %562 = vmatprep.subr.mxu0 0.0
  %563 = vmatpush1.xpose.msra.mxu0 0.0
  %564 = vmatprep.subr.mxu0 0.0
  %565 = vmatpush1.xpose.msra.mxu0 0.0
  %566 = vmatprep.subr.mxu0 0.0
  %567 = vmatpush1.xpose.msra.mxu0 0.0
  %568 = vmatprep.mubr.f32.mxu0 0.0
  %569 = vmatmul.mubr.f32.gmra.mrb[0].mxu0 %v500
  %v570 = vpop.f32.mrb[0].mxu0
  %v571 = vadd.f32 0.0, %v570
  %v572 = vpop.f32.mrb[0].mxu0
  %573 = vdwg.mxu0
  %575 = vrot.lane.b32.xlu0 %v392, 96
  %v576 = vpop.permute.xlu0 %575
  %v577 = vsel %vm290, %v392, 0
  %v579 = vsel %vm290, %v576, 0
  %581 = vmatprep.subr.mxu0 0.0
  %582 = vmatpush1.xpose.msra.mxu0 %v579
  %583 = vmatprep.subr.mxu0 0.0
  %584 = vmatpush1.xpose.msra.mxu0 0.0
  %585 = vmatprep.subr.mxu0 0.0
  %586 = vmatpush1.xpose.msra.mxu0 0.0
  %587 = vmatprep.subr.mxu0 0.0
  %588 = vmatpush1.xpose.msra.mxu0 0.0
  %589 = vmatprep.subr.mxu0 0.0
  %590 = vmatpush1.xpose.msra.mxu0 0.0
  %591 = vmatprep.subr.mxu0 0.0
  %592 = vmatpush1.xpose.msra.mxu0 0.0
  %593 = vmatprep.subr.mxu0 0.0
  %594 = vmatpush1.xpose.msra.mxu0 0.0
  %595 = vmatprep.subr.mxu0 0.0
  %596 = vmatpush1.xpose.msra.mxu0 0.0
  %597 = vmatprep.subr.mxu0 0.0
  %598 = vmatpush1.xpose.msra.mxu0 0.0
  %599 = vmatprep.subr.mxu0 0.0
  %600 = vmatpush1.xpose.msra.mxu0 0.0
  %601 = vmatprep.subr.mxu0 0.0
  %602 = vmatpush1.xpose.msra.mxu0 0.0
  %603 = vmatprep.subr.mxu0 0.0
  %604 = vmatpush1.xpose.msra.mxu0 0.0
  %605 = vmatprep.subr.mxu0 0.0
  %606 = vmatpush1.xpose.msra.mxu0 0.0
  %607 = vmatprep.subr.mxu0 0.0
  %608 = vmatpush1.xpose.msra.mxu0 0.0
  %609 = vmatprep.subr.mxu0 0.0
  %610 = vmatpush1.xpose.msra.mxu0 0.0
  %611 = vmatprep.subr.mxu0 0.0
  %612 = vmatpush1.xpose.msra.mxu0 0.0
  %613 = vmatprep.subr.mxu0 0.0
  %614 = vmatpush1.xpose.msra.mxu0 0.0
  %615 = vmatprep.subr.mxu0 0.0
  %616 = vmatpush1.xpose.msra.mxu0 0.0
  %617 = vmatprep.subr.mxu0 0.0
  %618 = vmatpush1.xpose.msra.mxu0 0.0
  %619 = vmatprep.subr.mxu0 0.0
  %620 = vmatpush1.xpose.msra.mxu0 0.0
  %621 = vmatprep.subr.mxu0 0.0
  %622 = vmatpush1.xpose.msra.mxu0 0.0
  %623 = vmatprep.subr.mxu0 0.0
  %624 = vmatpush1.xpose.msra.mxu0 0.0
  %625 = vmatprep.subr.mxu0 0.0
  %626 = vmatpush1.xpose.msra.mxu0 0.0
  %627 = vmatprep.subr.mxu0 0.0
  %628 = vmatpush1.xpose.msra.mxu0 0.0
  %629 = vmatprep.subr.mxu0 0.0
  %630 = vmatpush1.xpose.msra.mxu0 0.0
  %631 = vmatprep.subr.mxu0 0.0
  %632 = vmatpush1.xpose.msra.mxu0 0.0
  %633 = vmatprep.subr.mxu0 0.0
  %634 = vmatpush1.xpose.msra.mxu0 0.0
  %635 = vmatprep.subr.mxu0 0.0
  %636 = vmatpush1.xpose.msra.mxu0 0.0
  %637 = vmatprep.subr.mxu0 0.0
  %638 = vmatpush1.xpose.msra.mxu0 0.0
  %639 = vmatprep.subr.mxu0 0.0
  %640 = vmatpush1.xpose.msra.mxu0 0.0
  %641 = vmatprep.subr.mxu0 0.0
  %642 = vmatpush1.xpose.msra.mxu0 0.0
  %643 = vmatprep.subr.mxu0 0.0
  %644 = vmatpush1.xpose.msra.mxu0 0.0
  %645 = vmatprep.mubr.f32.mxu0 0.0
  %646 = vmatmul.mubr.f32.gmra.mrb[0].mxu0 %v577
  %v647 = vpop.f32.mrb[0].mxu0
  %v648 = vadd.f32 0.0, %v647
  %v649 = vpop.f32.mrb[0].mxu0
  %650 = vdwg.mxu0
  %652 = vrot.lane.b32.xlu0 %v397, 96
  %v653 = vpop.permute.xlu0 %652
  %v654 = vsel %vm290, %v397, 0
  %v656 = vsel %vm290, %v653, 0
  %658 = vmatprep.subr.mxu0 0.0
  %659 = vmatpush1.xpose.msra.mxu0 %v656
  %660 = vmatprep.subr.mxu0 0.0
  %661 = vmatpush1.xpose.msra.mxu0 0.0
  %662 = vmatprep.subr.mxu0 0.0
  %663 = vmatpush1.xpose.msra.mxu0 0.0
  %664 = vmatprep.subr.mxu0 0.0
  %665 = vmatpush1.xpose.msra.mxu0 0.0
  %666 = vmatprep.subr.mxu0 0.0
  %667 = vmatpush1.xpose.msra.mxu0 0.0
  %668 = vmatprep.subr.mxu0 0.0
  %669 = vmatpush1.xpose.msra.mxu0 0.0
  %670 = vmatprep.subr.mxu0 0.0
  %671 = vmatpush1.xpose.msra.mxu0 0.0
  %672 = vmatprep.subr.mxu0 0.0
  %673 = vmatpush1.xpose.msra.mxu0 0.0
  %674 = vmatprep.subr.mxu0 0.0
  %675 = vmatpush1.xpose.msra.mxu0 0.0
  %676 = vmatprep.subr.mxu0 0.0
  %677 = vmatpush1.xpose.msra.mxu0 0.0
  %678 = vmatprep.subr.mxu0 0.0
  %679 = vmatpush1.xpose.msra.mxu0 0.0
  %680 = vmatprep.subr.mxu0 0.0
  %681 = vmatpush1.xpose.msra.mxu0 0.0
  %682 = vmatprep.subr.mxu0 0.0
  %683 = vmatpush1.xpose.msra.mxu0 0.0
  %684 = vmatprep.subr.mxu0 0.0
  %685 = vmatpush1.xpose.msra.mxu0 0.0
  %686 = vmatprep.subr.mxu0 0.0
  %687 = vmatpush1.xpose.msra.mxu0 0.0
  %688 = vmatprep.subr.mxu0 0.0
  %689 = vmatpush1.xpose.msra.mxu0 0.0
  %690 = vmatprep.subr.mxu0 0.0
  %691 = vmatpush1.xpose.msra.mxu0 0.0
  %692 = vmatprep.subr.mxu0 0.0
  %693 = vmatpush1.xpose.msra.mxu0 0.0
  %694 = vmatprep.subr.mxu0 0.0
  %695 = vmatpush1.xpose.msra.mxu0 0.0
  %696 = vmatprep.subr.mxu0 0.0
  %697 = vmatpush1.xpose.msra.mxu0 0.0
  %698 = vmatprep.subr.mxu0 0.0
  %699 = vmatpush1.xpose.msra.mxu0 0.0
  %700 = vmatprep.subr.mxu0 0.0
  %701 = vmatpush1.xpose.msra.mxu0 0.0
  %702 = vmatprep.subr.mxu0 0.0
  %703 = vmatpush1.xpose.msra.mxu0 0.0
  %704 = vmatprep.subr.mxu0 0.0
  %705 = vmatpush1.xpose.msra.mxu0 0.0
  %706 = vmatprep.subr.mxu0 0.0
  %707 = vmatpush1.xpose.msra.mxu0 0.0
  %708 = vmatprep.subr.mxu0 0.0
  %709 = vmatpush1.xpose.msra.mxu0 0.0
  %710 = vmatprep.subr.mxu0 0.0
  %711 = vmatpush1.xpose.msra.mxu0 0.0
  %712 = vmatprep.subr.mxu0 0.0
  %713 = vmatpush1.xpose.msra.mxu0 0.0
  %714 = vmatprep.subr.mxu0 0.0
  %715 = vmatpush1.xpose.msra.mxu0 0.0
  %716 = vmatprep.subr.mxu0 0.0
  %717 = vmatpush1.xpose.msra.mxu0 0.0
  %718 = vmatprep.subr.mxu0 0.0
  %719 = vmatpush1.xpose.msra.mxu0 0.0
  %720 = vmatprep.subr.mxu0 0.0
  %721 = vmatpush1.xpose.msra.mxu0 0.0
  %722 = vmatprep.mubr.f32.mxu0 0.0
  %723 = vmatmul.mubr.f32.gmra.mrb[0].mxu0 %v654
  %v724 = vpop.f32.mrb[0].mxu0
  %v725 = vadd.f32 0.0, %v724
  %v726 = vpop.f32.mrb[0].mxu0
  %727 = vdwg.mxu0
  %729 = vrot.lane.b32.xlu0 %v402, 96
  %v730 = vpop.permute.xlu0 %729
  %v731 = vsel %vm290, %v402, 0
  %v733 = vsel %vm290, %v730, 0
  %735 = vmatprep.subr.mxu0 0.0
  %736 = vmatpush1.xpose.msra.mxu0 %v733
  %737 = vmatprep.subr.mxu0 0.0
  %738 = vmatpush1.xpose.msra.mxu0 0.0
  %739 = vmatprep.subr.mxu0 0.0
  %740 = vmatpush1.xpose.msra.mxu0 0.0
  %741 = vmatprep.subr.mxu0 0.0
  %742 = vmatpush1.xpose.msra.mxu0 0.0
  %743 = vmatprep.subr.mxu0 0.0
  %744 = vmatpush1.xpose.msra.mxu0 0.0
  %745 = vmatprep.subr.mxu0 0.0
  %746 = vmatpush1.xpose.msra.mxu0 0.0
  %747 = vmatprep.subr.mxu0 0.0
  %748 = vmatpush1.xpose.msra.mxu0 0.0
  %749 = vmatprep.subr.mxu0 0.0
  %750 = vmatpush1.xpose.msra.mxu0 0.0
  %751 = vmatprep.subr.mxu0 0.0
  %752 = vmatpush1.xpose.msra.mxu0 0.0
  %753 = vmatprep.subr.mxu0 0.0
  %754 = vmatpush1.xpose.msra.mxu0 0.0
  %755 = vmatprep.subr.mxu0 0.0
  %756 = vmatpush1.xpose.msra.mxu0 0.0
  %757 = vmatprep.subr.mxu0 0.0
  %758 = vmatpush1.xpose.msra.mxu0 0.0
  %759 = vmatprep.subr.mxu0 0.0
  %760 = vmatpush1.xpose.msra.mxu0 0.0
  %761 = vmatprep.subr.mxu0 0.0
  %762 = vmatpush1.xpose.msra.mxu0 0.0
  %763 = vmatprep.subr.mxu0 0.0
  %764 = vmatpush1.xpose.msra.mxu0 0.0
  %765 = vmatprep.subr.mxu0 0.0
  %766 = vmatpush1.xpose.msra.mxu0 0.0
  %767 = vmatprep.subr.mxu0 0.0
  %768 = vmatpush1.xpose.msra.mxu0 0.0
  %769 = vmatprep.subr.mxu0 0.0
  %770 = vmatpush1.xpose.msra.mxu0 0.0
  %771 = vmatprep.subr.mxu0 0.0
  %772 = vmatpush1.xpose.msra.mxu0 0.0
  %773 = vmatprep.subr.mxu0 0.0
  %774 = vmatpush1.xpose.msra.mxu0 0.0
  %775 = vmatprep.subr.mxu0 0.0
  %776 = vmatpush1.xpose.msra.mxu0 0.0
  %777 = vmatprep.subr.mxu0 0.0
  %778 = vmatpush1.xpose.msra.mxu0 0.0
  %779 = vmatprep.subr.mxu0 0.0
  %780 = vmatpush1.xpose.msra.mxu0 0.0
  %781 = vmatprep.subr.mxu0 0.0
  %782 = vmatpush1.xpose.msra.mxu0 0.0
  %783 = vmatprep.subr.mxu0 0.0
  %784 = vmatpush1.xpose.msra.mxu0 0.0
  %785 = vmatprep.subr.mxu0 0.0
  %786 = vmatpush1.xpose.msra.mxu0 0.0
  %787 = vmatprep.subr.mxu0 0.0
  %788 = vmatpush1.xpose.msra.mxu0 0.0
  %789 = vmatprep.subr.mxu0 0.0
  %790 = vmatpush1.xpose.msra.mxu0 0.0
  %791 = vmatprep.subr.mxu0 0.0
  %792 = vmatpush1.xpose.msra.mxu0 0.0
  %793 = vmatprep.subr.mxu0 0.0
  %794 = vmatpush1.xpose.msra.mxu0 0.0
  %795 = vmatprep.subr.mxu0 0.0
  %796 = vmatpush1.xpose.msra.mxu0 0.0
  %797 = vmatprep.subr.mxu0 0.0
  %798 = vmatpush1.xpose.msra.mxu0 0.0
  %799 = vmatprep.mubr.f32.mxu0 0.0
  %800 = vmatmul.mubr.f32.gmra.mrb[0].mxu0 %v731
  %v801 = vpop.f32.mrb[0].mxu0
  %v802 = vadd.f32 0.0, %v801
  %v803 = vpop.f32.mrb[0].mxu0
  %804 = vdwg.mxu0
  %806 = vrot.lane.b32.xlu0 %v407, 96
  %v807 = vpop.permute.xlu0 %806
  %v808 = vsel %vm290, %v407, 0
  %v810 = vsel %vm290, %v807, 0
  %812 = vmatprep.subr.mxu0 0.0
  %813 = vmatpush1.xpose.msra.mxu0 %v810
  %814 = vmatprep.subr.mxu0 0.0
  %815 = vmatpush1.xpose.msra.mxu0 0.0
  %816 = vmatprep.subr.mxu0 0.0
  %817 = vmatpush1.xpose.msra.mxu0 0.0
  %818 = vmatprep.subr.mxu0 0.0
  %819 = vmatpush1.xpose.msra.mxu0 0.0
  %820 = vmatprep.subr.mxu0 0.0
  %821 = vmatpush1.xpose.msra.mxu0 0.0
  %822 = vmatprep.subr.mxu0 0.0
  %823 = vmatpush1.xpose.msra.mxu0 0.0
  %824 = vmatprep.subr.mxu0 0.0
  %825 = vmatpush1.xpose.msra.mxu0 0.0
  %826 = vmatprep.subr.mxu0 0.0
  %827 = vmatpush1.xpose.msra.mxu0 0.0
  %828 = vmatprep.subr.mxu0 0.0
  %829 = vmatpush1.xpose.msra.mxu0 0.0
  %830 = vmatprep.subr.mxu0 0.0
  %831 = vmatpush1.xpose.msra.mxu0 0.0
  %832 = vmatprep.subr.mxu0 0.0
  %833 = vmatpush1.xpose.msra.mxu0 0.0
  %834 = vmatprep.subr.mxu0 0.0
  %835 = vmatpush1.xpose.msra.mxu0 0.0
  %836 = vmatprep.subr.mxu0 0.0
  %837 = vmatpush1.xpose.msra.mxu0 0.0
  %838 = vmatprep.subr.mxu0 0.0
  %839 = vmatpush1.xpose.msra.mxu0 0.0
  %840 = vmatprep.subr.mxu0 0.0
  %841 = vmatpush1.xpose.msra.mxu0 0.0
  %842 = vmatprep.subr.mxu0 0.0
  %843 = vmatpush1.xpose.msra.mxu0 0.0
  %844 = vmatprep.subr.mxu0 0.0
  %845 = vmatpush1.xpose.msra.mxu0 0.0
  %846 = vmatprep.subr.mxu0 0.0
  %847 = vmatpush1.xpose.msra.mxu0 0.0
  %848 = vmatprep.subr.mxu0 0.0
  %849 = vmatpush1.xpose.msra.mxu0 0.0
  %850 = vmatprep.subr.mxu0 0.0
  %851 = vmatpush1.xpose.msra.mxu0 0.0
  %852 = vmatprep.subr.mxu0 0.0
  %853 = vmatpush1.xpose.msra.mxu0 0.0
  %854 = vmatprep.subr.mxu0 0.0
  %855 = vmatpush1.xpose.msra.mxu0 0.0
  %856 = vmatprep.subr.mxu0 0.0
  %857 = vmatpush1.xpose.msra.mxu0 0.0
  %858 = vmatprep.subr.mxu0 0.0
  %859 = vmatpush1.xpose.msra.mxu0 0.0
  %860 = vmatprep.subr.mxu0 0.0
  %861 = vmatpush1.xpose.msra.mxu0 0.0
  %862 = vmatprep.subr.mxu0 0.0
  %863 = vmatpush1.xpose.msra.mxu0 0.0
  %864 = vmatprep.subr.mxu0 0.0
  %865 = vmatpush1.xpose.msra.mxu0 0.0
  %866 = vmatprep.subr.mxu0 0.0
  %867 = vmatpush1.xpose.msra.mxu0 0.0
  %868 = vmatprep.subr.mxu0 0.0
  %869 = vmatpush1.xpose.msra.mxu0 0.0
  %870 = vmatprep.subr.mxu0 0.0
  %871 = vmatpush1.xpose.msra.mxu0 0.0
  %872 = vmatprep.subr.mxu0 0.0
  %873 = vmatpush1.xpose.msra.mxu0 0.0
  %874 = vmatprep.subr.mxu0 0.0
  %875 = vmatpush1.xpose.msra.mxu0 0.0
  %876 = vmatprep.mubr.f32.mxu0 0.0
  %877 = vmatmul.mubr.f32.gmra.mrb[0].mxu0 %v808
  %v878 = vpop.f32.mrb[0].mxu0
  %v879 = vadd.f32 0.0, %v878
  %v880 = vpop.f32.mrb[0].mxu0
  %881 = vdwg.mxu0
  %883 = vrot.lane.b32.xlu0 %v412, 96
  %v884 = vpop.permute.xlu0 %883
  %v885 = vsel %vm290, %v412, 0
  %v887 = vsel %vm290, %v884, 0
  %889 = vmatprep.subr.mxu0 0.0
  %890 = vmatpush1.xpose.msra.mxu0 %v887
  %891 = vmatprep.subr.mxu0 0.0
  %892 = vmatpush1.xpose.msra.mxu0 0.0
  %893 = vmatprep.subr.mxu0 0.0
  %894 = vmatpush1.xpose.msra.mxu0 0.0
  %895 = vmatprep.subr.mxu0 0.0
  %896 = vmatpush1.xpose.msra.mxu0 0.0
  %897 = vmatprep.subr.mxu0 0.0
  %898 = vmatpush1.xpose.msra.mxu0 0.0
  %899 = vmatprep.subr.mxu0 0.0
  %900 = vmatpush1.xpose.msra.mxu0 0.0
  %901 = vmatprep.subr.mxu0 0.0
  %902 = vmatpush1.xpose.msra.mxu0 0.0
  %903 = vmatprep.subr.mxu0 0.0
  %904 = vmatpush1.xpose.msra.mxu0 0.0
  %905 = vmatprep.subr.mxu0 0.0
  %906 = vmatpush1.xpose.msra.mxu0 0.0
  %907 = vmatprep.subr.mxu0 0.0
  %908 = vmatpush1.xpose.msra.mxu0 0.0
  %909 = vmatprep.subr.mxu0 0.0
  %910 = vmatpush1.xpose.msra.mxu0 0.0
  %911 = vmatprep.subr.mxu0 0.0
  %912 = vmatpush1.xpose.msra.mxu0 0.0
  %913 = vmatprep.subr.mxu0 0.0
  %914 = vmatpush1.xpose.msra.mxu0 0.0
  %915 = vmatprep.subr.mxu0 0.0
  %916 = vmatpush1.xpose.msra.mxu0 0.0
  %917 = vmatprep.subr.mxu0 0.0
  %918 = vmatpush1.xpose.msra.mxu0 0.0
  %919 = vmatprep.subr.mxu0 0.0
  %920 = vmatpush1.xpose.msra.mxu0 0.0
  %921 = vmatprep.subr.mxu0 0.0
  %922 = vmatpush1.xpose.msra.mxu0 0.0
  %923 = vmatprep.subr.mxu0 0.0
  %924 = vmatpush1.xpose.msra.mxu0 0.0
  %925 = vmatprep.subr.mxu0 0.0
  %926 = vmatpush1.xpose.msra.mxu0 0.0
  %927 = vmatprep.subr.mxu0 0.0
  %928 = vmatpush1.xpose.msra.mxu0 0.0
  %929 = vmatprep.subr.mxu0 0.0
  %930 = vmatpush1.xpose.msra.mxu0 0.0
  %931 = vmatprep.subr.mxu0 0.0
  %932 = vmatpush1.xpose.msra.mxu0 0.0
  %933 = vmatprep.subr.mxu0 0.0
  %934 = vmatpush1.xpose.msra.mxu0 0.0
  %935 = vmatprep.subr.mxu0 0.0
  %936 = vmatpush1.xpose.msra.mxu0 0.0
  %937 = vmatprep.subr.mxu0 0.0
  %938 = vmatpush1.xpose.msra.mxu0 0.0
  %939 = vmatprep.subr.mxu0 0.0
  %940 = vmatpush1.xpose.msra.mxu0 0.0
  %941 = vmatprep.subr.mxu0 0.0
  %942 = vmatpush1.xpose.msra.mxu0 0.0
  %943 = vmatprep.subr.mxu0 0.0
  %944 = vmatpush1.xpose.msra.mxu0 0.0
  %945 = vmatprep.subr.mxu0 0.0
  %946 = vmatpush1.xpose.msra.mxu0 0.0
  %947 = vmatprep.subr.mxu0 0.0
  %948 = vmatpush1.xpose.msra.mxu0 0.0
  %949 = vmatprep.subr.mxu0 0.0
  %950 = vmatpush1.xpose.msra.mxu0 0.0
  %951 = vmatprep.subr.mxu0 0.0
  %952 = vmatpush1.xpose.msra.mxu0 0.0
  %953 = vmatprep.mubr.f32.mxu0 0.0
  %954 = vmatmul.mubr.f32.gmra.mrb[0].mxu0 %v885
  %v955 = vpop.f32.mrb[0].mxu0
  %v956 = vadd.f32 0.0, %v955
  %v957 = vpop.f32.mrb[0].mxu0
  %958 = vdwg.mxu0
  %960 = vrot.lane.b32.xlu0 %v417, 96
  %v961 = vpop.permute.xlu0 %960
  %v962 = vsel %vm290, %v417, 0
  %v964 = vsel %vm290, %v961, 0
  %966 = vmatprep.subr.mxu0 0.0
  %967 = vmatpush1.xpose.msra.mxu0 %v964
  %968 = vmatprep.subr.mxu0 0.0
  %969 = vmatpush1.xpose.msra.mxu0 0.0
  %970 = vmatprep.subr.mxu0 0.0
  %971 = vmatpush1.xpose.msra.mxu0 0.0
  %972 = vmatprep.subr.mxu0 0.0
  %973 = vmatpush1.xpose.msra.mxu0 0.0
  %974 = vmatprep.subr.mxu0 0.0
  %975 = vmatpush1.xpose.msra.mxu0 0.0
  %976 = vmatprep.subr.mxu0 0.0
  %977 = vmatpush1.xpose.msra.mxu0 0.0
  %978 = vmatprep.subr.mxu0 0.0
  %979 = vmatpush1.xpose.msra.mxu0 0.0
  %980 = vmatprep.subr.mxu0 0.0
  %981 = vmatpush1.xpose.msra.mxu0 0.0
  %982 = vmatprep.subr.mxu0 0.0
  %983 = vmatpush1.xpose.msra.mxu0 0.0
  %984 = vmatprep.subr.mxu0 0.0
  %985 = vmatpush1.xpose.msra.mxu0 0.0
  %986 = vmatprep.subr.mxu0 0.0
  %987 = vmatpush1.xpose.msra.mxu0 0.0
  %988 = vmatprep.subr.mxu0 0.0
  %989 = vmatpush1.xpose.msra.mxu0 0.0
  %990 = vmatprep.subr.mxu0 0.0
  %991 = vmatpush1.xpose.msra.mxu0 0.0
  %992 = vmatprep.subr.mxu0 0.0
  %993 = vmatpush1.xpose.msra.mxu0 0.0
  %994 = vmatprep.subr.mxu0 0.0
  %995 = vmatpush1.xpose.msra.mxu0 0.0
  %996 = vmatprep.subr.mxu0 0.0
  %997 = vmatpush1.xpose.msra.mxu0 0.0
  %998 = vmatprep.subr.mxu0 0.0
  %999 = vmatpush1.xpose.msra.mxu0 0.0
  %1000 = vmatprep.subr.mxu0 0.0
  %1001 = vmatpush1.xpose.msra.mxu0 0.0
  %1002 = vmatprep.subr.mxu0 0.0
  %1003 = vmatpush1.xpose.msra.mxu0 0.0
  %1004 = vmatprep.subr.mxu0 0.0
  %1005 = vmatpush1.xpose.msra.mxu0 0.0
  %1006 = vmatprep.subr.mxu0 0.0
  %1007 = vmatpush1.xpose.msra.mxu0 0.0
  %1008 = vmatprep.subr.mxu0 0.0
  %1009 = vmatpush1.xpose.msra.mxu0 0.0
  %1010 = vmatprep.subr.mxu0 0.0
  %1011 = vmatpush1.xpose.msra.mxu0 0.0
  %1012 = vmatprep.subr.mxu0 0.0
  %1013 = vmatpush1.xpose.msra.mxu0 0.0
  %1014 = vmatprep.subr.mxu0 0.0
  %1015 = vmatpush1.xpose.msra.mxu0 0.0
  %1016 = vmatprep.subr.mxu0 0.0
  %1017 = vmatpush1.xpose.msra.mxu0 0.0
  %1018 = vmatprep.subr.mxu0 0.0
  %1019 = vmatpush1.xpose.msra.mxu0 0.0
  %1020 = vmatprep.subr.mxu0 0.0
  %1021 = vmatpush1.xpose.msra.mxu0 0.0
  %1022 = vmatprep.subr.mxu0 0.0
  %1023 = vmatpush1.xpose.msra.mxu0 0.0
  %1024 = vmatprep.subr.mxu0 0.0
  %1025 = vmatpush1.xpose.msra.mxu0 0.0
  %1026 = vmatprep.subr.mxu0 0.0
  %1027 = vmatpush1.xpose.msra.mxu0 0.0
  %1028 = vmatprep.subr.mxu0 0.0
  %1029 = vmatpush1.xpose.msra.mxu0 0.0
  %1030 = vmatprep.mubr.f32.mxu0 0.0
  %1031 = vmatmul.mubr.f32.gmra.mrb[0].mxu0 %v962
  %v1032 = vpop.f32.mrb[0].mxu0
  %v1033 = vadd.f32 0.0, %v1032
  %v1034 = vpop.f32.mrb[0].mxu0
  %1035 = vdwg.mxu0
  %v1036 = vmul.f32 %v494, 0.17677669
  %v1037 = vmul.f32 %v571, 0.17677669
  %v1038 = vmul.f32 %v648, 0.17677669
  %v1039 = vmul.f32 %v725, 0.17677669
  %v1040 = vmul.f32 %v802, 0.17677669
  %v1041 = vmul.f32 %v879, 0.17677669
  %v1042 = vmul.f32 %v956, 0.17677669
  %v1043 = vmul.f32 %v1033, 0.17677669
  %vm1044 = vcmask 64512
  %v1045 = vsel %vm1044, %v1036, -inf
  %1046 = vmax.xlane.f32.xlu0 %v1045
  %v1047 = vpop.xlane.xlu0 %1046
  %v1048 = vsel %vm1044, %v1037, -inf
  %1049 = vmax.xlane.f32.xlu0 %v1048
  %v1050 = vpop.xlane.xlu0 %1049
  %v1051 = vsel %vm1044, %v1038, -inf
  %1052 = vmax.xlane.f32.xlu0 %v1051
  %v1053 = vpop.xlane.xlu0 %1052
  %v1054 = vsel %vm1044, %v1039, -inf
  %1055 = vmax.xlane.f32.xlu0 %v1054
  %v1056 = vpop.xlane.xlu0 %1055
  %v1057 = vsel %vm1044, %v1040, -inf
  %1058 = vmax.xlane.f32.xlu0 %v1057
  %v1059 = vpop.xlane.xlu0 %1058
  %v1060 = vsel %vm1044, %v1041, -inf
  %1061 = vmax.xlane.f32.xlu0 %v1060
  %v1062 = vpop.xlane.xlu0 %1061
  %v1063 = vsel %vm1044, %v1042, -inf
  %1064 = vmax.xlane.f32.xlu0 %v1063
  %v1065 = vpop.xlane.xlu0 %1064
  %v1066 = vsel %vm1044, %v1043, -inf
  %1067 = vmax.xlane.f32.xlu0 %v1066
  %v1068 = vpop.xlane.xlu0 %1067
  %v1069 = vsub.f32 %v1036, %v1047
  %v1070 = vsub.f32 %v1037, %v1050
  %v1071 = vsub.f32 %v1038, %v1053
  %v1072 = vsub.f32 %v1039, %v1056
  %v1073 = vsub.f32 %v1040, %v1059
  %v1074 = vsub.f32 %v1041, %v1062
  %v1075 = vsub.f32 %v1042, %v1065
  %v1076 = vsub.f32 %v1043, %v1068
  %v1077 = vmul.f32 %v1069, 1.442695
  %v1078 = vpow.pop %v1077
  %v1079 = vmul.f32 %v1070, 1.442695
  %v1080 = vpow.pop %v1079
  %v1081 = vmul.f32 %v1071, 1.442695
  %v1082 = vpow.pop %v1081
  %v1083 = vmul.f32 %v1072, 1.442695
  %v1084 = vpow.pop %v1083
  %v1085 = vmul.f32 %v1073, 1.442695
  %v1086 = vpow.pop %v1085
  %v1087 = vmul.f32 %v1074, 1.442695
  %v1088 = vpow.pop %v1087
  %v1089 = vmul.f32 %v1075, 1.442695
  %v1090 = vpow.pop %v1089
  %v1091 = vmul.f32 %v1076, 1.442695
  %v1092 = vpow.pop %v1091
  %v1093 = vsel %vm1044, %v1078, 0.0
  %1094 = vadd.xlane.f32.xlu0 %v1093
  %v1095 = vpop.xlane.xlu0 %1094
  %v1096 = vsel %vm1044, %v1080, 0.0
  %1097 = vadd.xlane.f32.xlu0 %v1096
  %v1098 = vpop.xlane.xlu0 %1097
  %v1099 = vsel %vm1044, %v1082, 0.0
  %1100 = vadd.xlane.f32.xlu0 %v1099
  %v1101 = vpop.xlane.xlu0 %1100
  %v1102 = vsel %vm1044, %v1084, 0.0
  %1103 = vadd.xlane.f32.xlu0 %v1102
  %v1104 = vpop.xlane.xlu0 %1103
  %v1105 = vsel %vm1044, %v1086, 0.0
  %1106 = vadd.xlane.f32.xlu0 %v1105
  %v1107 = vpop.xlane.xlu0 %1106
  %v1108 = vsel %vm1044, %v1088, 0.0
  %1109 = vadd.xlane.f32.xlu0 %v1108
  %v1110 = vpop.xlane.xlu0 %1109
  %v1111 = vsel %vm1044, %v1090, 0.0
  %1112 = vadd.xlane.f32.xlu0 %v1111
  %v1113 = vpop.xlane.xlu0 %1112
  %v1114 = vsel %vm1044, %v1092, 0.0
  %1115 = vadd.xlane.f32.xlu0 %v1114
  %v1116 = vpop.xlane.xlu0 %1115
  %v1117 = vrcp.pop %v1095
  %v1118 = vrcp.pop %v1098
  %v1119 = vrcp.pop %v1101
  %v1120 = vrcp.pop %v1104
  %v1121 = vrcp.pop %v1107
  %v1122 = vrcp.pop %v1110
  %v1123 = vrcp.pop %v1113
  %v1124 = vrcp.pop %v1116
  %v1125 = vmul.f32 %v1078, %v1117
  %v1126 = vmul.f32 %v1080, %v1118
  %v1127 = vmul.f32 %v1082, %v1119
  %v1128 = vmul.f32 %v1084, %v1120
  %v1129 = vmul.f32 %v1086, %v1121
  %v1130 = vmul.f32 %v1088, %v1122
  %v1131 = vmul.f32 %v1090, %v1123
  %v1132 = vmul.f32 %v1092, %v1124
  %1133 = vrot.lane.b32.xlu0 %v382, 64
  %v1134 = vpop.permute.xlu0 %1133
  %v1137 = vsel %vm1044, %v1125, 0
  %1139 = vmatprep.subr.mxu0 0.0
  %1140 = vmatpush1.msra.mxu0 %v1134
  %1141 = vmatprep.subr.mxu0 0.0
  %1142 = vmatpush1.msra.mxu0 0.0
  %1143 = vmatprep.subr.mxu0 0.0
  %1144 = vmatpush1.msra.mxu0 0.0
  %1145 = vmatprep.subr.mxu0 0.0
  %1146 = vmatpush1.msra.mxu0 0.0
  %1147 = vmatprep.subr.mxu0 0.0
  %1148 = vmatpush1.msra.mxu0 0.0
  %1149 = vmatprep.subr.mxu0 0.0
  %1150 = vmatpush1.msra.mxu0 0.0
  %1151 = vmatprep.subr.mxu0 0.0
  %1152 = vmatpush1.msra.mxu0 0.0
  %1153 = vmatprep.subr.mxu0 0.0
  %1154 = vmatpush1.msra.mxu0 0.0
  %1155 = vmatprep.subr.mxu0 0.0
  %1156 = vmatpush1.msra.mxu0 0.0
  %1157 = vmatprep.subr.mxu0 0.0
  %1158 = vmatpush1.msra.mxu0 0.0
  %1159 = vmatprep.subr.mxu0 0.0
  %1160 = vmatpush1.msra.mxu0 0.0
  %1161 = vmatprep.subr.mxu0 0.0
  %1162 = vmatpush1.msra.mxu0 0.0
  %1163 = vmatprep.subr.mxu0 0.0
  %1164 = vmatpush1.msra.mxu0 0.0
  %1165 = vmatprep.subr.mxu0 0.0
  %1166 = vmatpush1.msra.mxu0 0.0
  %1167 = vmatprep.subr.mxu0 0.0
  %1168 = vmatpush1.msra.mxu0 0.0
  %1169 = vmatprep.subr.mxu0 0.0
  %1170 = vmatpush1.msra.mxu0 0.0
  %1171 = vmatprep.subr.mxu0 0.0
  %1172 = vmatpush1.msra.mxu0 0.0
  %1173 = vmatprep.subr.mxu0 0.0
  %1174 = vmatpush1.msra.mxu0 0.0
  %1175 = vmatprep.subr.mxu0 0.0
  %1176 = vmatpush1.msra.mxu0 0.0
  %1177 = vmatprep.subr.mxu0 0.0
  %1178 = vmatpush1.msra.mxu0 0.0
  %1179 = vmatprep.subr.mxu0 0.0
  %1180 = vmatpush1.msra.mxu0 0.0
  %1181 = vmatprep.subr.mxu0 0.0
  %1182 = vmatpush1.msra.mxu0 0.0
  %1183 = vmatprep.subr.mxu0 0.0
  %1184 = vmatpush1.msra.mxu0 0.0
  %1185 = vmatprep.subr.mxu0 0.0
  %1186 = vmatpush1.msra.mxu0 0.0
  %1187 = vmatprep.subr.mxu0 0.0
  %1188 = vmatpush1.msra.mxu0 0.0
  %1189 = vmatprep.subr.mxu0 0.0
  %1190 = vmatpush1.msra.mxu0 0.0
  %1191 = vmatprep.subr.mxu0 0.0
  %1192 = vmatpush1.msra.mxu0 0.0
  %1193 = vmatprep.subr.mxu0 0.0
  %1194 = vmatpush1.msra.mxu0 0.0
  %1195 = vmatprep.subr.mxu0 0.0
  %1196 = vmatpush1.msra.mxu0 0.0
  %1197 = vmatprep.subr.mxu0 0.0
  %1198 = vmatpush1.msra.mxu0 0.0
  %1199 = vmatprep.subr.mxu0 0.0
  %1200 = vmatpush1.msra.mxu0 0.0
  %1201 = vmatprep.subr.mxu0 0.0
  %1202 = vmatpush1.msra.mxu0 0.0
  %1203 = vmatprep.mubr.f32.mxu0 0.0
  %1204 = vmatmul.mubr.f32.gmra.mrb[0].mxu0 %v1137
  %v1205 = vpop.f32.mrb[0].mxu0
  %v1206 = vadd.f32 0.0, %v1205
  %v1207 = vpop.f32.mrb[0].mxu0
  %1208 = vdwg.mxu0
  %1209 = vrot.lane.b32.xlu0 %v387, 64
  %v1210 = vpop.permute.xlu0 %1209
  %v1213 = vsel %vm1044, %v1126, 0
  %1215 = vmatprep.subr.mxu0 0.0
  %1216 = vmatpush1.msra.mxu0 %v1210
  %1217 = vmatprep.subr.mxu0 0.0
  %1218 = vmatpush1.msra.mxu0 0.0
  %1219 = vmatprep.subr.mxu0 0.0
  %1220 = vmatpush1.msra.mxu0 0.0
  %1221 = vmatprep.subr.mxu0 0.0
  %1222 = vmatpush1.msra.mxu0 0.0
  %1223 = vmatprep.subr.mxu0 0.0
  %1224 = vmatpush1.msra.mxu0 0.0
  %1225 = vmatprep.subr.mxu0 0.0
  %1226 = vmatpush1.msra.mxu0 0.0
  %1227 = vmatprep.subr.mxu0 0.0
  %1228 = vmatpush1.msra.mxu0 0.0
  %1229 = vmatprep.subr.mxu0 0.0
  %1230 = vmatpush1.msra.mxu0 0.0
  %1231 = vmatprep.subr.mxu0 0.0
  %1232 = vmatpush1.msra.mxu0 0.0
  %1233 = vmatprep.subr.mxu0 0.0
  %1234 = vmatpush1.msra.mxu0 0.0
  %1235 = vmatprep.subr.mxu0 0.0
  %1236 = vmatpush1.msra.mxu0 0.0
  %1237 = vmatprep.subr.mxu0 0.0
  %1238 = vmatpush1.msra.mxu0 0.0
  %1239 = vmatprep.subr.mxu0 0.0
  %1240 = vmatpush1.msra.mxu0 0.0
  %1241 = vmatprep.subr.mxu0 0.0
  %1242 = vmatpush1.msra.mxu0 0.0
  %1243 = vmatprep.subr.mxu0 0.0
  %1244 = vmatpush1.msra.mxu0 0.0
  %1245 = vmatprep.subr.mxu0 0.0
  %1246 = vmatpush1.msra.mxu0 0.0
  %1247 = vmatprep.subr.mxu0 0.0
  %1248 = vmatpush1.msra.mxu0 0.0
  %1249 = vmatprep.subr.mxu0 0.0
  %1250 = vmatpush1.msra.mxu0 0.0
  %1251 = vmatprep.subr.mxu0 0.0
  %1252 = vmatpush1.msra.mxu0 0.0
  %1253 = vmatprep.subr.mxu0 0.0
  %1254 = vmatpush1.msra.mxu0 0.0
  %1255 = vmatprep.subr.mxu0 0.0
  %1256 = vmatpush1.msra.mxu0 0.0
  %1257 = vmatprep.subr.mxu0 0.0
  %1258 = vmatpush1.msra.mxu0 0.0
  %1259 = vmatprep.subr.mxu0 0.0
  %1260 = vmatpush1.msra.mxu0 0.0
  %1261 = vmatprep.subr.mxu0 0.0
  %1262 = vmatpush1.msra.mxu0 0.0
  %1263 = vmatprep.subr.mxu0 0.0
  %1264 = vmatpush1.msra.mxu0 0.0
  %1265 = vmatprep.subr.mxu0 0.0
  %1266 = vmatpush1.msra.mxu0 0.0
  %1267 = vmatprep.subr.mxu0 0.0
  %1268 = vmatpush1.msra.mxu0 0.0
  %1269 = vmatprep.subr.mxu0 0.0
  %1270 = vmatpush1.msra.mxu0 0.0
  %1271 = vmatprep.subr.mxu0 0.0
  %1272 = vmatpush1.msra.mxu0 0.0
  %1273 = vmatprep.subr.mxu0 0.0
  %1274 = vmatpush1.msra.mxu0 0.0
  %1275 = vmatprep.subr.mxu0 0.0
  %1276 = vmatpush1.msra.mxu0 0.0
  %1277 = vmatprep.subr.mxu0 0.0
  %1278 = vmatpush1.msra.mxu0 0.0
  %1279 = vmatprep.mubr.f32.mxu0 0.0
  %1280 = vmatmul.mubr.f32.gmra.mrb[0].mxu0 %v1213
  %v1281 = vpop.f32.mrb[0].mxu0
  %v1282 = vadd.f32 0.0, %v1281
  %v1283 = vpop.f32.mrb[0].mxu0
  %1284 = vdwg.mxu0
  %1285 = vrot.lane.b32.xlu0 %v392, 64
  %v1286 = vpop.permute.xlu0 %1285
  %v1289 = vsel %vm1044, %v1127, 0
  %1291 = vmatprep.subr.mxu0 0.0
  %1292 = vmatpush1.msra.mxu0 %v1286
  %1293 = vmatprep.subr.mxu0 0.0
  %1294 = vmatpush1.msra.mxu0 0.0
  %1295 = vmatprep.subr.mxu0 0.0
  %1296 = vmatpush1.msra.mxu0 0.0
  %1297 = vmatprep.subr.mxu0 0.0
  %1298 = vmatpush1.msra.mxu0 0.0
  %1299 = vmatprep.subr.mxu0 0.0
  %1300 = vmatpush1.msra.mxu0 0.0
  %1301 = vmatprep.subr.mxu0 0.0
  %1302 = vmatpush1.msra.mxu0 0.0
  %1303 = vmatprep.subr.mxu0 0.0
  %1304 = vmatpush1.msra.mxu0 0.0
  %1305 = vmatprep.subr.mxu0 0.0
  %1306 = vmatpush1.msra.mxu0 0.0
  %1307 = vmatprep.subr.mxu0 0.0
  %1308 = vmatpush1.msra.mxu0 0.0
  %1309 = vmatprep.subr.mxu0 0.0
  %1310 = vmatpush1.msra.mxu0 0.0
  %1311 = vmatprep.subr.mxu0 0.0
  %1312 = vmatpush1.msra.mxu0 0.0
  %1313 = vmatprep.subr.mxu0 0.0
  %1314 = vmatpush1.msra.mxu0 0.0
  %1315 = vmatprep.subr.mxu0 0.0
  %1316 = vmatpush1.msra.mxu0 0.0
  %1317 = vmatprep.subr.mxu0 0.0
  %1318 = vmatpush1.msra.mxu0 0.0
  %1319 = vmatprep.subr.mxu0 0.0
  %1320 = vmatpush1.msra.mxu0 0.0
  %1321 = vmatprep.subr.mxu0 0.0
  %1322 = vmatpush1.msra.mxu0 0.0
  %1323 = vmatprep.subr.mxu0 0.0
  %1324 = vmatpush1.msra.mxu0 0.0
  %1325 = vmatprep.subr.mxu0 0.0
  %1326 = vmatpush1.msra.mxu0 0.0
  %1327 = vmatprep.subr.mxu0 0.0
  %1328 = vmatpush1.msra.mxu0 0.0
  %1329 = vmatprep.subr.mxu0 0.0
  %1330 = vmatpush1.msra.mxu0 0.0
  %1331 = vmatprep.subr.mxu0 0.0
  %1332 = vmatpush1.msra.mxu0 0.0
  %1333 = vmatprep.subr.mxu0 0.0
  %1334 = vmatpush1.msra.mxu0 0.0
  %1335 = vmatprep.subr.mxu0 0.0
  %1336 = vmatpush1.msra.mxu0 0.0
  %1337 = vmatprep.subr.mxu0 0.0
  %1338 = vmatpush1.msra.mxu0 0.0
  %1339 = vmatprep.subr.mxu0 0.0
  %1340 = vmatpush1.msra.mxu0 0.0
  %1341 = vmatprep.subr.mxu0 0.0
  %1342 = vmatpush1.msra.mxu0 0.0
  %1343 = vmatprep.subr.mxu0 0.0
  %1344 = vmatpush1.msra.mxu0 0.0
  %1345 = vmatprep.subr.mxu0 0.0
  %1346 = vmatpush1.msra.mxu0 0.0
  %1347 = vmatprep.subr.mxu0 0.0
  %1348 = vmatpush1.msra.mxu0 0.0
  %1349 = vmatprep.subr.mxu0 0.0
  %1350 = vmatpush1.msra.mxu0 0.0
  %1351 = vmatprep.subr.mxu0 0.0
  %1352 = vmatpush1.msra.mxu0 0.0
  %1353 = vmatprep.subr.mxu0 0.0
  %1354 = vmatpush1.msra.mxu0 0.0
  %1355 = vmatprep.mubr.f32.mxu0 0.0
  %1356 = vmatmul.mubr.f32.gmra.mrb[0].mxu0 %v1289
  %v1357 = vpop.f32.mrb[0].mxu0
  %v1358 = vadd.f32 0.0, %v1357
  %v1359 = vpop.f32.mrb[0].mxu0
  %1360 = vdwg.mxu0
  %1361 = vrot.lane.b32.xlu0 %v397, 64
  %v1362 = vpop.permute.xlu0 %1361
  %v1365 = vsel %vm1044, %v1128, 0
  %1367 = vmatprep.subr.mxu0 0.0
  %1368 = vmatpush1.msra.mxu0 %v1362
  %1369 = vmatprep.subr.mxu0 0.0
  %1370 = vmatpush1.msra.mxu0 0.0
  %1371 = vmatprep.subr.mxu0 0.0
  %1372 = vmatpush1.msra.mxu0 0.0
  %1373 = vmatprep.subr.mxu0 0.0
  %1374 = vmatpush1.msra.mxu0 0.0
  %1375 = vmatprep.subr.mxu0 0.0
  %1376 = vmatpush1.msra.mxu0 0.0
  %1377 = vmatprep.subr.mxu0 0.0
  %1378 = vmatpush1.msra.mxu0 0.0
  %1379 = vmatprep.subr.mxu0 0.0
  %1380 = vmatpush1.msra.mxu0 0.0
  %1381 = vmatprep.subr.mxu0 0.0
  %1382 = vmatpush1.msra.mxu0 0.0
  %1383 = vmatprep.subr.mxu0 0.0
  %1384 = vmatpush1.msra.mxu0 0.0
  %1385 = vmatprep.subr.mxu0 0.0
  %1386 = vmatpush1.msra.mxu0 0.0
  %1387 = vmatprep.subr.mxu0 0.0
  %1388 = vmatpush1.msra.mxu0 0.0
  %1389 = vmatprep.subr.mxu0 0.0
  %1390 = vmatpush1.msra.mxu0 0.0
  %1391 = vmatprep.subr.mxu0 0.0
  %1392 = vmatpush1.msra.mxu0 0.0
  %1393 = vmatprep.subr.mxu0 0.0
  %1394 = vmatpush1.msra.mxu0 0.0
  %1395 = vmatprep.subr.mxu0 0.0
  %1396 = vmatpush1.msra.mxu0 0.0
  %1397 = vmatprep.subr.mxu0 0.0
  %1398 = vmatpush1.msra.mxu0 0.0
  %1399 = vmatprep.subr.mxu0 0.0
  %1400 = vmatpush1.msra.mxu0 0.0
  %1401 = vmatprep.subr.mxu0 0.0
  %1402 = vmatpush1.msra.mxu0 0.0
  %1403 = vmatprep.subr.mxu0 0.0
  %1404 = vmatpush1.msra.mxu0 0.0
  %1405 = vmatprep.subr.mxu0 0.0
  %1406 = vmatpush1.msra.mxu0 0.0
  %1407 = vmatprep.subr.mxu0 0.0
  %1408 = vmatpush1.msra.mxu0 0.0
  %1409 = vmatprep.subr.mxu0 0.0
  %1410 = vmatpush1.msra.mxu0 0.0
  %1411 = vmatprep.subr.mxu0 0.0
  %1412 = vmatpush1.msra.mxu0 0.0
  %1413 = vmatprep.subr.mxu0 0.0
  %1414 = vmatpush1.msra.mxu0 0.0
  %1415 = vmatprep.subr.mxu0 0.0
  %1416 = vmatpush1.msra.mxu0 0.0
  %1417 = vmatprep.subr.mxu0 0.0
  %1418 = vmatpush1.msra.mxu0 0.0
  %1419 = vmatprep.subr.mxu0 0.0
  %1420 = vmatpush1.msra.mxu0 0.0
  %1421 = vmatprep.subr.mxu0 0.0
  %1422 = vmatpush1.msra.mxu0 0.0
  %1423 = vmatprep.subr.mxu0 0.0
  %1424 = vmatpush1.msra.mxu0 0.0
  %1425 = vmatprep.subr.mxu0 0.0
  %1426 = vmatpush1.msra.mxu0 0.0
  %1427 = vmatprep.subr.mxu0 0.0
  %1428 = vmatpush1.msra.mxu0 0.0
  %1429 = vmatprep.subr.mxu0 0.0
  %1430 = vmatpush1.msra.mxu0 0.0
  %1431 = vmatprep.mubr.f32.mxu0 0.0
  %1432 = vmatmul.mubr.f32.gmra.mrb[0].mxu0 %v1365
  %v1433 = vpop.f32.mrb[0].mxu0
  %v1434 = vadd.f32 0.0, %v1433
  %v1435 = vpop.f32.mrb[0].mxu0
  %1436 = vdwg.mxu0
  %1437 = vrot.lane.b32.xlu0 %v402, 64
  %v1438 = vpop.permute.xlu0 %1437
  %v1441 = vsel %vm1044, %v1129, 0
  %1443 = vmatprep.subr.mxu0 0.0
  %1444 = vmatpush1.msra.mxu0 %v1438
  %1445 = vmatprep.subr.mxu0 0.0
  %1446 = vmatpush1.msra.mxu0 0.0
  %1447 = vmatprep.subr.mxu0 0.0
  %1448 = vmatpush1.msra.mxu0 0.0
  %1449 = vmatprep.subr.mxu0 0.0
  %1450 = vmatpush1.msra.mxu0 0.0
  %1451 = vmatprep.subr.mxu0 0.0
  %1452 = vmatpush1.msra.mxu0 0.0
  %1453 = vmatprep.subr.mxu0 0.0
  %1454 = vmatpush1.msra.mxu0 0.0
  %1455 = vmatprep.subr.mxu0 0.0
  %1456 = vmatpush1.msra.mxu0 0.0
  %1457 = vmatprep.subr.mxu0 0.0
  %1458 = vmatpush1.msra.mxu0 0.0
  %1459 = vmatprep.subr.mxu0 0.0
  %1460 = vmatpush1.msra.mxu0 0.0
  %1461 = vmatprep.subr.mxu0 0.0
  %1462 = vmatpush1.msra.mxu0 0.0
  %1463 = vmatprep.subr.mxu0 0.0
  %1464 = vmatpush1.msra.mxu0 0.0
  %1465 = vmatprep.subr.mxu0 0.0
  %1466 = vmatpush1.msra.mxu0 0.0
  %1467 = vmatprep.subr.mxu0 0.0
  %1468 = vmatpush1.msra.mxu0 0.0
  %1469 = vmatprep.subr.mxu0 0.0
  %1470 = vmatpush1.msra.mxu0 0.0
  %1471 = vmatprep.subr.mxu0 0.0
  %1472 = vmatpush1.msra.mxu0 0.0
  %1473 = vmatprep.subr.mxu0 0.0
  %1474 = vmatpush1.msra.mxu0 0.0
  %1475 = vmatprep.subr.mxu0 0.0
  %1476 = vmatpush1.msra.mxu0 0.0
  %1477 = vmatprep.subr.mxu0 0.0
  %1478 = vmatpush1.msra.mxu0 0.0
  %1479 = vmatprep.subr.mxu0 0.0
  %1480 = vmatpush1.msra.mxu0 0.0
  %1481 = vmatprep.subr.mxu0 0.0
  %1482 = vmatpush1.msra.mxu0 0.0
  %1483 = vmatprep.subr.mxu0 0.0
  %1484 = vmatpush1.msra.mxu0 0.0
  %1485 = vmatprep.subr.mxu0 0.0
  %1486 = vmatpush1.msra.mxu0 0.0
  %1487 = vmatprep.subr.mxu0 0.0
  %1488 = vmatpush1.msra.mxu0 0.0
  %1489 = vmatprep.subr.mxu0 0.0
  %1490 = vmatpush1.msra.mxu0 0.0
  %1491 = vmatprep.subr.mxu0 0.0
  %1492 = vmatpush1.msra.mxu0 0.0
  %1493 = vmatprep.subr.mxu0 0.0
  %1494 = vmatpush1.msra.mxu0 0.0
  %1495 = vmatprep.subr.mxu0 0.0
  %1496 = vmatpush1.msra.mxu0 0.0
  %1497 = vmatprep.subr.mxu0 0.0
  %1498 = vmatpush1.msra.mxu0 0.0
  %1499 = vmatprep.subr.mxu0 0.0
  %1500 = vmatpush1.msra.mxu0 0.0
  %1501 = vmatprep.subr.mxu0 0.0
  %1502 = vmatpush1.msra.mxu0 0.0
  %1503 = vmatprep.subr.mxu0 0.0
  %1504 = vmatpush1.msra.mxu0 0.0
  %1505 = vmatprep.subr.mxu0 0.0
  %1506 = vmatpush1.msra.mxu0 0.0
  %1507 = vmatprep.mubr.f32.mxu0 0.0
  %1508 = vmatmul.mubr.f32.gmra.mrb[0].mxu0 %v1441
  %v1509 = vpop.f32.mrb[0].mxu0
  %v1510 = vadd.f32 0.0, %v1509
  %v1511 = vpop.f32.mrb[0].mxu0
  %1512 = vdwg.mxu0
  %1513 = vrot.lane.b32.xlu0 %v407, 64
  %v1514 = vpop.permute.xlu0 %1513
  %v1517 = vsel %vm1044, %v1130, 0
  %1519 = vmatprep.subr.mxu0 0.0
  %1520 = vmatpush1.msra.mxu0 %v1514
  %1521 = vmatprep.subr.mxu0 0.0
  %1522 = vmatpush1.msra.mxu0 0.0
  %1523 = vmatprep.subr.mxu0 0.0
  %1524 = vmatpush1.msra.mxu0 0.0
  %1525 = vmatprep.subr.mxu0 0.0
  %1526 = vmatpush1.msra.mxu0 0.0
  %1527 = vmatprep.subr.mxu0 0.0
  %1528 = vmatpush1.msra.mxu0 0.0
  %1529 = vmatprep.subr.mxu0 0.0
  %1530 = vmatpush1.msra.mxu0 0.0
  %1531 = vmatprep.subr.mxu0 0.0
  %1532 = vmatpush1.msra.mxu0 0.0
  %1533 = vmatprep.subr.mxu0 0.0
  %1534 = vmatpush1.msra.mxu0 0.0
  %1535 = vmatprep.subr.mxu0 0.0
  %1536 = vmatpush1.msra.mxu0 0.0
  %1537 = vmatprep.subr.mxu0 0.0
  %1538 = vmatpush1.msra.mxu0 0.0
  %1539 = vmatprep.subr.mxu0 0.0
  %1540 = vmatpush1.msra.mxu0 0.0
  %1541 = vmatprep.subr.mxu0 0.0
  %1542 = vmatpush1.msra.mxu0 0.0
  %1543 = vmatprep.subr.mxu0 0.0
  %1544 = vmatpush1.msra.mxu0 0.0
  %1545 = vmatprep.subr.mxu0 0.0
  %1546 = vmatpush1.msra.mxu0 0.0
  %1547 = vmatprep.subr.mxu0 0.0
  %1548 = vmatpush1.msra.mxu0 0.0
  %1549 = vmatprep.subr.mxu0 0.0
  %1550 = vmatpush1.msra.mxu0 0.0
  %1551 = vmatprep.subr.mxu0 0.0
  %1552 = vmatpush1.msra.mxu0 0.0
  %1553 = vmatprep.subr.mxu0 0.0
  %1554 = vmatpush1.msra.mxu0 0.0
  %1555 = vmatprep.subr.mxu0 0.0
  %1556 = vmatpush1.msra.mxu0 0.0
  %1557 = vmatprep.subr.mxu0 0.0
  %1558 = vmatpush1.msra.mxu0 0.0
  %1559 = vmatprep.subr.mxu0 0.0
  %1560 = vmatpush1.msra.mxu0 0.0
  %1561 = vmatprep.subr.mxu0 0.0
  %1562 = vmatpush1.msra.mxu0 0.0
  %1563 = vmatprep.subr.mxu0 0.0
  %1564 = vmatpush1.msra.mxu0 0.0
  %1565 = vmatprep.subr.mxu0 0.0
  %1566 = vmatpush1.msra.mxu0 0.0
  %1567 = vmatprep.subr.mxu0 0.0
  %1568 = vmatpush1.msra.mxu0 0.0
  %1569 = vmatprep.subr.mxu0 0.0
  %1570 = vmatpush1.msra.mxu0 0.0
  %1571 = vmatprep.subr.mxu0 0.0
  %1572 = vmatpush1.msra.mxu0 0.0
  %1573 = vmatprep.subr.mxu0 0.0
  %1574 = vmatpush1.msra.mxu0 0.0
  %1575 = vmatprep.subr.mxu0 0.0
  %1576 = vmatpush1.msra.mxu0 0.0
  %1577 = vmatprep.subr.mxu0 0.0
  %1578 = vmatpush1.msra.mxu0 0.0
  %1579 = vmatprep.subr.mxu0 0.0
  %1580 = vmatpush1.msra.mxu0 0.0
  %1581 = vmatprep.subr.mxu0 0.0
  %1582 = vmatpush1.msra.mxu0 0.0
  %1583 = vmatprep.mubr.f32.mxu0 0.0
  %1584 = vmatmul.mubr.f32.gmra.mrb[0].mxu0 %v1517
  %v1585 = vpop.f32.mrb[0].mxu0
  %v1586 = vadd.f32 0.0, %v1585
  %v1587 = vpop.f32.mrb[0].mxu0
  %1588 = vdwg.mxu0
  %1589 = vrot.lane.b32.xlu0 %v412, 64
  %v1590 = vpop.permute.xlu0 %1589
  %v1593 = vsel %vm1044, %v1131, 0
  %1595 = vmatprep.subr.mxu0 0.0
  %1596 = vmatpush1.msra.mxu0 %v1590
  %1597 = vmatprep.subr.mxu0 0.0
  %1598 = vmatpush1.msra.mxu0 0.0
  %1599 = vmatprep.subr.mxu0 0.0
  %1600 = vmatpush1.msra.mxu0 0.0
  %1601 = vmatprep.subr.mxu0 0.0
  %1602 = vmatpush1.msra.mxu0 0.0
  %1603 = vmatprep.subr.mxu0 0.0
  %1604 = vmatpush1.msra.mxu0 0.0
  %1605 = vmatprep.subr.mxu0 0.0
  %1606 = vmatpush1.msra.mxu0 0.0
  %1607 = vmatprep.subr.mxu0 0.0
  %1608 = vmatpush1.msra.mxu0 0.0
  %1609 = vmatprep.subr.mxu0 0.0
  %1610 = vmatpush1.msra.mxu0 0.0
  %1611 = vmatprep.subr.mxu0 0.0
  %1612 = vmatpush1.msra.mxu0 0.0
  %1613 = vmatprep.subr.mxu0 0.0
  %1614 = vmatpush1.msra.mxu0 0.0
  %1615 = vmatprep.subr.mxu0 0.0
  %1616 = vmatpush1.msra.mxu0 0.0
  %1617 = vmatprep.subr.mxu0 0.0
  %1618 = vmatpush1.msra.mxu0 0.0
  %1619 = vmatprep.subr.mxu0 0.0
  %1620 = vmatpush1.msra.mxu0 0.0
  %1621 = vmatprep.subr.mxu0 0.0
  %1622 = vmatpush1.msra.mxu0 0.0
  %1623 = vmatprep.subr.mxu0 0.0
  %1624 = vmatpush1.msra.mxu0 0.0
  %1625 = vmatprep.subr.mxu0 0.0
  %1626 = vmatpush1.msra.mxu0 0.0
  %1627 = vmatprep.subr.mxu0 0.0
  %1628 = vmatpush1.msra.mxu0 0.0
  %1629 = vmatprep.subr.mxu0 0.0
  %1630 = vmatpush1.msra.mxu0 0.0
  %1631 = vmatprep.subr.mxu0 0.0
  %1632 = vmatpush1.msra.mxu0 0.0
  %1633 = vmatprep.subr.mxu0 0.0
  %1634 = vmatpush1.msra.mxu0 0.0
  %1635 = vmatprep.subr.mxu0 0.0
  %1636 = vmatpush1.msra.mxu0 0.0
  %1637 = vmatprep.subr.mxu0 0.0
  %1638 = vmatpush1.msra.mxu0 0.0
  %1639 = vmatprep.subr.mxu0 0.0
  %1640 = vmatpush1.msra.mxu0 0.0
  %1641 = vmatprep.subr.mxu0 0.0
  %1642 = vmatpush1.msra.mxu0 0.0
  %1643 = vmatprep.subr.mxu0 0.0
  %1644 = vmatpush1.msra.mxu0 0.0
  %1645 = vmatprep.subr.mxu0 0.0
  %1646 = vmatpush1.msra.mxu0 0.0
  %1647 = vmatprep.subr.mxu0 0.0
  %1648 = vmatpush1.msra.mxu0 0.0
  %1649 = vmatprep.subr.mxu0 0.0
  %1650 = vmatpush1.msra.mxu0 0.0
  %1651 = vmatprep.subr.mxu0 0.0
  %1652 = vmatpush1.msra.mxu0 0.0
  %1653 = vmatprep.subr.mxu0 0.0
  %1654 = vmatpush1.msra.mxu0 0.0
  %1655 = vmatprep.subr.mxu0 0.0
  %1656 = vmatpush1.msra.mxu0 0.0
  %1657 = vmatprep.subr.mxu0 0.0
  %1658 = vmatpush1.msra.mxu0 0.0
  %1659 = vmatprep.mubr.f32.mxu0 0.0
  %1660 = vmatmul.mubr.f32.gmra.mrb[0].mxu0 %v1593
  %v1661 = vpop.f32.mrb[0].mxu0
  %v1662 = vadd.f32 0.0, %v1661
  %v1663 = vpop.f32.mrb[0].mxu0
  %1664 = vdwg.mxu0
  %1665 = vrot.lane.b32.xlu0 %v417, 64
  %v1666 = vpop.permute.xlu0 %1665
  %v1669 = vsel %vm1044, %v1132, 0
  %1671 = vmatprep.subr.mxu0 0.0
  %1672 = vmatpush1.msra.mxu0 %v1666
  %1673 = vmatprep.subr.mxu0 0.0
  %1674 = vmatpush1.msra.mxu0 0.0
  %1675 = vmatprep.subr.mxu0 0.0
  %1676 = vmatpush1.msra.mxu0 0.0
  %1677 = vmatprep.subr.mxu0 0.0
  %1678 = vmatpush1.msra.mxu0 0.0
  %1679 = vmatprep.subr.mxu0 0.0
  %1680 = vmatpush1.msra.mxu0 0.0
  %1681 = vmatprep.subr.mxu0 0.0
  %1682 = vmatpush1.msra.mxu0 0.0
  %1683 = vmatprep.subr.mxu0 0.0
  %1684 = vmatpush1.msra.mxu0 0.0
  %1685 = vmatprep.subr.mxu0 0.0
  %1686 = vmatpush1.msra.mxu0 0.0
  %1687 = vmatprep.subr.mxu0 0.0
  %1688 = vmatpush1.msra.mxu0 0.0
  %1689 = vmatprep.subr.mxu0 0.0
  %1690 = vmatpush1.msra.mxu0 0.0
  %1691 = vmatprep.subr.mxu0 0.0
  %1692 = vmatpush1.msra.mxu0 0.0
  %1693 = vmatprep.subr.mxu0 0.0
  %1694 = vmatpush1.msra.mxu0 0.0
  %1695 = vmatprep.subr.mxu0 0.0
  %1696 = vmatpush1.msra.mxu0 0.0
  %1697 = vmatprep.subr.mxu0 0.0
  %1698 = vmatpush1.msra.mxu0 0.0
  %1699 = vmatprep.subr.mxu0 0.0
  %1700 = vmatpush1.msra.mxu0 0.0
  %1701 = vmatprep.subr.mxu0 0.0
  %1702 = vmatpush1.msra.mxu0 0.0
  %1703 = vmatprep.subr.mxu0 0.0
  %1704 = vmatpush1.msra.mxu0 0.0
  %1705 = vmatprep.subr.mxu0 0.0
  %1706 = vmatpush1.msra.mxu0 0.0
  %1707 = vmatprep.subr.mxu0 0.0
  %1708 = vmatpush1.msra.mxu0 0.0
  %1709 = vmatprep.subr.mxu0 0.0
  %1710 = vmatpush1.msra.mxu0 0.0
  %1711 = vmatprep.subr.mxu0 0.0
  %1712 = vmatpush1.msra.mxu0 0.0
  %1713 = vmatprep.subr.mxu0 0.0
  %1714 = vmatpush1.msra.mxu0 0.0
  %1715 = vmatprep.subr.mxu0 0.0
  %1716 = vmatpush1.msra.mxu0 0.0
  %1717 = vmatprep.subr.mxu0 0.0
  %1718 = vmatpush1.msra.mxu0 0.0
  %1719 = vmatprep.subr.mxu0 0.0
  %1720 = vmatpush1.msra.mxu0 0.0
  %1721 = vmatprep.subr.mxu0 0.0
  %1722 = vmatpush1.msra.mxu0 0.0
  %1723 = vmatprep.subr.mxu0 0.0
  %1724 = vmatpush1.msra.mxu0 0.0
  %1725 = vmatprep.subr.mxu0 0.0
  %1726 = vmatpush1.msra.mxu0 0.0
  %1727 = vmatprep.subr.mxu0 0.0
  %1728 = vmatpush1.msra.mxu0 0.0
  %1729 = vmatprep.subr.mxu0 0.0
  %1730 = vmatpush1.msra.mxu0 0.0
  %1731 = vmatprep.subr.mxu0 0.0
  %1732 = vmatpush1.msra.mxu0 0.0
  %1733 = vmatprep.subr.mxu0 0.0
  %1734 = vmatpush1.msra.mxu0 0.0
  %1735 = vmatprep.mubr.f32.mxu0 0.0
  %1736 = vmatmul.mubr.f32.gmra.mrb[0].mxu0 %v1669
  %v1737 = vpop.f32.mrb[0].mxu0
  %v1738 = vadd.f32 0.0, %v1737
  %v1739 = vpop.f32.mrb[0].mxu0
  %1740 = vdwg.mxu0
  %v1741 = vld [vmem:[%s4] sm:$0xff]
  %v1742 = vld [vmem:[%s4 + $0x8] sm:$0xff]
  %v1743 = vld [vmem:[%s4 + $0x10] sm:$0xff]
  %v1744 = vld [vmem:[%s4 + $0x18] sm:$0xff]
  %v1746 = vsel %vm290, %v1206, 0
  %v1749 = vsel %vm290, %v1282, 0
  %v1752 = vsel %vm290, %v1358, 0
  %v1755 = vsel %vm290, %v1434, 0
  %v1758 = vsel %vm290, %v1510, 0
  %v1761 = vsel %vm290, %v1586, 0
  %v1764 = vsel %vm290, %v1662, 0
  %v1767 = vsel %vm290, %v1738, 0
  %1769 = vmatprep.subr.mxu0 0.0
  %1770 = vmatpush1.msra.mxu0 %v1741
  %1771 = vmatprep.subr.mxu0 0.0
  %1772 = vmatpush1.msra.mxu0 %v1742
  %1773 = vmatprep.subr.mxu0 0.0
  %1774 = vmatpush1.msra.mxu0 %v1743
  %1775 = vmatprep.subr.mxu0 0.0
  %1776 = vmatpush1.msra.mxu0 %v1744
  %1777 = vmatprep.subr.mxu0 0.0
  %1778 = vmatpush1.msra.mxu0 0.0
  %1779 = vmatprep.subr.mxu0 0.0
  %1780 = vmatpush1.msra.mxu0 0.0
  %1781 = vmatprep.subr.mxu0 0.0
  %1782 = vmatpush1.msra.mxu0 0.0
  %1783 = vmatprep.subr.mxu0 0.0
  %1784 = vmatpush1.msra.mxu0 0.0
  %1785 = vmatprep.subr.mxu0 0.0
  %1786 = vmatpush1.msra.mxu0 0.0
  %1787 = vmatprep.subr.mxu0 0.0
  %1788 = vmatpush1.msra.mxu0 0.0
  %1789 = vmatprep.subr.mxu0 0.0
  %1790 = vmatpush1.msra.mxu0 0.0
  %1791 = vmatprep.subr.mxu0 0.0
  %1792 = vmatpush1.msra.mxu0 0.0
  %1793 = vmatprep.subr.mxu0 0.0
  %1794 = vmatpush1.msra.mxu0 0.0
  %1795 = vmatprep.subr.mxu0 0.0
  %1796 = vmatpush1.msra.mxu0 0.0
  %1797 = vmatprep.subr.mxu0 0.0
  %1798 = vmatpush1.msra.mxu0 0.0
  %1799 = vmatprep.subr.mxu0 0.0
  %1800 = vmatpush1.msra.mxu0 0.0
  %1801 = vmatprep.subr.mxu0 0.0
  %1802 = vmatpush1.msra.mxu0 0.0
  %1803 = vmatprep.subr.mxu0 0.0
  %1804 = vmatpush1.msra.mxu0 0.0
  %1805 = vmatprep.subr.mxu0 0.0
  %1806 = vmatpush1.msra.mxu0 0.0
  %1807 = vmatprep.subr.mxu0 0.0
  %1808 = vmatpush1.msra.mxu0 0.0
  %1809 = vmatprep.subr.mxu0 0.0
  %1810 = vmatpush1.msra.mxu0 0.0
  %1811 = vmatprep.subr.mxu0 0.0
  %1812 = vmatpush1.msra.mxu0 0.0
  %1813 = vmatprep.subr.mxu0 0.0
  %1814 = vmatpush1.msra.mxu0 0.0
  %1815 = vmatprep.subr.mxu0 0.0
  %1816 = vmatpush1.msra.mxu0 0.0
  %1817 = vmatprep.subr.mxu0 0.0
  %1818 = vmatpush1.msra.mxu0 0.0
  %1819 = vmatprep.subr.mxu0 0.0
  %1820 = vmatpush1.msra.mxu0 0.0
  %1821 = vmatprep.subr.mxu0 0.0
  %1822 = vmatpush1.msra.mxu0 0.0
  %1823 = vmatprep.subr.mxu0 0.0
  %1824 = vmatpush1.msra.mxu0 0.0
  %1825 = vmatprep.subr.mxu0 0.0
  %1826 = vmatpush1.msra.mxu0 0.0
  %1827 = vmatprep.subr.mxu0 0.0
  %1828 = vmatpush1.msra.mxu0 0.0
  %1829 = vmatprep.subr.mxu0 0.0
  %1830 = vmatpush1.msra.mxu0 0.0
  %1831 = vmatprep.subr.mxu0 0.0
  %1832 = vmatpush1.msra.mxu0 0.0
  %1833 = vmatprep.mubr.f32.mxu0 0.0
  %1834 = vmatmul.mubr.f32.gmra.mrb[0].mxu0 %v1746
  %v1835 = vpop.f32.mrb[0].mxu0
  %v1836 = vadd.f32 0.0, %v1835
  %v1837 = vpop.f32.mrb[0].mxu0
  %1838 = vmatprep.mubr.f32.mxu0 0.0
  %1839 = vmatmul.mubr.f32.gmra.mrb[0].mxu0 %v1749
  %v1840 = vpop.f32.mrb[0].mxu0
  %v1841 = vadd.f32 0.0, %v1840
  %v1842 = vpop.f32.mrb[0].mxu0
  %1843 = vmatprep.mubr.f32.mxu0 0.0
  %1844 = vmatmul.mubr.f32.gmra.mrb[0].mxu0 %v1752
  %v1845 = vpop.f32.mrb[0].mxu0
  %v1846 = vadd.f32 0.0, %v1845
  %v1847 = vpop.f32.mrb[0].mxu0
  %1848 = vmatprep.mubr.f32.mxu0 0.0
  %1849 = vmatmul.mubr.f32.gmra.mrb[0].mxu0 %v1755
  %v1850 = vpop.f32.mrb[0].mxu0
  %v1851 = vadd.f32 0.0, %v1850
  %v1852 = vpop.f32.mrb[0].mxu0
  %1853 = vmatprep.mubr.f32.mxu0 0.0
  %1854 = vmatmul.mubr.f32.gmra.mrb[0].mxu0 %v1758
  %v1855 = vpop.f32.mrb[0].mxu0
  %v1856 = vadd.f32 0.0, %v1855
  %v1857 = vpop.f32.mrb[0].mxu0
  %1858 = vmatprep.mubr.f32.mxu0 0.0
  %1859 = vmatmul.mubr.f32.gmra.mrb[0].mxu0 %v1761
  %v1860 = vpop.f32.mrb[0].mxu0
  %v1861 = vadd.f32 0.0, %v1860
  %v1862 = vpop.f32.mrb[0].mxu0
  %1863 = vmatprep.mubr.f32.mxu0 0.0
  %1864 = vmatmul.mubr.f32.gmra.mrb[0].mxu0 %v1764
  %v1865 = vpop.f32.mrb[0].mxu0
  %v1866 = vadd.f32 0.0, %v1865
  %v1867 = vpop.f32.mrb[0].mxu0
  %1868 = vmatprep.mubr.f32.mxu0 0.0
  %1869 = vmatmul.mubr.f32.gmra.mrb[0].mxu0 %v1767
  %v1870 = vpop.f32.mrb[0].mxu0
  %v1871 = vadd.f32 0.0, %v1870
  %v1872 = vpop.f32.mrb[0].mxu0
  %1873 = vdwg.mxu0
  %v1874 = vadd.f32 %v278, %v1836
  %v1875 = vadd.f32 %v279, %v1841
  %v1876 = vadd.f32 %v280, %v1846
  %v1877 = vadd.f32 %v281, %v1851
  %v1878 = vadd.f32 %v282, %v1856
  %v1879 = vadd.f32 %v283, %v1861
  %v1880 = vadd.f32 %v284, %v1866
  %v1881 = vadd.f32 %v285, %v1871
  %v1882 = vld [vmem:[%s5] sm:$0xff]
  %v1883 = vld [vmem:[%s5 + $0x8] sm:$0xff]
  %v1884 = vld [vmem:[%s5 + $0x10] sm:$0xff]
  %v1885 = vld [vmem:[%s5 + $0x18] sm:$0xff]
  %v1886 = vld [vmem:[%s6] sm:$0x1]
  %v1888 = vlaneseq
  %v1889 = vshrl.u32 %v1888, 7
  %v1890 = vsub.s32 0, %v1889
  %v1891 = vrot.slane %v1886, %v1890
  %v1894 = vsel %vm290, %v1874, 0
  %v1897 = vsel %vm290, %v1875, 0
  %v1900 = vsel %vm290, %v1876, 0
  %v1903 = vsel %vm290, %v1877, 0
  %v1906 = vsel %vm290, %v1878, 0
  %v1909 = vsel %vm290, %v1879, 0
  %v1912 = vsel %vm290, %v1880, 0
  %v1915 = vsel %vm290, %v1881, 0
  %1917 = vmatprep.subr.mxu0 0.0
  %1918 = vmatpush1.msra.mxu0 %v1882
  %1919 = vmatprep.subr.mxu0 0.0
  %1920 = vmatpush1.msra.mxu0 %v1883
  %1921 = vmatprep.subr.mxu0 0.0
  %1922 = vmatpush1.msra.mxu0 %v1884
  %1923 = vmatprep.subr.mxu0 0.0
  %1924 = vmatpush1.msra.mxu0 %v1885
  %1925 = vmatprep.subr.mxu0 0.0
  %1926 = vmatpush1.msra.mxu0 0.0
  %1927 = vmatprep.subr.mxu0 0.0
  %1928 = vmatpush1.msra.mxu0 0.0
  %1929 = vmatprep.subr.mxu0 0.0
  %1930 = vmatpush1.msra.mxu0 0.0
  %1931 = vmatprep.subr.mxu0 0.0
  %1932 = vmatpush1.msra.mxu0 0.0
  %1933 = vmatprep.subr.mxu0 0.0
  %1934 = vmatpush1.msra.mxu0 0.0
  %1935 = vmatprep.subr.mxu0 0.0
  %1936 = vmatpush1.msra.mxu0 0.0
  %1937 = vmatprep.subr.mxu0 0.0
  %1938 = vmatpush1.msra.mxu0 0.0
  %1939 = vmatprep.subr.mxu0 0.0
  %1940 = vmatpush1.msra.mxu0 0.0
  %1941 = vmatprep.subr.mxu0 0.0
  %1942 = vmatpush1.msra.mxu0 0.0
  %1943 = vmatprep.subr.mxu0 0.0
  %1944 = vmatpush1.msra.mxu0 0.0
  %1945 = vmatprep.subr.mxu0 0.0
  %1946 = vmatpush1.msra.mxu0 0.0
  %1947 = vmatprep.subr.mxu0 0.0
  %1948 = vmatpush1.msra.mxu0 0.0
  %1949 = vmatprep.subr.mxu0 0.0
  %1950 = vmatpush1.msra.mxu0 0.0
  %1951 = vmatprep.subr.mxu0 0.0
  %1952 = vmatpush1.msra.mxu0 0.0
  %1953 = vmatprep.subr.mxu0 0.0
  %1954 = vmatpush1.msra.mxu0 0.0
  %1955 = vmatprep.subr.mxu0 0.0
  %1956 = vmatpush1.msra.mxu0 0.0
  %1957 = vmatprep.subr.mxu0 0.0
  %1958 = vmatpush1.msra.mxu0 0.0
  %1959 = vmatprep.subr.mxu0 0.0
  %1960 = vmatpush1.msra.mxu0 0.0
  %1961 = vmatprep.subr.mxu0 0.0
  %1962 = vmatpush1.msra.mxu0 0.0
  %1963 = vmatprep.subr.mxu0 0.0
  %1964 = vmatpush1.msra.mxu0 0.0
  %1965 = vmatprep.subr.mxu0 0.0
  %1966 = vmatpush1.msra.mxu0 0.0
  %1967 = vmatprep.subr.mxu0 0.0
  %1968 = vmatpush1.msra.mxu0 0.0
  %1969 = vmatprep.subr.mxu0 0.0
  %1970 = vmatpush1.msra.mxu0 0.0
  %1971 = vmatprep.subr.mxu0 0.0
  %1972 = vmatpush1.msra.mxu0 0.0
  %1973 = vmatprep.subr.mxu0 0.0
  %1974 = vmatpush1.msra.mxu0 0.0
  %1975 = vmatprep.subr.mxu0 0.0
  %1976 = vmatpush1.msra.mxu0 0.0
  %1977 = vmatprep.subr.mxu0 0.0
  %1978 = vmatpush1.msra.mxu0 0.0
  %1979 = vmatprep.subr.mxu0 0.0
  %1980 = vmatpush1.msra.mxu0 0.0
  %1981 = vmatprep.mubr.f32.mxu0 0.0
  %1982 = vmatmul.mubr.f32.gmra.mrb[0].mxu0 %v1894
  %v1983 = vpop.f32.mrb[0].mxu0
  %v1984 = vadd.f32 %v1891, %v1983
  %v1985 = vpop.f32.mrb[0].mxu0
  %1986 = vmatprep.mubr.f32.mxu0 0.0
  %1987 = vmatmul.mubr.f32.gmra.mrb[0].mxu0 %v1897
  %v1988 = vpop.f32.mrb[0].mxu0
  %v1989 = vadd.f32 %v1891, %v1988
  %v1990 = vpop.f32.mrb[0].mxu0
  %1991 = vmatprep.mubr.f32.mxu0 0.0
  %1992 = vmatmul.mubr.f32.gmra.mrb[0].mxu0 %v1900
  %v1993 = vpop.f32.mrb[0].mxu0
  %v1994 = vadd.f32 %v1891, %v1993
  %v1995 = vpop.f32.mrb[0].mxu0
  %1996 = vmatprep.mubr.f32.mxu0 0.0
  %1997 = vmatmul.mubr.f32.gmra.mrb[0].mxu0 %v1903
  %v1998 = vpop.f32.mrb[0].mxu0
  %v1999 = vadd.f32 %v1891, %v1998
  %v2000 = vpop.f32.mrb[0].mxu0
  %2001 = vmatprep.mubr.f32.mxu0 0.0
  %2002 = vmatmul.mubr.f32.gmra.mrb[0].mxu0 %v1906
  %v2003 = vpop.f32.mrb[0].mxu0
  %v2004 = vadd.f32 %v1891, %v2003
  %v2005 = vpop.f32.mrb[0].mxu0
  %2006 = vmatprep.mubr.f32.mxu0 0.0
  %2007 = vmatmul.mubr.f32.gmra.mrb[0].mxu0 %v1909
  %v2008 = vpop.f32.mrb[0].mxu0
  %v2009 = vadd.f32 %v1891, %v2008
  %v2010 = vpop.f32.mrb[0].mxu0
  %2011 = vmatprep.mubr.f32.mxu0 0.0
  %2012 = vmatmul.mubr.f32.gmra.mrb[0].mxu0 %v1912
  %v2013 = vpop.f32.mrb[0].mxu0
  %v2014 = vadd.f32 %v1891, %v2013
  %v2015 = vpop.f32.mrb[0].mxu0
  %2016 = vmatprep.mubr.f32.mxu0 0.0
  %2017 = vmatmul.mubr.f32.gmra.mrb[0].mxu0 %v1915
  %v2018 = vpop.f32.mrb[0].mxu0
  %v2019 = vadd.f32 %v1891, %v2018
  %v2020 = vpop.f32.mrb[0].mxu0
  %2021 = vdwg.mxu0
  %v2022 = vmax.f32 %v1984, 0.0
  %v2023 = vmax.f32 %v1989, 0.0
  %v2024 = vmax.f32 %v1994, 0.0
  %v2025 = vmax.f32 %v1999, 0.0
  %v2026 = vmax.f32 %v2004, 0.0
  %v2027 = vmax.f32 %v2009, 0.0
  %v2028 = vmax.f32 %v2014, 0.0
  %v2029 = vmax.f32 %v2019, 0.0
  %v2030 = vld [vmem:[%s7] sm:$0xff]
  %v2031 = vld [vmem:[%s7 + $0x8] sm:$0xff]
  %v2032 = vld [vmem:[%s7 + $0x10] sm:$0xff]
  %v2033 = vld [vmem:[%s7 + $0x18] sm:$0xff]
  %v2034 = vld [vmem:[%s7 + $0x20] sm:$0xff]
  %v2035 = vld [vmem:[%s7 + $0x28] sm:$0xff]
  %v2036 = vld [vmem:[%s7 + $0x30] sm:$0xff]
  %v2037 = vld [vmem:[%s7 + $0x38] sm:$0xff]
  %vm2038 = vcmask 523264
  %v2040 = vsel %vm2038, %v2022, 0
  %v2043 = vsel %vm2038, %v2023, 0
  %v2046 = vsel %vm2038, %v2024, 0
  %v2049 = vsel %vm2038, %v2025, 0
  %v2052 = vsel %vm2038, %v2026, 0
  %v2055 = vsel %vm2038, %v2027, 0
  %v2058 = vsel %vm2038, %v2028, 0
  %v2061 = vsel %vm2038, %v2029, 0
  %2063 = vmatprep.subr.mxu0 0.0
  %2064 = vmatpush1.msra.mxu0 %v2030
  %2065 = vmatprep.subr.mxu0 0.0
  %2066 = vmatpush1.msra.mxu0 %v2031
  %2067 = vmatprep.subr.mxu0 0.0
  %2068 = vmatpush1.msra.mxu0 %v2032
  %2069 = vmatprep.subr.mxu0 0.0
  %2070 = vmatpush1.msra.mxu0 %v2033
  %2071 = vmatprep.subr.mxu0 0.0
  %2072 = vmatpush1.msra.mxu0 %v2034
  %2073 = vmatprep.subr.mxu0 0.0
  %2074 = vmatpush1.msra.mxu0 %v2035
  %2075 = vmatprep.subr.mxu0 0.0
  %2076 = vmatpush1.msra.mxu0 %v2036
  %2077 = vmatprep.subr.mxu0 0.0
  %2078 = vmatpush1.msra.mxu0 %v2037
  %2079 = vmatprep.subr.mxu0 0.0
  %2080 = vmatpush1.msra.mxu0 0.0
  %2081 = vmatprep.subr.mxu0 0.0
  %2082 = vmatpush1.msra.mxu0 0.0
  %2083 = vmatprep.subr.mxu0 0.0
  %2084 = vmatpush1.msra.mxu0 0.0
  %2085 = vmatprep.subr.mxu0 0.0
  %2086 = vmatpush1.msra.mxu0 0.0
  %2087 = vmatprep.subr.mxu0 0.0
  %2088 = vmatpush1.msra.mxu0 0.0
  %2089 = vmatprep.subr.mxu0 0.0
  %2090 = vmatpush1.msra.mxu0 0.0
  %2091 = vmatprep.subr.mxu0 0.0
  %2092 = vmatpush1.msra.mxu0 0.0
  %2093 = vmatprep.subr.mxu0 0.0
  %2094 = vmatpush1.msra.mxu0 0.0
  %2095 = vmatprep.subr.mxu0 0.0
  %2096 = vmatpush1.msra.mxu0 0.0
  %2097 = vmatprep.subr.mxu0 0.0
  %2098 = vmatpush1.msra.mxu0 0.0
  %2099 = vmatprep.subr.mxu0 0.0
  %2100 = vmatpush1.msra.mxu0 0.0
  %2101 = vmatprep.subr.mxu0 0.0
  %2102 = vmatpush1.msra.mxu0 0.0
  %2103 = vmatprep.subr.mxu0 0.0
  %2104 = vmatpush1.msra.mxu0 0.0
  %2105 = vmatprep.subr.mxu0 0.0
  %2106 = vmatpush1.msra.mxu0 0.0
  %2107 = vmatprep.subr.mxu0 0.0
  %2108 = vmatpush1.msra.mxu0 0.0
  %2109 = vmatprep.subr.mxu0 0.0
  %2110 = vmatpush1.msra.mxu0 0.0
  %2111 = vmatprep.subr.mxu0 0.0
  %2112 = vmatpush1.msra.mxu0 0.0
  %2113 = vmatprep.subr.mxu0 0.0
  %2114 = vmatpush1.msra.mxu0 0.0
  %2115 = vmatprep.subr.mxu0 0.0
  %2116 = vmatpush1.msra.mxu0 0.0
  %2117 = vmatprep.subr.mxu0 0.0
  %2118 = vmatpush1.msra.mxu0 0.0
  %2119 = vmatprep.subr.mxu0 0.0
  %2120 = vmatpush1.msra.mxu0 0.0
  %2121 = vmatprep.subr.mxu0 0.0
  %2122 = vmatpush1.msra.mxu0 0.0
  %2123 = vmatprep.subr.mxu0 0.0
  %2124 = vmatpush1.msra.mxu0 0.0
  %2125 = vmatprep.subr.mxu0 0.0
  %2126 = vmatpush1.msra.mxu0 0.0
  %2127 = vmatprep.mubr.f32.mxu0 0.0
  %2128 = vmatmul.mubr.f32.gmra.mrb[0].mxu0 %v2040
  %v2129 = vpop.f32.mrb[0].mxu0
  %v2130 = vadd.f32 0.0, %v2129
  %v2131 = vpop.f32.mrb[0].mxu0
  %2132 = vmatprep.mubr.f32.mxu0 0.0
  %2133 = vmatmul.mubr.f32.gmra.mrb[0].mxu0 %v2043
  %v2134 = vpop.f32.mrb[0].mxu0
  %v2135 = vadd.f32 0.0, %v2134
  %v2136 = vpop.f32.mrb[0].mxu0
  %2137 = vmatprep.mubr.f32.mxu0 0.0
  %2138 = vmatmul.mubr.f32.gmra.mrb[0].mxu0 %v2046
  %v2139 = vpop.f32.mrb[0].mxu0
  %v2140 = vadd.f32 0.0, %v2139
  %v2141 = vpop.f32.mrb[0].mxu0
  %2142 = vmatprep.mubr.f32.mxu0 0.0
  %2143 = vmatmul.mubr.f32.gmra.mrb[0].mxu0 %v2049
  %v2144 = vpop.f32.mrb[0].mxu0
  %v2145 = vadd.f32 0.0, %v2144
  %v2146 = vpop.f32.mrb[0].mxu0
  %2147 = vmatprep.mubr.f32.mxu0 0.0
  %2148 = vmatmul.mubr.f32.gmra.mrb[0].mxu0 %v2052
  %v2149 = vpop.f32.mrb[0].mxu0
  %v2150 = vadd.f32 0.0, %v2149
  %v2151 = vpop.f32.mrb[0].mxu0
  %2152 = vmatprep.mubr.f32.mxu0 0.0
  %2153 = vmatmul.mubr.f32.gmra.mrb[0].mxu0 %v2055
  %v2154 = vpop.f32.mrb[0].mxu0
  %v2155 = vadd.f32 0.0, %v2154
  %v2156 = vpop.f32.mrb[0].mxu0
  %2157 = vmatprep.mubr.f32.mxu0 0.0
  %2158 = vmatmul.mubr.f32.gmra.mrb[0].mxu0 %v2058
  %v2159 = vpop.f32.mrb[0].mxu0
  %v2160 = vadd.f32 0.0, %v2159
  %v2161 = vpop.f32.mrb[0].mxu0
  %2162 = vmatprep.mubr.f32.mxu0 0.0
  %2163 = vmatmul.mubr.f32.gmra.mrb[0].mxu0 %v2061
  %v2164 = vpop.f32.mrb[0].mxu0
  %v2165 = vadd.f32 0.0, %v2164
  %v2166 = vpop.f32.mrb[0].mxu0
  %2167 = vdwg.mxu0
  %v2168 = vadd.f32 %v1874, %v2130
  %v2169 = vadd.f32 %v1875, %v2135
  %v2170 = vadd.f32 %v1876, %v2140
  %v2171 = vadd.f32 %v1877, %v2145
  %v2172 = vadd.f32 %v1878, %v2150
  %v2173 = vadd.f32 %v1879, %v2155
  %v2174 = vadd.f32 %v1880, %v2160
  %v2175 = vadd.f32 %v1881, %v2165
  %v2176 = vld [vmem:[%s8] sm:$0x1]
  %v2178 = vlaneseq
  %v2179 = vshrl.u32 %v2178, 7
  %v2180 = vsub.s32 0, %v2179
  %v2181 = vrot.slane %v2176, %v2180
  %v2183 = vadd.f32 %v2168, %v2181
  %v2184 = vadd.f32 %v2169, %v2181
  %v2185 = vadd.f32 %v2170, %v2181
  %v2186 = vadd.f32 %v2171, %v2181
  %v2187 = vadd.f32 %v2172, %v2181
  %v2188 = vadd.f32 %v2173, %v2181
  %v2189 = vadd.f32 %v2174, %v2181
  %v2190 = vadd.f32 %v2175, %v2181
  %s2191 = scalar_lea.vmem %s3, 32
  %v2192 = vld [vmem:[%s2191] sm:$0xff]
  %v2193 = vld [vmem:[%s2191 + $0x8] sm:$0xff]
  %v2194 = vld [vmem:[%s2191 + $0x10] sm:$0xff]
  %v2195 = vld [vmem:[%s2191 + $0x18] sm:$0xff]
  %v2197 = vsel %vm290, %v2183, 0
  %v2200 = vsel %vm290, %v2184, 0
  %v2203 = vsel %vm290, %v2185, 0
  %v2206 = vsel %vm290, %v2186, 0
  %v2209 = vsel %vm290, %v2187, 0
  %v2212 = vsel %vm290, %v2188, 0
  %v2215 = vsel %vm290, %v2189, 0
  %v2218 = vsel %vm290, %v2190, 0
  %2220 = vmatprep.subr.mxu0 0.0
  %2221 = vmatpush1.msra.mxu0 %v2192
  %2222 = vmatprep.subr.mxu0 0.0
  %2223 = vmatpush1.msra.mxu0 %v2193
  %2224 = vmatprep.subr.mxu0 0.0
  %2225 = vmatpush1.msra.mxu0 %v2194
  %2226 = vmatprep.subr.mxu0 0.0
  %2227 = vmatpush1.msra.mxu0 %v2195
  %2228 = vmatprep.subr.mxu0 0.0
  %2229 = vmatpush1.msra.mxu0 0.0
  %2230 = vmatprep.subr.mxu0 0.0
  %2231 = vmatpush1.msra.mxu0 0.0
  %2232 = vmatprep.subr.mxu0 0.0
  %2233 = vmatpush1.msra.mxu0 0.0
  %2234 = vmatprep.subr.mxu0 0.0
  %2235 = vmatpush1.msra.mxu0 0.0
  %2236 = vmatprep.subr.mxu0 0.0
  %2237 = vmatpush1.msra.mxu0 0.0
  %2238 = vmatprep.subr.mxu0 0.0
  %2239 = vmatpush1.msra.mxu0 0.0
  %2240 = vmatprep.subr.mxu0 0.0
  %2241 = vmatpush1.msra.mxu0 0.0
  %2242 = vmatprep.subr.mxu0 0.0
  %2243 = vmatpush1.msra.mxu0 0.0
  %2244 = vmatprep.subr.mxu0 0.0
  %2245 = vmatpush1.msra.mxu0 0.0
  %2246 = vmatprep.subr.mxu0 0.0
  %2247 = vmatpush1.msra.mxu0 0.0
  %2248 = vmatprep.subr.mxu0 0.0
  %2249 = vmatpush1.msra.mxu0 0.0
  %2250 = vmatprep.subr.mxu0 0.0
  %2251 = vmatpush1.msra.mxu0 0.0
  %2252 = vmatprep.subr.mxu0 0.0
  %2253 = vmatpush1.msra.mxu0 0.0
  %2254 = vmatprep.subr.mxu0 0.0
  %2255 = vmatpush1.msra.mxu0 0.0
  %2256 = vmatprep.subr.mxu0 0.0
  %2257 = vmatpush1.msra.mxu0 0.0
  %2258 = vmatprep.subr.mxu0 0.0
  %2259 = vmatpush1.msra.mxu0 0.0
  %2260 = vmatprep.subr.mxu0 0.0
  %2261 = vmatpush1.msra.mxu0 0.0
  %2262 = vmatprep.subr.mxu0 0.0
  %2263 = vmatpush1.msra.mxu0 0.0
  %2264 = vmatprep.subr.mxu0 0.0
  %2265 = vmatpush1.msra.mxu0 0.0
  %2266 = vmatprep.subr.mxu0 0.0
  %2267 = vmatpush1.msra.mxu0 0.0
  %2268 = vmatprep.subr.mxu0 0.0
  %2269 = vmatpush1.msra.mxu0 0.0
  %2270 = vmatprep.subr.mxu0 0.0
  %2271 = vmatpush1.msra.mxu0 0.0
  %2272 = vmatprep.subr.mxu0 0.0
  %2273 = vmatpush1.msra.mxu0 0.0
  %2274 = vmatprep.subr.mxu0 0.0
  %2275 = vmatpush1.msra.mxu0 0.0
  %2276 = vmatprep.subr.mxu0 0.0
  %2277 = vmatpush1.msra.mxu0 0.0
  %2278 = vmatprep.subr.mxu0 0.0
  %2279 = vmatpush1.msra.mxu0 0.0
  %2280 = vmatprep.subr.mxu0 0.0
  %2281 = vmatpush1.msra.mxu0 0.0
  %2282 = vmatprep.subr.mxu0 0.0
  %2283 = vmatpush1.msra.mxu0 0.0
  %2284 = vmatprep.mubr.f32.mxu0 0.0
  %2285 = vmatmul.mubr.f32.gmra.mrb[0].mxu0 %v2197
  %v2286 = vpop.f32.mrb[0].mxu0
  %v2287 = vadd.f32 0.0, %v2286
  %v2288 = vpop.f32.mrb[0].mxu0
  %2289 = vmatprep.mubr.f32.mxu0 0.0
  %2290 = vmatmul.mubr.f32.gmra.mrb[0].mxu0 %v2200
  %v2291 = vpop.f32.mrb[0].mxu0
  %v2292 = vadd.f32 0.0, %v2291
  %v2293 = vpop.f32.mrb[0].mxu0
  %2294 = vmatprep.mubr.f32.mxu0 0.0
  %2295 = vmatmul.mubr.f32.gmra.mrb[0].mxu0 %v2203
  %v2296 = vpop.f32.mrb[0].mxu0
  %v2297 = vadd.f32 0.0, %v2296
  %v2298 = vpop.f32.mrb[0].mxu0
  %2299 = vmatprep.mubr.f32.mxu0 0.0
  %2300 = vmatmul.mubr.f32.gmra.mrb[0].mxu0 %v2206
  %v2301 = vpop.f32.mrb[0].mxu0
  %v2302 = vadd.f32 0.0, %v2301
  %v2303 = vpop.f32.mrb[0].mxu0
  %2304 = vmatprep.mubr.f32.mxu0 0.0
  %2305 = vmatmul.mubr.f32.gmra.mrb[0].mxu0 %v2209
  %v2306 = vpop.f32.mrb[0].mxu0
  %v2307 = vadd.f32 0.0, %v2306
  %v2308 = vpop.f32.mrb[0].mxu0
  %2309 = vmatprep.mubr.f32.mxu0 0.0
  %2310 = vmatmul.mubr.f32.gmra.mrb[0].mxu0 %v2212
  %v2311 = vpop.f32.mrb[0].mxu0
  %v2312 = vadd.f32 0.0, %v2311
  %v2313 = vpop.f32.mrb[0].mxu0
  %2314 = vmatprep.mubr.f32.mxu0 0.0
  %2315 = vmatmul.mubr.f32.gmra.mrb[0].mxu0 %v2215
  %v2316 = vpop.f32.mrb[0].mxu0
  %v2317 = vadd.f32 0.0, %v2316
  %v2318 = vpop.f32.mrb[0].mxu0
  %2319 = vmatprep.mubr.f32.mxu0 0.0
  %2320 = vmatmul.mubr.f32.gmra.mrb[0].mxu0 %v2218
  %v2321 = vpop.f32.mrb[0].mxu0
  %v2322 = vadd.f32 0.0, %v2321
  %v2323 = vpop.f32.mrb[0].mxu0
  %2324 = vdwg.mxu0
  %2326 = vrot.lane.b32.xlu0 %v2287, 96
  %v2327 = vpop.permute.xlu0 %2326
  %v2328 = vsel %vm290, %v2287, 0
  %v2330 = vsel %vm290, %v2327, 0
  %2332 = vmatprep.subr.mxu0 0.0
  %2333 = vmatpush1.xpose.msra.mxu0 %v2330
  %2334 = vmatprep.subr.mxu0 0.0
  %2335 = vmatpush1.xpose.msra.mxu0 0.0
  %2336 = vmatprep.subr.mxu0 0.0
  %2337 = vmatpush1.xpose.msra.mxu0 0.0
  %2338 = vmatprep.subr.mxu0 0.0
  %2339 = vmatpush1.xpose.msra.mxu0 0.0
  %2340 = vmatprep.subr.mxu0 0.0
  %2341 = vmatpush1.xpose.msra.mxu0 0.0
  %2342 = vmatprep.subr.mxu0 0.0
  %2343 = vmatpush1.xpose.msra.mxu0 0.0
  %2344 = vmatprep.subr.mxu0 0.0
  %2345 = vmatpush1.xpose.msra.mxu0 0.0
  %2346 = vmatprep.subr.mxu0 0.0
  %2347 = vmatpush1.xpose.msra.mxu0 0.0
  %2348 = vmatprep.subr.mxu0 0.0
  %2349 = vmatpush1.xpose.msra.mxu0 0.0
  %2350 = vmatprep.subr.mxu0 0.0
  %2351 = vmatpush1.xpose.msra.mxu0 0.0
  %2352 = vmatprep.subr.mxu0 0.0
  %2353 = vmatpush1.xpose.msra.mxu0 0.0
  %2354 = vmatprep.subr.mxu0 0.0
  %2355 = vmatpush1.xpose.msra.mxu0 0.0
  %2356 = vmatprep.subr.mxu0 0.0
  %2357 = vmatpush1.xpose.msra.mxu0 0.0
  %2358 = vmatprep.subr.mxu0 0.0
  %2359 = vmatpush1.xpose.msra.mxu0 0.0
  %2360 = vmatprep.subr.mxu0 0.0
  %2361 = vmatpush1.xpose.msra.mxu0 0.0
  %2362 = vmatprep.subr.mxu0 0.0
  %2363 = vmatpush1.xpose.msra.mxu0 0.0
  %2364 = vmatprep.subr.mxu0 0.0
  %2365 = vmatpush1.xpose.msra.mxu0 0.0
  %2366 = vmatprep.subr.mxu0 0.0
  %2367 = vmatpush1.xpose.msra.mxu0 0.0
  %2368 = vmatprep.subr.mxu0 0.0
  %2369 = vmatpush1.xpose.msra.mxu0 0.0
  %2370 = vmatprep.subr.mxu0 0.0
  %2371 = vmatpush1.xpose.msra.mxu0 0.0
  %2372 = vmatprep.subr.mxu0 0.0
  %2373 = vmatpush1.xpose.msra.mxu0 0.0
  %2374 = vmatprep.subr.mxu0 0.0
  %2375 = vmatpush1.xpose.msra.mxu0 0.0
  %2376 = vmatprep.subr.mxu0 0.0
  %2377 = vmatpush1.xpose.msra.mxu0 0.0
  %2378 = vmatprep.subr.mxu0 0.0
  %2379 = vmatpush1.xpose.msra.mxu0 0.0
  %2380 = vmatprep.subr.mxu0 0.0
  %2381 = vmatpush1.xpose.msra.mxu0 0.0
  %2382 = vmatprep.subr.mxu0 0.0
  %2383 = vmatpush1.xpose.msra.mxu0 0.0
  %2384 = vmatprep.subr.mxu0 0.0
  %2385 = vmatpush1.xpose.msra.mxu0 0.0
  %2386 = vmatprep.subr.mxu0 0.0
  %2387 = vmatpush1.xpose.msra.mxu0 0.0
  %2388 = vmatprep.subr.mxu0 0.0
  %2389 = vmatpush1.xpose.msra.mxu0 0.0
  %2390 = vmatprep.subr.mxu0 0.0
  %2391 = vmatpush1.xpose.msra.mxu0 0.0
  %2392 = vmatprep.subr.mxu0 0.0
  %2393 = vmatpush1.xpose.msra.mxu0 0.0
  %2394 = vmatprep.subr.mxu0 0.0
  %2395 = vmatpush1.xpose.msra.mxu0 0.0
  %2396 = vmatprep.mubr.f32.mxu0 0.0
  %2397 = vmatmul.mubr.f32.gmra.mrb[0].mxu0 %v2328
  %v2398 = vpop.f32.mrb[0].mxu0
  %v2399 = vadd.f32 0.0, %v2398
  %v2400 = vpop.f32.mrb[0].mxu0
  %2401 = vdwg.mxu0
  %2403 = vrot.lane.b32.xlu0 %v2292, 96
  %v2404 = vpop.permute.xlu0 %2403
  %v2405 = vsel %vm290, %v2292, 0
  %v2407 = vsel %vm290, %v2404, 0
  %2409 = vmatprep.subr.mxu0 0.0
  %2410 = vmatpush1.xpose.msra.mxu0 %v2407
  %2411 = vmatprep.subr.mxu0 0.0
  %2412 = vmatpush1.xpose.msra.mxu0 0.0
  %2413 = vmatprep.subr.mxu0 0.0
  %2414 = vmatpush1.xpose.msra.mxu0 0.0
  %2415 = vmatprep.subr.mxu0 0.0
  %2416 = vmatpush1.xpose.msra.mxu0 0.0
  %2417 = vmatprep.subr.mxu0 0.0
  %2418 = vmatpush1.xpose.msra.mxu0 0.0
  %2419 = vmatprep.subr.mxu0 0.0
  %2420 = vmatpush1.xpose.msra.mxu0 0.0
  %2421 = vmatprep.subr.mxu0 0.0
  %2422 = vmatpush1.xpose.msra.mxu0 0.0
  %2423 = vmatprep.subr.mxu0 0.0
  %2424 = vmatpush1.xpose.msra.mxu0 0.0
  %2425 = vmatprep.subr.mxu0 0.0
  %2426 = vmatpush1.xpose.msra.mxu0 0.0
  %2427 = vmatprep.subr.mxu0 0.0
  %2428 = vmatpush1.xpose.msra.mxu0 0.0
  %2429 = vmatprep.subr.mxu0 0.0
  %2430 = vmatpush1.xpose.msra.mxu0 0.0
  %2431 = vmatprep.subr.mxu0 0.0
  %2432 = vmatpush1.xpose.msra.mxu0 0.0
  %2433 = vmatprep.subr.mxu0 0.0
  %2434 = vmatpush1.xpose.msra.mxu0 0.0
  %2435 = vmatprep.subr.mxu0 0.0
  %2436 = vmatpush1.xpose.msra.mxu0 0.0
  %2437 = vmatprep.subr.mxu0 0.0
  %2438 = vmatpush1.xpose.msra.mxu0 0.0
  %2439 = vmatprep.subr.mxu0 0.0
  %2440 = vmatpush1.xpose.msra.mxu0 0.0
  %2441 = vmatprep.subr.mxu0 0.0
  %2442 = vmatpush1.xpose.msra.mxu0 0.0
  %2443 = vmatprep.subr.mxu0 0.0
  %2444 = vmatpush1.xpose.msra.mxu0 0.0
  %2445 = vmatprep.subr.mxu0 0.0
  %2446 = vmatpush1.xpose.msra.mxu0 0.0
  %2447 = vmatprep.subr.mxu0 0.0
  %2448 = vmatpush1.xpose.msra.mxu0 0.0
  %2449 = vmatprep.subr.mxu0 0.0
  %2450 = vmatpush1.xpose.msra.mxu0 0.0
  %2451 = vmatprep.subr.mxu0 0.0
  %2452 = vmatpush1.xpose.msra.mxu0 0.0
  %2453 = vmatprep.subr.mxu0 0.0
  %2454 = vmatpush1.xpose.msra.mxu0 0.0
  %2455 = vmatprep.subr.mxu0 0.0
  %2456 = vmatpush1.xpose.msra.mxu0 0.0
  %2457 = vmatprep.subr.mxu0 0.0
  %2458 = vmatpush1.xpose.msra.mxu0 0.0
  %2459 = vmatprep.subr.mxu0 0.0
  %2460 = vmatpush1.xpose.msra.mxu0 0.0
  %2461 = vmatprep.subr.mxu0 0.0
  %2462 = vmatpush1.xpose.msra.mxu0 0.0
  %2463 = vmatprep.subr.mxu0 0.0
  %2464 = vmatpush1.xpose.msra.mxu0 0.0
  %2465 = vmatprep.subr.mxu0 0.0
  %2466 = vmatpush1.xpose.msra.mxu0 0.0
  %2467 = vmatprep.subr.mxu0 0.0
  %2468 = vmatpush1.xpose.msra.mxu0 0.0
  %2469 = vmatprep.subr.mxu0 0.0
  %2470 = vmatpush1.xpose.msra.mxu0 0.0
  %2471 = vmatprep.subr.mxu0 0.0
  %2472 = vmatpush1.xpose.msra.mxu0 0.0
  %2473 = vmatprep.mubr.f32.mxu0 0.0
  %2474 = vmatmul.mubr.f32.gmra.mrb[0].mxu0 %v2405
  %v2475 = vpop.f32.mrb[0].mxu0
  %v2476 = vadd.f32 0.0, %v2475
  %v2477 = vpop.f32.mrb[0].mxu0
  %2478 = vdwg.mxu0
  %2480 = vrot.lane.b32.xlu0 %v2297, 96
  %v2481 = vpop.permute.xlu0 %2480
  %v2482 = vsel %vm290, %v2297, 0
  %v2484 = vsel %vm290, %v2481, 0
  %2486 = vmatprep.subr.mxu0 0.0
  %2487 = vmatpush1.xpose.msra.mxu0 %v2484
  %2488 = vmatprep.subr.mxu0 0.0
  %2489 = vmatpush1.xpose.msra.mxu0 0.0
  %2490 = vmatprep.subr.mxu0 0.0
  %2491 = vmatpush1.xpose.msra.mxu0 0.0
  %2492 = vmatprep.subr.mxu0 0.0
  %2493 = vmatpush1.xpose.msra.mxu0 0.0
  %2494 = vmatprep.subr.mxu0 0.0
  %2495 = vmatpush1.xpose.msra.mxu0 0.0
  %2496 = vmatprep.subr.mxu0 0.0
  %2497 = vmatpush1.xpose.msra.mxu0 0.0
  %2498 = vmatprep.subr.mxu0 0.0
  %2499 = vmatpush1.xpose.msra.mxu0 0.0
  %2500 = vmatprep.subr.mxu0 0.0
  %2501 = vmatpush1.xpose.msra.mxu0 0.0
  %2502 = vmatprep.subr.mxu0 0.0
  %2503 = vmatpush1.xpose.msra.mxu0 0.0
  %2504 = vmatprep.subr.mxu0 0.0
  %2505 = vmatpush1.xpose.msra.mxu0 0.0
  %2506 = vmatprep.subr.mxu0 0.0
  %2507 = vmatpush1.xpose.msra.mxu0 0.0
  %2508 = vmatprep.subr.mxu0 0.0
  %2509 = vmatpush1.xpose.msra.mxu0 0.0
  %2510 = vmatprep.subr.mxu0 0.0
  %2511 = vmatpush1.xpose.msra.mxu0 0.0
  %2512 = vmatprep.subr.mxu0 0.0
  %2513 = vmatpush1.xpose.msra.mxu0 0.0
  %2514 = vmatprep.subr.mxu0 0.0
  %2515 = vmatpush1.xpose.msra.mxu0 0.0
  %2516 = vmatprep.subr.mxu0 0.0
  %2517 = vmatpush1.xpose.msra.mxu0 0.0
  %2518 = vmatprep.subr.mxu0 0.0
  %2519 = vmatpush1.xpose.msra.mxu0 0.0
  %2520 = vmatprep.subr.mxu0 0.0
  %2521 = vmatpush1.xpose.msra.mxu0 0.0
  %2522 = vmatprep.subr.mxu0 0.0
  %2523 = vmatpush1.xpose.msra.mxu0 0.0
  %2524 = vmatprep.subr.mxu0 0.0
  %2525 = vmatpush1.xpose.msra.mxu0 0.0
  %2526 = vmatprep.subr.mxu0 0.0
  %2527 = vmatpush1.xpose.msra.mxu0 0.0
  %2528 = vmatprep.subr.mxu0 0.0
  %2529 = vmatpush1.xpose.msra.mxu0 0.0
  %2530 = vmatprep.subr.mxu0 0.0
  %2531 = vmatpush1.xpose.msra.mxu0 0.0
  %2532 = vmatprep.subr.mxu0 0.0
  %2533 = vmatpush1.xpose.msra.mxu0 0.0
  %2534 = vmatprep.subr.mxu0 0.0
  %2535 = vmatpush1.xpose.msra.mxu0 0.0
  %2536 = vmatprep.subr.mxu0 0.0
  %2537 = vmatpush1.xpose.msra.mxu0 0.0
  %2538 = vmatprep.subr.mxu0 0.0
  %2539 = vmatpush1.xpose.msra.mxu0 0.0
  %2540 = vmatprep.subr.mxu0 0.0
  %2541 = vmatpush1.xpose.msra.mxu0 0.0
  %2542 = vmatprep.subr.mxu0 0.0
  %2543 = vmatpush1.xpose.msra.mxu0 0.0
  %2544 = vmatprep.subr.mxu0 0.0
  %2545 = vmatpush1.xpose.msra.mxu0 0.0
  %2546 = vmatprep.subr.mxu0 0.0
  %2547 = vmatpush1.xpose.msra.mxu0 0.0
  %2548 = vmatprep.subr.mxu0 0.0
  %2549 = vmatpush1.xpose.msra.mxu0 0.0
  %2550 = vmatprep.mubr.f32.mxu0 0.0
  %2551 = vmatmul.mubr.f32.gmra.mrb[0].mxu0 %v2482
  %v2552 = vpop.f32.mrb[0].mxu0
  %v2553 = vadd.f32 0.0, %v2552
  %v2554 = vpop.f32.mrb[0].mxu0
  %2555 = vdwg.mxu0
  %2557 = vrot.lane.b32.xlu0 %v2302, 96
  %v2558 = vpop.permute.xlu0 %2557
  %v2559 = vsel %vm290, %v2302, 0
  %v2561 = vsel %vm290, %v2558, 0
  %2563 = vmatprep.subr.mxu0 0.0
  %2564 = vmatpush1.xpose.msra.mxu0 %v2561
  %2565 = vmatprep.subr.mxu0 0.0
  %2566 = vmatpush1.xpose.msra.mxu0 0.0
  %2567 = vmatprep.subr.mxu0 0.0
  %2568 = vmatpush1.xpose.msra.mxu0 0.0
  %2569 = vmatprep.subr.mxu0 0.0
  %2570 = vmatpush1.xpose.msra.mxu0 0.0
  %2571 = vmatprep.subr.mxu0 0.0
  %2572 = vmatpush1.xpose.msra.mxu0 0.0
  %2573 = vmatprep.subr.mxu0 0.0
  %2574 = vmatpush1.xpose.msra.mxu0 0.0
  %2575 = vmatprep.subr.mxu0 0.0
  %2576 = vmatpush1.xpose.msra.mxu0 0.0
  %2577 = vmatprep.subr.mxu0 0.0
  %2578 = vmatpush1.xpose.msra.mxu0 0.0
  %2579 = vmatprep.subr.mxu0 0.0
  %2580 = vmatpush1.xpose.msra.mxu0 0.0
  %2581 = vmatprep.subr.mxu0 0.0
  %2582 = vmatpush1.xpose.msra.mxu0 0.0
  %2583 = vmatprep.subr.mxu0 0.0
  %2584 = vmatpush1.xpose.msra.mxu0 0.0
  %2585 = vmatprep.subr.mxu0 0.0
  %2586 = vmatpush1.xpose.msra.mxu0 0.0
  %2587 = vmatprep.subr.mxu0 0.0
  %2588 = vmatpush1.xpose.msra.mxu0 0.0
  %2589 = vmatprep.subr.mxu0 0.0
  %2590 = vmatpush1.xpose.msra.mxu0 0.0
  %2591 = vmatprep.subr.mxu0 0.0
  %2592 = vmatpush1.xpose.msra.mxu0 0.0
  %2593 = vmatprep.subr.mxu0 0.0
  %2594 = vmatpush1.xpose.msra.mxu0 0.0
  %2595 = vmatprep.subr.mxu0 0.0
  %2596 = vmatpush1.xpose.msra.mxu0 0.0
  %2597 = vmatprep.subr.mxu0 0.0
  %2598 = vmatpush1.xpose.msra.mxu0 0.0
  %2599 = vmatprep.subr.mxu0 0.0
  %2600 = vmatpush1.xpose.msra.mxu0 0.0
  %2601 = vmatprep.subr.mxu0 0.0
  %2602 = vmatpush1.xpose.msra.mxu0 0.0
  %2603 = vmatprep.subr.mxu0 0.0
  %2604 = vmatpush1.xpose.msra.mxu0 0.0
  %2605 = vmatprep.subr.mxu0 0.0
  %2606 = vmatpush1.xpose.msra.mxu0 0.0
  %2607 = vmatprep.subr.mxu0 0.0
  %2608 = vmatpush1.xpose.msra.mxu0 0.0
  %2609 = vmatprep.subr.mxu0 0.0
  %2610 = vmatpush1.xpose.msra.mxu0 0.0
  %2611 = vmatprep.subr.mxu0 0.0
  %2612 = vmatpush1.xpose.msra.mxu0 0.0
  %2613 = vmatprep.subr.mxu0 0.0
  %2614 = vmatpush1.xpose.msra.mxu0 0.0
  %2615 = vmatprep.subr.mxu0 0.0
  %2616 = vmatpush1.xpose.msra.mxu0 0.0
  %2617 = vmatprep.subr.mxu0 0.0
  %2618 = vmatpush1.xpose.msra.mxu0 0.0
  %2619 = vmatprep.subr.mxu0 0.0
  %2620 = vmatpush1.xpose.msra.mxu0 0.0
  %2621 = vmatprep.subr.mxu0 0.0
  %2622 = vmatpush1.xpose.msra.mxu0 0.0
  %2623 = vmatprep.subr.mxu0 0.0
  %2624 = vmatpush1.xpose.msra.mxu0 0.0
  %2625 = vmatprep.subr.mxu0 0.0
  %2626 = vmatpush1.xpose.msra.mxu0 0.0
  %2627 = vmatprep.mubr.f32.mxu0 0.0
  %2628 = vmatmul.mubr.f32.gmra.mrb[0].mxu0 %v2559
  %v2629 = vpop.f32.mrb[0].mxu0
  %v2630 = vadd.f32 0.0, %v2629
  %v2631 = vpop.f32.mrb[0].mxu0
  %2632 = vdwg.mxu0
  %2634 = vrot.lane.b32.xlu0 %v2307, 96
  %v2635 = vpop.permute.xlu0 %2634
  %v2636 = vsel %vm290, %v2307, 0
  %v2638 = vsel %vm290, %v2635, 0
  %2640 = vmatprep.subr.mxu0 0.0
  %2641 = vmatpush1.xpose.msra.mxu0 %v2638
  %2642 = vmatprep.subr.mxu0 0.0
  %2643 = vmatpush1.xpose.msra.mxu0 0.0
  %2644 = vmatprep.subr.mxu0 0.0
  %2645 = vmatpush1.xpose.msra.mxu0 0.0
  %2646 = vmatprep.subr.mxu0 0.0
  %2647 = vmatpush1.xpose.msra.mxu0 0.0
  %2648 = vmatprep.subr.mxu0 0.0
  %2649 = vmatpush1.xpose.msra.mxu0 0.0
  %2650 = vmatprep.subr.mxu0 0.0
  %2651 = vmatpush1.xpose.msra.mxu0 0.0
  %2652 = vmatprep.subr.mxu0 0.0
  %2653 = vmatpush1.xpose.msra.mxu0 0.0
  %2654 = vmatprep.subr.mxu0 0.0
  %2655 = vmatpush1.xpose.msra.mxu0 0.0
  %2656 = vmatprep.subr.mxu0 0.0
  %2657 = vmatpush1.xpose.msra.mxu0 0.0
  %2658 = vmatprep.subr.mxu0 0.0
  %2659 = vmatpush1.xpose.msra.mxu0 0.0
  %2660 = vmatprep.subr.mxu0 0.0
  %2661 = vmatpush1.xpose.msra.mxu0 0.0
  %2662 = vmatprep.subr.mxu0 0.0
  %2663 = vmatpush1.xpose.msra.mxu0 0.0
  %2664 = vmatprep.subr.mxu0 0.0
  %2665 = vmatpush1.xpose.msra.mxu0 0.0
  %2666 = vmatprep.subr.mxu0 0.0
  %2667 = vmatpush1.xpose.msra.mxu0 0.0
  %2668 = vmatprep.subr.mxu0 0.0
  %2669 = vmatpush1.xpose.msra.mxu0 0.0
  %2670 = vmatprep.subr.mxu0 0.0
  %2671 = vmatpush1.xpose.msra.mxu0 0.0
  %2672 = vmatprep.subr.mxu0 0.0
  %2673 = vmatpush1.xpose.msra.mxu0 0.0
  %2674 = vmatprep.subr.mxu0 0.0
  %2675 = vmatpush1.xpose.msra.mxu0 0.0
  %2676 = vmatprep.subr.mxu0 0.0
  %2677 = vmatpush1.xpose.msra.mxu0 0.0
  %2678 = vmatprep.subr.mxu0 0.0
  %2679 = vmatpush1.xpose.msra.mxu0 0.0
  %2680 = vmatprep.subr.mxu0 0.0
  %2681 = vmatpush1.xpose.msra.mxu0 0.0
  %2682 = vmatprep.subr.mxu0 0.0
  %2683 = vmatpush1.xpose.msra.mxu0 0.0
  %2684 = vmatprep.subr.mxu0 0.0
  %2685 = vmatpush1.xpose.msra.mxu0 0.0
  %2686 = vmatprep.subr.mxu0 0.0
  %2687 = vmatpush1.xpose.msra.mxu0 0.0
  %2688 = vmatprep.subr.mxu0 0.0
  %2689 = vmatpush1.xpose.msra.mxu0 0.0
  %2690 = vmatprep.subr.mxu0 0.0
  %2691 = vmatpush1.xpose.msra.mxu0 0.0
  %2692 = vmatprep.subr.mxu0 0.0
  %2693 = vmatpush1.xpose.msra.mxu0 0.0
  %2694 = vmatprep.subr.mxu0 0.0
  %2695 = vmatpush1.xpose.msra.mxu0 0.0
  %2696 = vmatprep.subr.mxu0 0.0
  %2697 = vmatpush1.xpose.msra.mxu0 0.0
  %2698 = vmatprep.subr.mxu0 0.0
  %2699 = vmatpush1.xpose.msra.mxu0 0.0
  %2700 = vmatprep.subr.mxu0 0.0
  %2701 = vmatpush1.xpose.msra.mxu0 0.0
  %2702 = vmatprep.subr.mxu0 0.0
  %2703 = vmatpush1.xpose.msra.mxu0 0.0
  %2704 = vmatprep.mubr.f32.mxu0 0.0
  %2705 = vmatmul.mubr.f32.gmra.mrb[0].mxu0 %v2636
  %v2706 = vpop.f32.mrb[0].mxu0
  %v2707 = vadd.f32 0.0, %v2706
  %v2708 = vpop.f32.mrb[0].mxu0
  %2709 = vdwg.mxu0
  %2711 = vrot.lane.b32.xlu0 %v2312, 96
  %v2712 = vpop.permute.xlu0 %2711
  %v2713 = vsel %vm290, %v2312, 0
  %v2715 = vsel %vm290, %v2712, 0
  %2717 = vmatprep.subr.mxu0 0.0
  %2718 = vmatpush1.xpose.msra.mxu0 %v2715
  %2719 = vmatprep.subr.mxu0 0.0
  %2720 = vmatpush1.xpose.msra.mxu0 0.0
  %2721 = vmatprep.subr.mxu0 0.0
  %2722 = vmatpush1.xpose.msra.mxu0 0.0
  %2723 = vmatprep.subr.mxu0 0.0
  %2724 = vmatpush1.xpose.msra.mxu0 0.0
  %2725 = vmatprep.subr.mxu0 0.0
  %2726 = vmatpush1.xpose.msra.mxu0 0.0
  %2727 = vmatprep.subr.mxu0 0.0
  %2728 = vmatpush1.xpose.msra.mxu0 0.0
  %2729 = vmatprep.subr.mxu0 0.0
  %2730 = vmatpush1.xpose.msra.mxu0 0.0
  %2731 = vmatprep.subr.mxu0 0.0
  %2732 = vmatpush1.xpose.msra.mxu0 0.0
  %2733 = vmatprep.subr.mxu0 0.0
  %2734 = vmatpush1.xpose.msra.mxu0 0.0
  %2735 = vmatprep.subr.mxu0 0.0
  %2736 = vmatpush1.xpose.msra.mxu0 0.0
  %2737 = vmatprep.subr.mxu0 0.0
  %2738 = vmatpush1.xpose.msra.mxu0 0.0
  %2739 = vmatprep.subr.mxu0 0.0
  %2740 = vmatpush1.xpose.msra.mxu0 0.0
  %2741 = vmatprep.subr.mxu0 0.0
  %2742 = vmatpush1.xpose.msra.mxu0 0.0
  %2743 = vmatprep.subr.mxu0 0.0
  %2744 = vmatpush1.xpose.msra.mxu0 0.0
  %2745 = vmatprep.subr.mxu0 0.0
  %2746 = vmatpush1.xpose.msra.mxu0 0.0
  %2747 = vmatprep.subr.mxu0 0.0
  %2748 = vmatpush1.xpose.msra.mxu0 0.0
  %2749 = vmatprep.subr.mxu0 0.0
  %2750 = vmatpush1.xpose.msra.mxu0 0.0
  %2751 = vmatprep.subr.mxu0 0.0
  %2752 = vmatpush1.xpose.msra.mxu0 0.0
  %2753 = vmatprep.subr.mxu0 0.0
  %2754 = vmatpush1.xpose.msra.mxu0 0.0
  %2755 = vmatprep.subr.mxu0 0.0
  %2756 = vmatpush1.xpose.msra.mxu0 0.0
  %2757 = vmatprep.subr.mxu0 0.0
  %2758 = vmatpush1.xpose.msra.mxu0 0.0
  %2759 = vmatprep.subr.mxu0 0.0
  %2760 = vmatpush1.xpose.msra.mxu0 0.0
  %2761 = vmatprep.subr.mxu0 0.0
  %2762 = vmatpush1.xpose.msra.mxu0 0.0
  %2763 = vmatprep.subr.mxu0 0.0
  %2764 = vmatpush1.xpose.msra.mxu0 0.0
  %2765 = vmatprep.subr.mxu0 0.0
  %2766 = vmatpush1.xpose.msra.mxu0 0.0
  %2767 = vmatprep.subr.mxu0 0.0
  %2768 = vmatpush1.xpose.msra.mxu0 0.0
  %2769 = vmatprep.subr.mxu0 0.0
  %2770 = vmatpush1.xpose.msra.mxu0 0.0
  %2771 = vmatprep.subr.mxu0 0.0
  %2772 = vmatpush1.xpose.msra.mxu0 0.0
  %2773 = vmatprep.subr.mxu0 0.0
  %2774 = vmatpush1.xpose.msra.mxu0 0.0
  %2775 = vmatprep.subr.mxu0 0.0
  %2776 = vmatpush1.xpose.msra.mxu0 0.0
  %2777 = vmatprep.subr.mxu0 0.0
  %2778 = vmatpush1.xpose.msra.mxu0 0.0
  %2779 = vmatprep.subr.mxu0 0.0
  %2780 = vmatpush1.xpose.msra.mxu0 0.0
  %2781 = vmatprep.mubr.f32.mxu0 0.0
  %2782 = vmatmul.mubr.f32.gmra.mrb[0].mxu0 %v2713
  %v2783 = vpop.f32.mrb[0].mxu0
  %v2784 = vadd.f32 0.0, %v2783
  %v2785 = vpop.f32.mrb[0].mxu0
  %2786 = vdwg.mxu0
  %2788 = vrot.lane.b32.xlu0 %v2317, 96
  %v2789 = vpop.permute.xlu0 %2788
  %v2790 = vsel %vm290, %v2317, 0
  %v2792 = vsel %vm290, %v2789, 0
  %2794 = vmatprep.subr.mxu0 0.0
  %2795 = vmatpush1.xpose.msra.mxu0 %v2792
  %2796 = vmatprep.subr.mxu0 0.0
  %2797 = vmatpush1.xpose.msra.mxu0 0.0
  %2798 = vmatprep.subr.mxu0 0.0
  %2799 = vmatpush1.xpose.msra.mxu0 0.0
  %2800 = vmatprep.subr.mxu0 0.0
  %2801 = vmatpush1.xpose.msra.mxu0 0.0
  %2802 = vmatprep.subr.mxu0 0.0
  %2803 = vmatpush1.xpose.msra.mxu0 0.0
  %2804 = vmatprep.subr.mxu0 0.0
  %2805 = vmatpush1.xpose.msra.mxu0 0.0
  %2806 = vmatprep.subr.mxu0 0.0
  %2807 = vmatpush1.xpose.msra.mxu0 0.0
  %2808 = vmatprep.subr.mxu0 0.0
  %2809 = vmatpush1.xpose.msra.mxu0 0.0
  %2810 = vmatprep.subr.mxu0 0.0
  %2811 = vmatpush1.xpose.msra.mxu0 0.0
  %2812 = vmatprep.subr.mxu0 0.0
  %2813 = vmatpush1.xpose.msra.mxu0 0.0
  %2814 = vmatprep.subr.mxu0 0.0
  %2815 = vmatpush1.xpose.msra.mxu0 0.0
  %2816 = vmatprep.subr.mxu0 0.0
  %2817 = vmatpush1.xpose.msra.mxu0 0.0
  %2818 = vmatprep.subr.mxu0 0.0
  %2819 = vmatpush1.xpose.msra.mxu0 0.0
  %2820 = vmatprep.subr.mxu0 0.0
  %2821 = vmatpush1.xpose.msra.mxu0 0.0
  %2822 = vmatprep.subr.mxu0 0.0
  %2823 = vmatpush1.xpose.msra.mxu0 0.0
  %2824 = vmatprep.subr.mxu0 0.0
  %2825 = vmatpush1.xpose.msra.mxu0 0.0
  %2826 = vmatprep.subr.mxu0 0.0
  %2827 = vmatpush1.xpose.msra.mxu0 0.0
  %2828 = vmatprep.subr.mxu0 0.0
  %2829 = vmatpush1.xpose.msra.mxu0 0.0
  %2830 = vmatprep.subr.mxu0 0.0
  %2831 = vmatpush1.xpose.msra.mxu0 0.0
  %2832 = vmatprep.subr.mxu0 0.0
  %2833 = vmatpush1.xpose.msra.mxu0 0.0
  %2834 = vmatprep.subr.mxu0 0.0
  %2835 = vmatpush1.xpose.msra.mxu0 0.0
  %2836 = vmatprep.subr.mxu0 0.0
  %2837 = vmatpush1.xpose.msra.mxu0 0.0
  %2838 = vmatprep.subr.mxu0 0.0
  %2839 = vmatpush1.xpose.msra.mxu0 0.0
  %2840 = vmatprep.subr.mxu0 0.0
  %2841 = vmatpush1.xpose.msra.mxu0 0.0
  %2842 = vmatprep.subr.mxu0 0.0
  %2843 = vmatpush1.xpose.msra.mxu0 0.0
  %2844 = vmatprep.subr.mxu0 0.0
  %2845 = vmatpush1.xpose.msra.mxu0 0.0
  %2846 = vmatprep.subr.mxu0 0.0
  %2847 = vmatpush1.xpose.msra.mxu0 0.0
  %2848 = vmatprep.subr.mxu0 0.0
  %2849 = vmatpush1.xpose.msra.mxu0 0.0
  %2850 = vmatprep.subr.mxu0 0.0
  %2851 = vmatpush1.xpose.msra.mxu0 0.0
  %2852 = vmatprep.subr.mxu0 0.0
  %2853 = vmatpush1.xpose.msra.mxu0 0.0
  %2854 = vmatprep.subr.mxu0 0.0
  %2855 = vmatpush1.xpose.msra.mxu0 0.0
  %2856 = vmatprep.subr.mxu0 0.0
  %2857 = vmatpush1.xpose.msra.mxu0 0.0
  %2858 = vmatprep.mubr.f32.mxu0 0.0
  %2859 = vmatmul.mubr.f32.gmra.mrb[0].mxu0 %v2790
  %v2860 = vpop.f32.mrb[0].mxu0
  %v2861 = vadd.f32 0.0, %v2860
  %v2862 = vpop.f32.mrb[0].mxu0
  %2863 = vdwg.mxu0
  %2865 = vrot.lane.b32.xlu0 %v2322, 96
  %v2866 = vpop.permute.xlu0 %2865
  %v2867 = vsel %vm290, %v2322, 0
  %v2869 = vsel %vm290, %v2866, 0
  %2871 = vmatprep.subr.mxu0 0.0
  %2872 = vmatpush1.xpose.msra.mxu0 %v2869
  %2873 = vmatprep.subr.mxu0 0.0
  %2874 = vmatpush1.xpose.msra.mxu0 0.0
  %2875 = vmatprep.subr.mxu0 0.0
  %2876 = vmatpush1.xpose.msra.mxu0 0.0
  %2877 = vmatprep.subr.mxu0 0.0
  %2878 = vmatpush1.xpose.msra.mxu0 0.0
  %2879 = vmatprep.subr.mxu0 0.0
  %2880 = vmatpush1.xpose.msra.mxu0 0.0
  %2881 = vmatprep.subr.mxu0 0.0
  %2882 = vmatpush1.xpose.msra.mxu0 0.0
  %2883 = vmatprep.subr.mxu0 0.0
  %2884 = vmatpush1.xpose.msra.mxu0 0.0
  %2885 = vmatprep.subr.mxu0 0.0
  %2886 = vmatpush1.xpose.msra.mxu0 0.0
  %2887 = vmatprep.subr.mxu0 0.0
  %2888 = vmatpush1.xpose.msra.mxu0 0.0
  %2889 = vmatprep.subr.mxu0 0.0
  %2890 = vmatpush1.xpose.msra.mxu0 0.0
  %2891 = vmatprep.subr.mxu0 0.0
  %2892 = vmatpush1.xpose.msra.mxu0 0.0
  %2893 = vmatprep.subr.mxu0 0.0
  %2894 = vmatpush1.xpose.msra.mxu0 0.0
  %2895 = vmatprep.subr.mxu0 0.0
  %2896 = vmatpush1.xpose.msra.mxu0 0.0
  %2897 = vmatprep.subr.mxu0 0.0
  %2898 = vmatpush1.xpose.msra.mxu0 0.0
  %2899 = vmatprep.subr.mxu0 0.0
  %2900 = vmatpush1.xpose.msra.mxu0 0.0
  %2901 = vmatprep.subr.mxu0 0.0
  %2902 = vmatpush1.xpose.msra.mxu0 0.0
  %2903 = vmatprep.subr.mxu0 0.0
  %2904 = vmatpush1.xpose.msra.mxu0 0.0
  %2905 = vmatprep.subr.mxu0 0.0
  %2906 = vmatpush1.xpose.msra.mxu0 0.0
  %2907 = vmatprep.subr.mxu0 0.0
  %2908 = vmatpush1.xpose.msra.mxu0 0.0
  %2909 = vmatprep.subr.mxu0 0.0
  %2910 = vmatpush1.xpose.msra.mxu0 0.0
  %2911 = vmatprep.subr.mxu0 0.0
  %2912 = vmatpush1.xpose.msra.mxu0 0.0
  %2913 = vmatprep.subr.mxu0 0.0
  %2914 = vmatpush1.xpose.msra.mxu0 0.0
  %2915 = vmatprep.subr.mxu0 0.0
  %2916 = vmatpush1.xpose.msra.mxu0 0.0
  %2917 = vmatprep.subr.mxu0 0.0
  %2918 = vmatpush1.xpose.msra.mxu0 0.0
  %2919 = vmatprep.subr.mxu0 0.0
  %2920 = vmatpush1.xpose.msra.mxu0 0.0
  %2921 = vmatprep.subr.mxu0 0.0
  %2922 = vmatpush1.xpose.msra.mxu0 0.0
  %2923 = vmatprep.subr.mxu0 0.0
  %2924 = vmatpush1.xpose.msra.mxu0 0.0
  %2925 = vmatprep.subr.mxu0 0.0
  %2926 = vmatpush1.xpose.msra.mxu0 0.0
  %2927 = vmatprep.subr.mxu0 0.0
  %2928 = vmatpush1.xpose.msra.mxu0 0.0
  %2929 = vmatprep.subr.mxu0 0.0
  %2930 = vmatpush1.xpose.msra.mxu0 0.0
  %2931 = vmatprep.subr.mxu0 0.0
  %2932 = vmatpush1.xpose.msra.mxu0 0.0
  %2933 = vmatprep.subr.mxu0 0.0
  %2934 = vmatpush1.xpose.msra.mxu0 0.0
  %2935 = vmatprep.mubr.f32.mxu0 0.0
  %2936 = vmatmul.mubr.f32.gmra.mrb[0].mxu0 %v2867
  %v2937 = vpop.f32.mrb[0].mxu0
  %v2938 = vadd.f32 0.0, %v2937
  %v2939 = vpop.f32.mrb[0].mxu0
  %2940 = vdwg.mxu0
  %v2941 = vmul.f32 %v2399, 0.17677669
  %v2942 = vmul.f32 %v2476, 0.17677669
  %v2943 = vmul.f32 %v2553, 0.17677669
  %v2944 = vmul.f32 %v2630, 0.17677669
  %v2945 = vmul.f32 %v2707, 0.17677669
  %v2946 = vmul.f32 %v2784, 0.17677669
  %v2947 = vmul.f32 %v2861, 0.17677669
  %v2948 = vmul.f32 %v2938, 0.17677669
  %v2949 = vsel %vm1044, %v2941, -inf
  %2950 = vmax.xlane.f32.xlu0 %v2949
  %v2951 = vpop.xlane.xlu0 %2950
  %v2952 = vsel %vm1044, %v2942, -inf
  %2953 = vmax.xlane.f32.xlu0 %v2952
  %v2954 = vpop.xlane.xlu0 %2953
  %v2955 = vsel %vm1044, %v2943, -inf
  %2956 = vmax.xlane.f32.xlu0 %v2955
  %v2957 = vpop.xlane.xlu0 %2956
  %v2958 = vsel %vm1044, %v2944, -inf
  %2959 = vmax.xlane.f32.xlu0 %v2958
  %v2960 = vpop.xlane.xlu0 %2959
  %v2961 = vsel %vm1044, %v2945, -inf
  %2962 = vmax.xlane.f32.xlu0 %v2961
  %v2963 = vpop.xlane.xlu0 %2962
  %v2964 = vsel %vm1044, %v2946, -inf
  %2965 = vmax.xlane.f32.xlu0 %v2964
  %v2966 = vpop.xlane.xlu0 %2965
  %v2967 = vsel %vm1044, %v2947, -inf
  %2968 = vmax.xlane.f32.xlu0 %v2967
  %v2969 = vpop.xlane.xlu0 %2968
  %v2970 = vsel %vm1044, %v2948, -inf
  %2971 = vmax.xlane.f32.xlu0 %v2970
  %v2972 = vpop.xlane.xlu0 %2971
  %v2973 = vsub.f32 %v2941, %v2951
  %v2974 = vsub.f32 %v2942, %v2954
  %v2975 = vsub.f32 %v2943, %v2957
  %v2976 = vsub.f32 %v2944, %v2960
  %v2977 = vsub.f32 %v2945, %v2963
  %v2978 = vsub.f32 %v2946, %v2966
  %v2979 = vsub.f32 %v2947, %v2969
  %v2980 = vsub.f32 %v2948, %v2972
  %v2981 = vmul.f32 %v2973, 1.442695
  %v2982 = vpow.pop %v2981
  %v2983 = vmul.f32 %v2974, 1.442695
  %v2984 = vpow.pop %v2983
  %v2985 = vmul.f32 %v2975, 1.442695
  %v2986 = vpow.pop %v2985
  %v2987 = vmul.f32 %v2976, 1.442695
  %v2988 = vpow.pop %v2987
  %v2989 = vmul.f32 %v2977, 1.442695
  %v2990 = vpow.pop %v2989
  %v2991 = vmul.f32 %v2978, 1.442695
  %v2992 = vpow.pop %v2991
  %v2993 = vmul.f32 %v2979, 1.442695
  %v2994 = vpow.pop %v2993
  %v2995 = vmul.f32 %v2980, 1.442695
  %v2996 = vpow.pop %v2995
  %v2997 = vsel %vm1044, %v2982, 0.0
  %2998 = vadd.xlane.f32.xlu0 %v2997
  %v2999 = vpop.xlane.xlu0 %2998
  %v3000 = vsel %vm1044, %v2984, 0.0
  %3001 = vadd.xlane.f32.xlu0 %v3000
  %v3002 = vpop.xlane.xlu0 %3001
  %v3003 = vsel %vm1044, %v2986, 0.0
  %3004 = vadd.xlane.f32.xlu0 %v3003
  %v3005 = vpop.xlane.xlu0 %3004
  %v3006 = vsel %vm1044, %v2988, 0.0
  %3007 = vadd.xlane.f32.xlu0 %v3006
  %v3008 = vpop.xlane.xlu0 %3007
  %v3009 = vsel %vm1044, %v2990, 0.0
  %3010 = vadd.xlane.f32.xlu0 %v3009
  %v3011 = vpop.xlane.xlu0 %3010
  %v3012 = vsel %vm1044, %v2992, 0.0
  %3013 = vadd.xlane.f32.xlu0 %v3012
  %v3014 = vpop.xlane.xlu0 %3013
  %v3015 = vsel %vm1044, %v2994, 0.0
  %3016 = vadd.xlane.f32.xlu0 %v3015
  %v3017 = vpop.xlane.xlu0 %3016
  %v3018 = vsel %vm1044, %v2996, 0.0
  %3019 = vadd.xlane.f32.xlu0 %v3018
  %v3020 = vpop.xlane.xlu0 %3019
  %v3021 = vrcp.pop %v2999
  %v3022 = vrcp.pop %v3002
  %v3023 = vrcp.pop %v3005
  %v3024 = vrcp.pop %v3008
  %v3025 = vrcp.pop %v3011
  %v3026 = vrcp.pop %v3014
  %v3027 = vrcp.pop %v3017
  %v3028 = vrcp.pop %v3020
  %v3029 = vmul.f32 %v2982, %v3021
  %v3030 = vmul.f32 %v2984, %v3022
  %v3031 = vmul.f32 %v2986, %v3023
  %v3032 = vmul.f32 %v2988, %v3024
  %v3033 = vmul.f32 %v2990, %v3025
  %v3034 = vmul.f32 %v2992, %v3026
  %v3035 = vmul.f32 %v2994, %v3027
  %v3036 = vmul.f32 %v2996, %v3028
  %3037 = vrot.lane.b32.xlu0 %v2287, 64
  %v3038 = vpop.permute.xlu0 %3037
  %v3041 = vsel %vm1044, %v3029, 0
  %3043 = vmatprep.subr.mxu0 0.0
  %3044 = vmatpush1.msra.mxu0 %v3038
  %3045 = vmatprep.subr.mxu0 0.0
  %3046 = vmatpush1.msra.mxu0 0.0
  %3047 = vmatprep.subr.mxu0 0.0
  %3048 = vmatpush1.msra.mxu0 0.0
  %3049 = vmatprep.subr.mxu0 0.0
  %3050 = vmatpush1.msra.mxu0 0.0
  %3051 = vmatprep.subr.mxu0 0.0
  %3052 = vmatpush1.msra.mxu0 0.0
  %3053 = vmatprep.subr.mxu0 0.0
  %3054 = vmatpush1.msra.mxu0 0.0
  %3055 = vmatprep.subr.mxu0 0.0
  %3056 = vmatpush1.msra.mxu0 0.0
  %3057 = vmatprep.subr.mxu0 0.0
  %3058 = vmatpush1.msra.mxu0 0.0
  %3059 = vmatprep.subr.mxu0 0.0
  %3060 = vmatpush1.msra.mxu0 0.0
  %3061 = vmatprep.subr.mxu0 0.0
  %3062 = vmatpush1.msra.mxu0 0.0
  %3063 = vmatprep.subr.mxu0 0.0
  %3064 = vmatpush1.msra.mxu0 0.0
  %3065 = vmatprep.subr.mxu0 0.0
  %3066 = vmatpush1.msra.mxu0 0.0
  %3067 = vmatprep.subr.mxu0 0.0
  %3068 = vmatpush1.msra.mxu0 0.0
  %3069 = vmatprep.subr.mxu0 0.0
  %3070 = vmatpush1.msra.mxu0 0.0
  %3071 = vmatprep.subr.mxu0 0.0
  %3072 = vmatpush1.msra.mxu0 0.0
  %3073 = vmatprep.subr.mxu0 0.0
  %3074 = vmatpush1.msra.mxu0 0.0
  %3075 = vmatprep.subr.mxu0 0.0
  %3076 = vmatpush1.msra.mxu0 0.0
  %3077 = vmatprep.subr.mxu0 0.0
  %3078 = vmatpush1.msra.mxu0 0.0
  %3079 = vmatprep.subr.mxu0 0.0
  %3080 = vmatpush1.msra.mxu0 0.0
  %3081 = vmatprep.subr.mxu0 0.0
  %3082 = vmatpush1.msra.mxu0 0.0
  %3083 = vmatprep.subr.mxu0 0.0
  %3084 = vmatpush1.msra.mxu0 0.0
  %3085 = vmatprep.subr.mxu0 0.0
  %3086 = vmatpush1.msra.mxu0 0.0
  %3087 = vmatprep.subr.mxu0 0.0
  %3088 = vmatpush1.msra.mxu0 0.0
  %3089 = vmatprep.subr.mxu0 0.0
  %3090 = vmatpush1.msra.mxu0 0.0
  %3091 = vmatprep.subr.mxu0 0.0
  %3092 = vmatpush1.msra.mxu0 0.0
  %3093 = vmatprep.subr.mxu0 0.0
  %3094 = vmatpush1.msra.mxu0 0.0
  %3095 = vmatprep.subr.mxu0 0.0
  %3096 = vmatpush1.msra.mxu0 0.0
  %3097 = vmatprep.subr.mxu0 0.0
  %3098 = vmatpush1.msra.mxu0 0.0
  %3099 = vmatprep.subr.mxu0 0.0
  %3100 = vmatpush1.msra.mxu0 0.0
  %3101 = vmatprep.subr.mxu0 0.0
  %3102 = vmatpush1.msra.mxu0 0.0
  %3103 = vmatprep.subr.mxu0 0.0
  %3104 = vmatpush1.msra.mxu0 0.0
  %3105 = vmatprep.subr.mxu0 0.0
  %3106 = vmatpush1.msra.mxu0 0.0
  %3107 = vmatprep.mubr.f32.mxu0 0.0
  %3108 = vmatmul.mubr.f32.gmra.mrb[0].mxu0 %v3041
  %v3109 = vpop.f32.mrb[0].mxu0
  %v3110 = vadd.f32 0.0, %v3109
  %v3111 = vpop.f32.mrb[0].mxu0
  %3112 = vdwg.mxu0
  %3113 = vrot.lane.b32.xlu0 %v2292, 64
  %v3114 = vpop.permute.xlu0 %3113
  %v3117 = vsel %vm1044, %v3030, 0
  %3119 = vmatprep.subr.mxu0 0.0
  %3120 = vmatpush1.msra.mxu0 %v3114
  %3121 = vmatprep.subr.mxu0 0.0
  %3122 = vmatpush1.msra.mxu0 0.0
  %3123 = vmatprep.subr.mxu0 0.0
  %3124 = vmatpush1.msra.mxu0 0.0
  %3125 = vmatprep.subr.mxu0 0.0
  %3126 = vmatpush1.msra.mxu0 0.0
  %3127 = vmatprep.subr.mxu0 0.0
  %3128 = vmatpush1.msra.mxu0 0.0
  %3129 = vmatprep.subr.mxu0 0.0
  %3130 = vmatpush1.msra.mxu0 0.0
  %3131 = vmatprep.subr.mxu0 0.0
  %3132 = vmatpush1.msra.mxu0 0.0
  %3133 = vmatprep.subr.mxu0 0.0
  %3134 = vmatpush1.msra.mxu0 0.0
  %3135 = vmatprep.subr.mxu0 0.0
  %3136 = vmatpush1.msra.mxu0 0.0
  %3137 = vmatprep.subr.mxu0 0.0
  %3138 = vmatpush1.msra.mxu0 0.0
  %3139 = vmatprep.subr.mxu0 0.0
  %3140 = vmatpush1.msra.mxu0 0.0
  %3141 = vmatprep.subr.mxu0 0.0
  %3142 = vmatpush1.msra.mxu0 0.0
  %3143 = vmatprep.subr.mxu0 0.0
  %3144 = vmatpush1.msra.mxu0 0.0
  %3145 = vmatprep.subr.mxu0 0.0
  %3146 = vmatpush1.msra.mxu0 0.0
  %3147 = vmatprep.subr.mxu0 0.0
  %3148 = vmatpush1.msra.mxu0 0.0
  %3149 = vmatprep.subr.mxu0 0.0
  %3150 = vmatpush1.msra.mxu0 0.0
  %3151 = vmatprep.subr.mxu0 0.0
  %3152 = vmatpush1.msra.mxu0 0.0
  %3153 = vmatprep.subr.mxu0 0.0
  %3154 = vmatpush1.msra.mxu0 0.0
  %3155 = vmatprep.subr.mxu0 0.0
  %3156 = vmatpush1.msra.mxu0 0.0
  %3157 = vmatprep.subr.mxu0 0.0
  %3158 = vmatpush1.msra.mxu0 0.0
  %3159 = vmatprep.subr.mxu0 0.0
  %3160 = vmatpush1.msra.mxu0 0.0
  %3161 = vmatprep.subr.mxu0 0.0
  %3162 = vmatpush1.msra.mxu0 0.0
  %3163 = vmatprep.subr.mxu0 0.0
  %3164 = vmatpush1.msra.mxu0 0.0
  %3165 = vmatprep.subr.mxu0 0.0
  %3166 = vmatpush1.msra.mxu0 0.0
  %3167 = vmatprep.subr.mxu0 0.0
  %3168 = vmatpush1.msra.mxu0 0.0
  %3169 = vmatprep.subr.mxu0 0.0
  %3170 = vmatpush1.msra.mxu0 0.0
  %3171 = vmatprep.subr.mxu0 0.0
  %3172 = vmatpush1.msra.mxu0 0.0
  %3173 = vmatprep.subr.mxu0 0.0
  %3174 = vmatpush1.msra.mxu0 0.0
  %3175 = vmatprep.subr.mxu0 0.0
  %3176 = vmatpush1.msra.mxu0 0.0
  %3177 = vmatprep.subr.mxu0 0.0
  %3178 = vmatpush1.msra.mxu0 0.0
  %3179 = vmatprep.subr.mxu0 0.0
  %3180 = vmatpush1.msra.mxu0 0.0
  %3181 = vmatprep.subr.mxu0 0.0
  %3182 = vmatpush1.msra.mxu0 0.0
  %3183 = vmatprep.mubr.f32.mxu0 0.0
  %3184 = vmatmul.mubr.f32.gmra.mrb[0].mxu0 %v3117
  %v3185 = vpop.f32.mrb[0].mxu0
  %v3186 = vadd.f32 0.0, %v3185
  %v3187 = vpop.f32.mrb[0].mxu0
  %3188 = vdwg.mxu0
  %3189 = vrot.lane.b32.xlu0 %v2297, 64
  %v3190 = vpop.permute.xlu0 %3189
  %v3193 = vsel %vm1044, %v3031, 0
  %3195 = vmatprep.subr.mxu0 0.0
  %3196 = vmatpush1.msra.mxu0 %v3190
  %3197 = vmatprep.subr.mxu0 0.0
  %3198 = vmatpush1.msra.mxu0 0.0
  %3199 = vmatprep.subr.mxu0 0.0
  %3200 = vmatpush1.msra.mxu0 0.0
  %3201 = vmatprep.subr.mxu0 0.0
  %3202 = vmatpush1.msra.mxu0 0.0
  %3203 = vmatprep.subr.mxu0 0.0
  %3204 = vmatpush1.msra.mxu0 0.0
  %3205 = vmatprep.subr.mxu0 0.0
  %3206 = vmatpush1.msra.mxu0 0.0
  %3207 = vmatprep.subr.mxu0 0.0
  %3208 = vmatpush1.msra.mxu0 0.0
  %3209 = vmatprep.subr.mxu0 0.0
  %3210 = vmatpush1.msra.mxu0 0.0
  %3211 = vmatprep.subr.mxu0 0.0
  %3212 = vmatpush1.msra.mxu0 0.0
  %3213 = vmatprep.subr.mxu0 0.0
  %3214 = vmatpush1.msra.mxu0 0.0
  %3215 = vmatprep.subr.mxu0 0.0
  %3216 = vmatpush1.msra.mxu0 0.0
  %3217 = vmatprep.subr.mxu0 0.0
  %3218 = vmatpush1.msra.mxu0 0.0
  %3219 = vmatprep.subr.mxu0 0.0
  %3220 = vmatpush1.msra.mxu0 0.0
  %3221 = vmatprep.subr.mxu0 0.0
  %3222 = vmatpush1.msra.mxu0 0.0
  %3223 = vmatprep.subr.mxu0 0.0
  %3224 = vmatpush1.msra.mxu0 0.0
  %3225 = vmatprep.subr.mxu0 0.0
  %3226 = vmatpush1.msra.mxu0 0.0
  %3227 = vmatprep.subr.mxu0 0.0
  %3228 = vmatpush1.msra.mxu0 0.0
  %3229 = vmatprep.subr.mxu0 0.0
  %3230 = vmatpush1.msra.mxu0 0.0
  %3231 = vmatprep.subr.mxu0 0.0
  %3232 = vmatpush1.msra.mxu0 0.0
  %3233 = vmatprep.subr.mxu0 0.0
  %3234 = vmatpush1.msra.mxu0 0.0
  %3235 = vmatprep.subr.mxu0 0.0
  %3236 = vmatpush1.msra.mxu0 0.0
  %3237 = vmatprep.subr.mxu0 0.0
  %3238 = vmatpush1.msra.mxu0 0.0
  %3239 = vmatprep.subr.mxu0 0.0
  %3240 = vmatpush1.msra.mxu0 0.0
  %3241 = vmatprep.subr.mxu0 0.0
  %3242 = vmatpush1.msra.mxu0 0.0
  %3243 = vmatprep.subr.mxu0 0.0
  %3244 = vmatpush1.msra.mxu0 0.0
  %3245 = vmatprep.subr.mxu0 0.0
  %3246 = vmatpush1.msra.mxu0 0.0
  %3247 = vmatprep.subr.mxu0 0.0
  %3248 = vmatpush1.msra.mxu0 0.0
  %3249 = vmatprep.subr.mxu0 0.0
  %3250 = vmatpush1.msra.mxu0 0.0
  %3251 = vmatprep.subr.mxu0 0.0
  %3252 = vmatpush1.msra.mxu0 0.0
  %3253 = vmatprep.subr.mxu0 0.0
  %3254 = vmatpush1.msra.mxu0 0.0
  %3255 = vmatprep.subr.mxu0 0.0
  %3256 = vmatpush1.msra.mxu0 0.0
  %3257 = vmatprep.subr.mxu0 0.0
  %3258 = vmatpush1.msra.mxu0 0.0
  %3259 = vmatprep.mubr.f32.mxu0 0.0
  %3260 = vmatmul.mubr.f32.gmra.mrb[0].mxu0 %v3193
  %v3261 = vpop.f32.mrb[0].mxu0
  %v3262 = vadd.f32 0.0, %v3261
  %v3263 = vpop.f32.mrb[0].mxu0
  %3264 = vdwg.mxu0
  %3265 = vrot.lane.b32.xlu0 %v2302, 64
  %v3266 = vpop.permute.xlu0 %3265
  %v3269 = vsel %vm1044, %v3032, 0
  %3271 = vmatprep.subr.mxu0 0.0
  %3272 = vmatpush1.msra.mxu0 %v3266
  %3273 = vmatprep.subr.mxu0 0.0
  %3274 = vmatpush1.msra.mxu0 0.0
  %3275 = vmatprep.subr.mxu0 0.0
  %3276 = vmatpush1.msra.mxu0 0.0
  %3277 = vmatprep.subr.mxu0 0.0
  %3278 = vmatpush1.msra.mxu0 0.0
  %3279 = vmatprep.subr.mxu0 0.0
  %3280 = vmatpush1.msra.mxu0 0.0
  %3281 = vmatprep.subr.mxu0 0.0
  %3282 = vmatpush1.msra.mxu0 0.0
  %3283 = vmatprep.subr.mxu0 0.0
  %3284 = vmatpush1.msra.mxu0 0.0
  %3285 = vmatprep.subr.mxu0 0.0
  %3286 = vmatpush1.msra.mxu0 0.0
  %3287 = vmatprep.subr.mxu0 0.0
  %3288 = vmatpush1.msra.mxu0 0.0
  %3289 = vmatprep.subr.mxu0 0.0
  %3290 = vmatpush1.msra.mxu0 0.0
  %3291 = vmatprep.subr.mxu0 0.0
  %3292 = vmatpush1.msra.mxu0 0.0
  %3293 = vmatprep.subr.mxu0 0.0
  %3294 = vmatpush1.msra.mxu0 0.0
  %3295 = vmatprep.subr.mxu0 0.0
  %3296 = vmatpush1.msra.mxu0 0.0
  %3297 = vmatprep.subr.mxu0 0.0
  %3298 = vmatpush1.msra.mxu0 0.0
  %3299 = vmatprep.subr.mxu0 0.0
  %3300 = vmatpush1.msra.mxu0 0.0
  %3301 = vmatprep.subr.mxu0 0.0
  %3302 = vmatpush1.msra.mxu0 0.0
  %3303 = vmatprep.subr.mxu0 0.0
  %3304 = vmatpush1.msra.mxu0 0.0
  %3305 = vmatprep.subr.mxu0 0.0
  %3306 = vmatpush1.msra.mxu0 0.0
  %3307 = vmatprep.subr.mxu0 0.0
  %3308 = vmatpush1.msra.mxu0 0.0
  %3309 = vmatprep.subr.mxu0 0.0
  %3310 = vmatpush1.msra.mxu0 0.0
  %3311 = vmatprep.subr.mxu0 0.0
  %3312 = vmatpush1.msra.mxu0 0.0
  %3313 = vmatprep.subr.mxu0 0.0
  %3314 = vmatpush1.msra.mxu0 0.0
  %3315 = vmatprep.subr.mxu0 0.0
  %3316 = vmatpush1.msra.mxu0 0.0
  %3317 = vmatprep.subr.mxu0 0.0
  %3318 = vmatpush1.msra.mxu0 0.0
  %3319 = vmatprep.subr.mxu0 0.0
  %3320 = vmatpush1.msra.mxu0 0.0
  %3321 = vmatprep.subr.mxu0 0.0
  %3322 = vmatpush1.msra.mxu0 0.0
  %3323 = vmatprep.subr.mxu0 0.0
  %3324 = vmatpush1.msra.mxu0 0.0
  %3325 = vmatprep.subr.mxu0 0.0
  %3326 = vmatpush1.msra.mxu0 0.0
  %3327 = vmatprep.subr.mxu0 0.0
  %3328 = vmatpush1.msra.mxu0 0.0
  %3329 = vmatprep.subr.mxu0 0.0
  %3330 = vmatpush1.msra.mxu0 0.0
  %3331 = vmatprep.subr.mxu0 0.0
  %3332 = vmatpush1.msra.mxu0 0.0
  %3333 = vmatprep.subr.mxu0 0.0
  %3334 = vmatpush1.msra.mxu0 0.0
  %3335 = vmatprep.mubr.f32.mxu0 0.0
  %3336 = vmatmul.mubr.f32.gmra.mrb[0].mxu0 %v3269
  %v3337 = vpop.f32.mrb[0].mxu0
  %v3338 = vadd.f32 0.0, %v3337
  %v3339 = vpop.f32.mrb[0].mxu0
  %3340 = vdwg.mxu0
  %3341 = vrot.lane.b32.xlu0 %v2307, 64
  %v3342 = vpop.permute.xlu0 %3341
  %v3345 = vsel %vm1044, %v3033, 0
  %3347 = vmatprep.subr.mxu0 0.0
  %3348 = vmatpush1.msra.mxu0 %v3342
  %3349 = vmatprep.subr.mxu0 0.0
  %3350 = vmatpush1.msra.mxu0 0.0
  %3351 = vmatprep.subr.mxu0 0.0
  %3352 = vmatpush1.msra.mxu0 0.0
  %3353 = vmatprep.subr.mxu0 0.0
  %3354 = vmatpush1.msra.mxu0 0.0
  %3355 = vmatprep.subr.mxu0 0.0
  %3356 = vmatpush1.msra.mxu0 0.0
  %3357 = vmatprep.subr.mxu0 0.0
  %3358 = vmatpush1.msra.mxu0 0.0
  %3359 = vmatprep.subr.mxu0 0.0
  %3360 = vmatpush1.msra.mxu0 0.0
  %3361 = vmatprep.subr.mxu0 0.0
  %3362 = vmatpush1.msra.mxu0 0.0
  %3363 = vmatprep.subr.mxu0 0.0
  %3364 = vmatpush1.msra.mxu0 0.0
  %3365 = vmatprep.subr.mxu0 0.0
  %3366 = vmatpush1.msra.mxu0 0.0
  %3367 = vmatprep.subr.mxu0 0.0
  %3368 = vmatpush1.msra.mxu0 0.0
  %3369 = vmatprep.subr.mxu0 0.0
  %3370 = vmatpush1.msra.mxu0 0.0
  %3371 = vmatprep.subr.mxu0 0.0
  %3372 = vmatpush1.msra.mxu0 0.0
  %3373 = vmatprep.subr.mxu0 0.0
  %3374 = vmatpush1.msra.mxu0 0.0
  %3375 = vmatprep.subr.mxu0 0.0
  %3376 = vmatpush1.msra.mxu0 0.0
  %3377 = vmatprep.subr.mxu0 0.0
  %3378 = vmatpush1.msra.mxu0 0.0
  %3379 = vmatprep.subr.mxu0 0.0
  %3380 = vmatpush1.msra.mxu0 0.0
  %3381 = vmatprep.subr.mxu0 0.0
  %3382 = vmatpush1.msra.mxu0 0.0
  %3383 = vmatprep.subr.mxu0 0.0
  %3384 = vmatpush1.msra.mxu0 0.0
  %3385 = vmatprep.subr.mxu0 0.0
  %3386 = vmatpush1.msra.mxu0 0.0
  %3387 = vmatprep.subr.mxu0 0.0
  %3388 = vmatpush1.msra.mxu0 0.0
  %3389 = vmatprep.subr.mxu0 0.0
  %3390 = vmatpush1.msra.mxu0 0.0
  %3391 = vmatprep.subr.mxu0 0.0
  %3392 = vmatpush1.msra.mxu0 0.0
  %3393 = vmatprep.subr.mxu0 0.0
  %3394 = vmatpush1.msra.mxu0 0.0
  %3395 = vmatprep.subr.mxu0 0.0
  %3396 = vmatpush1.msra.mxu0 0.0
  %3397 = vmatprep.subr.mxu0 0.0
  %3398 = vmatpush1.msra.mxu0 0.0
  %3399 = vmatprep.subr.mxu0 0.0
  %3400 = vmatpush1.msra.mxu0 0.0
  %3401 = vmatprep.subr.mxu0 0.0
  %3402 = vmatpush1.msra.mxu0 0.0
  %3403 = vmatprep.subr.mxu0 0.0
  %3404 = vmatpush1.msra.mxu0 0.0
  %3405 = vmatprep.subr.mxu0 0.0
  %3406 = vmatpush1.msra.mxu0 0.0
  %3407 = vmatprep.subr.mxu0 0.0
  %3408 = vmatpush1.msra.mxu0 0.0
  %3409 = vmatprep.subr.mxu0 0.0
  %3410 = vmatpush1.msra.mxu0 0.0
  %3411 = vmatprep.mubr.f32.mxu0 0.0
  %3412 = vmatmul.mubr.f32.gmra.mrb[0].mxu0 %v3345
  %v3413 = vpop.f32.mrb[0].mxu0
  %v3414 = vadd.f32 0.0, %v3413
  %v3415 = vpop.f32.mrb[0].mxu0
  %3416 = vdwg.mxu0
  %3417 = vrot.lane.b32.xlu0 %v2312, 64
  %v3418 = vpop.permute.xlu0 %3417
  %v3421 = vsel %vm1044, %v3034, 0
  %3423 = vmatprep.subr.mxu0 0.0
  %3424 = vmatpush1.msra.mxu0 %v3418
  %3425 = vmatprep.subr.mxu0 0.0
  %3426 = vmatpush1.msra.mxu0 0.0
  %3427 = vmatprep.subr.mxu0 0.0
  %3428 = vmatpush1.msra.mxu0 0.0
  %3429 = vmatprep.subr.mxu0 0.0
  %3430 = vmatpush1.msra.mxu0 0.0
  %3431 = vmatprep.subr.mxu0 0.0
  %3432 = vmatpush1.msra.mxu0 0.0
  %3433 = vmatprep.subr.mxu0 0.0
  %3434 = vmatpush1.msra.mxu0 0.0
  %3435 = vmatprep.subr.mxu0 0.0
  %3436 = vmatpush1.msra.mxu0 0.0
  %3437 = vmatprep.subr.mxu0 0.0
  %3438 = vmatpush1.msra.mxu0 0.0
  %3439 = vmatprep.subr.mxu0 0.0
  %3440 = vmatpush1.msra.mxu0 0.0
  %3441 = vmatprep.subr.mxu0 0.0
  %3442 = vmatpush1.msra.mxu0 0.0
  %3443 = vmatprep.subr.mxu0 0.0
  %3444 = vmatpush1.msra.mxu0 0.0
  %3445 = vmatprep.subr.mxu0 0.0
  %3446 = vmatpush1.msra.mxu0 0.0
  %3447 = vmatprep.subr.mxu0 0.0
  %3448 = vmatpush1.msra.mxu0 0.0
  %3449 = vmatprep.subr.mxu0 0.0
  %3450 = vmatpush1.msra.mxu0 0.0
  %3451 = vmatprep.subr.mxu0 0.0
  %3452 = vmatpush1.msra.mxu0 0.0
  %3453 = vmatprep.subr.mxu0 0.0
  %3454 = vmatpush1.msra.mxu0 0.0
  %3455 = vmatprep.subr.mxu0 0.0
  %3456 = vmatpush1.msra.mxu0 0.0
  %3457 = vmatprep.subr.mxu0 0.0
  %3458 = vmatpush1.msra.mxu0 0.0
  %3459 = vmatprep.subr.mxu0 0.0
  %3460 = vmatpush1.msra.mxu0 0.0
  %3461 = vmatprep.subr.mxu0 0.0
  %3462 = vmatpush1.msra.mxu0 0.0
  %3463 = vmatprep.subr.mxu0 0.0
  %3464 = vmatpush1.msra.mxu0 0.0
  %3465 = vmatprep.subr.mxu0 0.0
  %3466 = vmatpush1.msra.mxu0 0.0
  %3467 = vmatprep.subr.mxu0 0.0
  %3468 = vmatpush1.msra.mxu0 0.0
  %3469 = vmatprep.subr.mxu0 0.0
  %3470 = vmatpush1.msra.mxu0 0.0
  %3471 = vmatprep.subr.mxu0 0.0
  %3472 = vmatpush1.msra.mxu0 0.0
  %3473 = vmatprep.subr.mxu0 0.0
  %3474 = vmatpush1.msra.mxu0 0.0
  %3475 = vmatprep.subr.mxu0 0.0
  %3476 = vmatpush1.msra.mxu0 0.0
  %3477 = vmatprep.subr.mxu0 0.0
  %3478 = vmatpush1.msra.mxu0 0.0
  %3479 = vmatprep.subr.mxu0 0.0
  %3480 = vmatpush1.msra.mxu0 0.0
  %3481 = vmatprep.subr.mxu0 0.0
  %3482 = vmatpush1.msra.mxu0 0.0
  %3483 = vmatprep.subr.mxu0 0.0
  %3484 = vmatpush1.msra.mxu0 0.0
  %3485 = vmatprep.subr.mxu0 0.0
  %3486 = vmatpush1.msra.mxu0 0.0
  %3487 = vmatprep.mubr.f32.mxu0 0.0
  %3488 = vmatmul.mubr.f32.gmra.mrb[0].mxu0 %v3421
  %v3489 = vpop.f32.mrb[0].mxu0
  %v3490 = vadd.f32 0.0, %v3489
  %v3491 = vpop.f32.mrb[0].mxu0
  %3492 = vdwg.mxu0
  %3493 = vrot.lane.b32.xlu0 %v2317, 64
  %v3494 = vpop.permute.xlu0 %3493
  %v3497 = vsel %vm1044, %v3035, 0
  %3499 = vmatprep.subr.mxu0 0.0
  %3500 = vmatpush1.msra.mxu0 %v3494
  %3501 = vmatprep.subr.mxu0 0.0
  %3502 = vmatpush1.msra.mxu0 0.0
  %3503 = vmatprep.subr.mxu0 0.0
  %3504 = vmatpush1.msra.mxu0 0.0
  %3505 = vmatprep.subr.mxu0 0.0
  %3506 = vmatpush1.msra.mxu0 0.0
  %3507 = vmatprep.subr.mxu0 0.0
  %3508 = vmatpush1.msra.mxu0 0.0
  %3509 = vmatprep.subr.mxu0 0.0
  %3510 = vmatpush1.msra.mxu0 0.0
  %3511 = vmatprep.subr.mxu0 0.0
  %3512 = vmatpush1.msra.mxu0 0.0
  %3513 = vmatprep.subr.mxu0 0.0
  %3514 = vmatpush1.msra.mxu0 0.0
  %3515 = vmatprep.subr.mxu0 0.0
  %3516 = vmatpush1.msra.mxu0 0.0
  %3517 = vmatprep.subr.mxu0 0.0
  %3518 = vmatpush1.msra.mxu0 0.0
  %3519 = vmatprep.subr.mxu0 0.0
  %3520 = vmatpush1.msra.mxu0 0.0
  %3521 = vmatprep.subr.mxu0 0.0
  %3522 = vmatpush1.msra.mxu0 0.0
  %3523 = vmatprep.subr.mxu0 0.0
  %3524 = vmatpush1.msra.mxu0 0.0
  %3525 = vmatprep.subr.mxu0 0.0
  %3526 = vmatpush1.msra.mxu0 0.0
  %3527 = vmatprep.subr.mxu0 0.0
  %3528 = vmatpush1.msra.mxu0 0.0
  %3529 = vmatprep.subr.mxu0 0.0
  %3530 = vmatpush1.msra.mxu0 0.0
  %3531 = vmatprep.subr.mxu0 0.0
  %3532 = vmatpush1.msra.mxu0 0.0
  %3533 = vmatprep.subr.mxu0 0.0
  %3534 = vmatpush1.msra.mxu0 0.0
  %3535 = vmatprep.subr.mxu0 0.0
  %3536 = vmatpush1.msra.mxu0 0.0
  %3537 = vmatprep.subr.mxu0 0.0
  %3538 = vmatpush1.msra.mxu0 0.0
  %3539 = vmatprep.subr.mxu0 0.0
  %3540 = vmatpush1.msra.mxu0 0.0
  %3541 = vmatprep.subr.mxu0 0.0
  %3542 = vmatpush1.msra.mxu0 0.0
  %3543 = vmatprep.subr.mxu0 0.0
  %3544 = vmatpush1.msra.mxu0 0.0
  %3545 = vmatprep.subr.mxu0 0.0
  %3546 = vmatpush1.msra.mxu0 0.0
  %3547 = vmatprep.subr.mxu0 0.0
  %3548 = vmatpush1.msra.mxu0 0.0
  %3549 = vmatprep.subr.mxu0 0.0
  %3550 = vmatpush1.msra.mxu0 0.0
  %3551 = vmatprep.subr.mxu0 0.0
  %3552 = vmatpush1.msra.mxu0 0.0
  %3553 = vmatprep.subr.mxu0 0.0
  %3554 = vmatpush1.msra.mxu0 0.0
  %3555 = vmatprep.subr.mxu0 0.0
  %3556 = vmatpush1.msra.mxu0 0.0
  %3557 = vmatprep.subr.mxu0 0.0
  %3558 = vmatpush1.msra.mxu0 0.0
  %3559 = vmatprep.subr.mxu0 0.0
  %3560 = vmatpush1.msra.mxu0 0.0
  %3561 = vmatprep.subr.mxu0 0.0
  %3562 = vmatpush1.msra.mxu0 0.0
  %3563 = vmatprep.mubr.f32.mxu0 0.0
  %3564 = vmatmul.mubr.f32.gmra.mrb[0].mxu0 %v3497
  %v3565 = vpop.f32.mrb[0].mxu0
  %v3566 = vadd.f32 0.0, %v3565
  %v3567 = vpop.f32.mrb[0].mxu0
  %3568 = vdwg.mxu0
  %3569 = vrot.lane.b32.xlu0 %v2322, 64
  %v3570 = vpop.permute.xlu0 %3569
  %v3573 = vsel %vm1044, %v3036, 0
  %3575 = vmatprep.subr.mxu0 0.0
  %3576 = vmatpush1.msra.mxu0 %v3570
  %3577 = vmatprep.subr.mxu0 0.0
  %3578 = vmatpush1.msra.mxu0 0.0
  %3579 = vmatprep.subr.mxu0 0.0
  %3580 = vmatpush1.msra.mxu0 0.0
  %3581 = vmatprep.subr.mxu0 0.0
  %3582 = vmatpush1.msra.mxu0 0.0
  %3583 = vmatprep.subr.mxu0 0.0
  %3584 = vmatpush1.msra.mxu0 0.0
  %3585 = vmatprep.subr.mxu0 0.0
  %3586 = vmatpush1.msra.mxu0 0.0
  %3587 = vmatprep.subr.mxu0 0.0
  %3588 = vmatpush1.msra.mxu0 0.0
  %3589 = vmatprep.subr.mxu0 0.0
  %3590 = vmatpush1.msra.mxu0 0.0
  %3591 = vmatprep.subr.mxu0 0.0
  %3592 = vmatpush1.msra.mxu0 0.0
  %3593 = vmatprep.subr.mxu0 0.0
  %3594 = vmatpush1.msra.mxu0 0.0
  %3595 = vmatprep.subr.mxu0 0.0
  %3596 = vmatpush1.msra.mxu0 0.0
  %3597 = vmatprep.subr.mxu0 0.0
  %3598 = vmatpush1.msra.mxu0 0.0
  %3599 = vmatprep.subr.mxu0 0.0
  %3600 = vmatpush1.msra.mxu0 0.0
  %3601 = vmatprep.subr.mxu0 0.0
  %3602 = vmatpush1.msra.mxu0 0.0
  %3603 = vmatprep.subr.mxu0 0.0
  %3604 = vmatpush1.msra.mxu0 0.0
  %3605 = vmatprep.subr.mxu0 0.0
  %3606 = vmatpush1.msra.mxu0 0.0
  %3607 = vmatprep.subr.mxu0 0.0
  %3608 = vmatpush1.msra.mxu0 0.0
  %3609 = vmatprep.subr.mxu0 0.0
  %3610 = vmatpush1.msra.mxu0 0.0
  %3611 = vmatprep.subr.mxu0 0.0
  %3612 = vmatpush1.msra.mxu0 0.0
  %3613 = vmatprep.subr.mxu0 0.0
  %3614 = vmatpush1.msra.mxu0 0.0
  %3615 = vmatprep.subr.mxu0 0.0
  %3616 = vmatpush1.msra.mxu0 0.0
  %3617 = vmatprep.subr.mxu0 0.0
  %3618 = vmatpush1.msra.mxu0 0.0
  %3619 = vmatprep.subr.mxu0 0.0
  %3620 = vmatpush1.msra.mxu0 0.0
  %3621 = vmatprep.subr.mxu0 0.0
  %3622 = vmatpush1.msra.mxu0 0.0
  %3623 = vmatprep.subr.mxu0 0.0
  %3624 = vmatpush1.msra.mxu0 0.0
  %3625 = vmatprep.subr.mxu0 0.0
  %3626 = vmatpush1.msra.mxu0 0.0
  %3627 = vmatprep.subr.mxu0 0.0
  %3628 = vmatpush1.msra.mxu0 0.0
  %3629 = vmatprep.subr.mxu0 0.0
  %3630 = vmatpush1.msra.mxu0 0.0
  %3631 = vmatprep.subr.mxu0 0.0
  %3632 = vmatpush1.msra.mxu0 0.0
  %3633 = vmatprep.subr.mxu0 0.0
  %3634 = vmatpush1.msra.mxu0 0.0
  %3635 = vmatprep.subr.mxu0 0.0
  %3636 = vmatpush1.msra.mxu0 0.0
  %3637 = vmatprep.subr.mxu0 0.0
  %3638 = vmatpush1.msra.mxu0 0.0
  %3639 = vmatprep.mubr.f32.mxu0 0.0
  %3640 = vmatmul.mubr.f32.gmra.mrb[0].mxu0 %v3573
  %v3641 = vpop.f32.mrb[0].mxu0
  %v3642 = vadd.f32 0.0, %v3641
  %v3643 = vpop.f32.mrb[0].mxu0
  %3644 = vdwg.mxu0
  %s3645 = scalar_lea.vmem %s4, 32
  %v3646 = vld [vmem:[%s3645] sm:$0xff]
  %v3647 = vld [vmem:[%s3645 + $0x8] sm:$0xff]
  %v3648 = vld [vmem:[%s3645 + $0x10] sm:$0xff]
  %v3649 = vld [vmem:[%s3645 + $0x18] sm:$0xff]
  %v3651 = vsel %vm290, %v3110, 0
  %v3654 = vsel %vm290, %v3186, 0
  %v3657 = vsel %vm290, %v3262, 0
  %v3660 = vsel %vm290, %v3338, 0
  %v3663 = vsel %vm290, %v3414, 0
  %v3666 = vsel %vm290, %v3490, 0
  %v3669 = vsel %vm290, %v3566, 0
  %v3672 = vsel %vm290, %v3642, 0
  %3674 = vmatprep.subr.mxu0 0.0
  %3675 = vmatpush1.msra.mxu0 %v3646
  %3676 = vmatprep.subr.mxu0 0.0
  %3677 = vmatpush1.msra.mxu0 %v3647
  %3678 = vmatprep.subr.mxu0 0.0
  %3679 = vmatpush1.msra.mxu0 %v3648
  %3680 = vmatprep.subr.mxu0 0.0
  %3681 = vmatpush1.msra.mxu0 %v3649
  %3682 = vmatprep.subr.mxu0 0.0
  %3683 = vmatpush1.msra.mxu0 0.0
  %3684 = vmatprep.subr.mxu0 0.0
  %3685 = vmatpush1.msra.mxu0 0.0
  %3686 = vmatprep.subr.mxu0 0.0
  %3687 = vmatpush1.msra.mxu0 0.0
  %3688 = vmatprep.subr.mxu0 0.0
  %3689 = vmatpush1.msra.mxu0 0.0
  %3690 = vmatprep.subr.mxu0 0.0
  %3691 = vmatpush1.msra.mxu0 0.0
  %3692 = vmatprep.subr.mxu0 0.0
  %3693 = vmatpush1.msra.mxu0 0.0
  %3694 = vmatprep.subr.mxu0 0.0
  %3695 = vmatpush1.msra.mxu0 0.0
  %3696 = vmatprep.subr.mxu0 0.0
  %3697 = vmatpush1.msra.mxu0 0.0
  %3698 = vmatprep.subr.mxu0 0.0
  %3699 = vmatpush1.msra.mxu0 0.0
  %3700 = vmatprep.subr.mxu0 0.0
  %3701 = vmatpush1.msra.mxu0 0.0
  %3702 = vmatprep.subr.mxu0 0.0
  %3703 = vmatpush1.msra.mxu0 0.0
  %3704 = vmatprep.subr.mxu0 0.0
  %3705 = vmatpush1.msra.mxu0 0.0
  %3706 = vmatprep.subr.mxu0 0.0
  %3707 = vmatpush1.msra.mxu0 0.0
  %3708 = vmatprep.subr.mxu0 0.0
  %3709 = vmatpush1.msra.mxu0 0.0
  %3710 = vmatprep.subr.mxu0 0.0
  %3711 = vmatpush1.msra.mxu0 0.0
  %3712 = vmatprep.subr.mxu0 0.0
  %3713 = vmatpush1.msra.mxu0 0.0
  %3714 = vmatprep.subr.mxu0 0.0
  %3715 = vmatpush1.msra.mxu0 0.0
  %3716 = vmatprep.subr.mxu0 0.0
  %3717 = vmatpush1.msra.mxu0 0.0
  %3718 = vmatprep.subr.mxu0 0.0
  %3719 = vmatpush1.msra.mxu0 0.0
  %3720 = vmatprep.subr.mxu0 0.0
  %3721 = vmatpush1.msra.mxu0 0.0
  %3722 = vmatprep.subr.mxu0 0.0
  %3723 = vmatpush1.msra.mxu0 0.0
  %3724 = vmatprep.subr.mxu0 0.0
  %3725 = vmatpush1.msra.mxu0 0.0
  %3726 = vmatprep.subr.mxu0 0.0
  %3727 = vmatpush1.msra.mxu0 0.0
  %3728 = vmatprep.subr.mxu0 0.0
  %3729 = vmatpush1.msra.mxu0 0.0
  %3730 = vmatprep.subr.mxu0 0.0
  %3731 = vmatpush1.msra.mxu0 0.0
  %3732 = vmatprep.subr.mxu0 0.0
  %3733 = vmatpush1.msra.mxu0 0.0
  %3734 = vmatprep.subr.mxu0 0.0
  %3735 = vmatpush1.msra.mxu0 0.0
  %3736 = vmatprep.subr.mxu0 0.0
  %3737 = vmatpush1.msra.mxu0 0.0
  %3738 = vmatprep.mubr.f32.mxu0 0.0
  %3739 = vmatmul.mubr.f32.gmra.mrb[0].mxu0 %v3651
  %v3740 = vpop.f32.mrb[0].mxu0
  %v3741 = vadd.f32 0.0, %v3740
  %v3742 = vpop.f32.mrb[0].mxu0
  %3743 = vmatprep.mubr.f32.mxu0 0.0
  %3744 = vmatmul.mubr.f32.gmra.mrb[0].mxu0 %v3654
  %v3745 = vpop.f32.mrb[0].mxu0
  %v3746 = vadd.f32 0.0, %v3745
  %v3747 = vpop.f32.mrb[0].mxu0
  %3748 = vmatprep.mubr.f32.mxu0 0.0
  %3749 = vmatmul.mubr.f32.gmra.mrb[0].mxu0 %v3657
  %v3750 = vpop.f32.mrb[0].mxu0
  %v3751 = vadd.f32 0.0, %v3750
  %v3752 = vpop.f32.mrb[0].mxu0
  %3753 = vmatprep.mubr.f32.mxu0 0.0
  %3754 = vmatmul.mubr.f32.gmra.mrb[0].mxu0 %v3660
  %v3755 = vpop.f32.mrb[0].mxu0
  %v3756 = vadd.f32 0.0, %v3755
  %v3757 = vpop.f32.mrb[0].mxu0
  %3758 = vmatprep.mubr.f32.mxu0 0.0
  %3759 = vmatmul.mubr.f32.gmra.mrb[0].mxu0 %v3663
  %v3760 = vpop.f32.mrb[0].mxu0
  %v3761 = vadd.f32 0.0, %v3760
  %v3762 = vpop.f32.mrb[0].mxu0
  %3763 = vmatprep.mubr.f32.mxu0 0.0
  %3764 = vmatmul.mubr.f32.gmra.mrb[0].mxu0 %v3666
  %v3765 = vpop.f32.mrb[0].mxu0
  %v3766 = vadd.f32 0.0, %v3765
  %v3767 = vpop.f32.mrb[0].mxu0
  %3768 = vmatprep.mubr.f32.mxu0 0.0
  %3769 = vmatmul.mubr.f32.gmra.mrb[0].mxu0 %v3669
  %v3770 = vpop.f32.mrb[0].mxu0
  %v3771 = vadd.f32 0.0, %v3770
  %v3772 = vpop.f32.mrb[0].mxu0
  %3773 = vmatprep.mubr.f32.mxu0 0.0
  %3774 = vmatmul.mubr.f32.gmra.mrb[0].mxu0 %v3672
  %v3775 = vpop.f32.mrb[0].mxu0
  %v3776 = vadd.f32 0.0, %v3775
  %v3777 = vpop.f32.mrb[0].mxu0
  %3778 = vdwg.mxu0
  %v3779 = vadd.f32 %v2183, %v3741
  %v3780 = vadd.f32 %v2184, %v3746
  %v3781 = vadd.f32 %v2185, %v3751
  %v3782 = vadd.f32 %v2186, %v3756
  %v3783 = vadd.f32 %v2187, %v3761
  %v3784 = vadd.f32 %v2188, %v3766
  %v3785 = vadd.f32 %v2189, %v3771
  %v3786 = vadd.f32 %v2190, %v3776
  %s3787 = scalar_lea.vmem %s5, 32
  %v3788 = vld [vmem:[%s3787] sm:$0xff]
  %v3789 = vld [vmem:[%s3787 + $0x8] sm:$0xff]
  %v3790 = vld [vmem:[%s3787 + $0x10] sm:$0xff]
  %v3791 = vld [vmem:[%s3787 + $0x18] sm:$0xff]
  %s3792 = scalar_lea.vmem %s6, 1
  %v3793 = vld [vmem:[%s3792] sm:$0x1]
  %v3795 = vlaneseq
  %v3796 = vshrl.u32 %v3795, 7
  %v3797 = vsub.s32 0, %v3796
  %v3798 = vrot.slane %v3793, %v3797
  %v3801 = vsel %vm290, %v3779, 0
  %v3804 = vsel %vm290, %v3780, 0
  %v3807 = vsel %vm290, %v3781, 0
  %v3810 = vsel %vm290, %v3782, 0
  %v3813 = vsel %vm290, %v3783, 0
  %v3816 = vsel %vm290, %v3784, 0
  %v3819 = vsel %vm290, %v3785, 0
  %v3822 = vsel %vm290, %v3786, 0
  %3824 = vmatprep.subr.mxu0 0.0
  %3825 = vmatpush1.msra.mxu0 %v3788
  %3826 = vmatprep.subr.mxu0 0.0
  %3827 = vmatpush1.msra.mxu0 %v3789
  %3828 = vmatprep.subr.mxu0 0.0
  %3829 = vmatpush1.msra.mxu0 %v3790
  %3830 = vmatprep.subr.mxu0 0.0
  %3831 = vmatpush1.msra.mxu0 %v3791
  %3832 = vmatprep.subr.mxu0 0.0
  %3833 = vmatpush1.msra.mxu0 0.0
  %3834 = vmatprep.subr.mxu0 0.0
  %3835 = vmatpush1.msra.mxu0 0.0
  %3836 = vmatprep.subr.mxu0 0.0
  %3837 = vmatpush1.msra.mxu0 0.0
  %3838 = vmatprep.subr.mxu0 0.0
  %3839 = vmatpush1.msra.mxu0 0.0
  %3840 = vmatprep.subr.mxu0 0.0
  %3841 = vmatpush1.msra.mxu0 0.0
  %3842 = vmatprep.subr.mxu0 0.0
  %3843 = vmatpush1.msra.mxu0 0.0
  %3844 = vmatprep.subr.mxu0 0.0
  %3845 = vmatpush1.msra.mxu0 0.0
  %3846 = vmatprep.subr.mxu0 0.0
  %3847 = vmatpush1.msra.mxu0 0.0
  %3848 = vmatprep.subr.mxu0 0.0
  %3849 = vmatpush1.msra.mxu0 0.0
  %3850 = vmatprep.subr.mxu0 0.0
  %3851 = vmatpush1.msra.mxu0 0.0
  %3852 = vmatprep.subr.mxu0 0.0
  %3853 = vmatpush1.msra.mxu0 0.0
  %3854 = vmatprep.subr.mxu0 0.0
  %3855 = vmatpush1.msra.mxu0 0.0
  %3856 = vmatprep.subr.mxu0 0.0
  %3857 = vmatpush1.msra.mxu0 0.0
  %3858 = vmatprep.subr.mxu0 0.0
  %3859 = vmatpush1.msra.mxu0 0.0
  %3860 = vmatprep.subr.mxu0 0.0
  %3861 = vmatpush1.msra.mxu0 0.0
  %3862 = vmatprep.subr.mxu0 0.0
  %3863 = vmatpush1.msra.mxu0 0.0
  %3864 = vmatprep.subr.mxu0 0.0
  %3865 = vmatpush1.msra.mxu0 0.0
  %3866 = vmatprep.subr.mxu0 0.0
  %3867 = vmatpush1.msra.mxu0 0.0
  %3868 = vmatprep.subr.mxu0 0.0
  %3869 = vmatpush1.msra.mxu0 0.0
  %3870 = vmatprep.subr.mxu0 0.0
  %3871 = vmatpush1.msra.mxu0 0.0
  %3872 = vmatprep.subr.mxu0 0.0
  %3873 = vmatpush1.msra.mxu0 0.0
  %3874 = vmatprep.subr.mxu0 0.0
  %3875 = vmatpush1.msra.mxu0 0.0
  %3876 = vmatprep.subr.mxu0 0.0
  %3877 = vmatpush1.msra.mxu0 0.0
  %3878 = vmatprep.subr.mxu0 0.0
  %3879 = vmatpush1.msra.mxu0 0.0
  %3880 = vmatprep.subr.mxu0 0.0
  %3881 = vmatpush1.msra.mxu0 0.0
  %3882 = vmatprep.subr.mxu0 0.0
  %3883 = vmatpush1.msra.mxu0 0.0
  %3884 = vmatprep.subr.mxu0 0.0
  %3885 = vmatpush1.msra.mxu0 0.0
  %3886 = vmatprep.subr.mxu0 0.0
  %3887 = vmatpush1.msra.mxu0 0.0
  %3888 = vmatprep.mubr.f32.mxu0 0.0
  %3889 = vmatmul.mubr.f32.gmra.mrb[0].mxu0 %v3801
  %v3890 = vpop.f32.mrb[0].mxu0
  %v3891 = vadd.f32 %v3798, %v3890
  %v3892 = vpop.f32.mrb[0].mxu0
  %3893 = vmatprep.mubr.f32.mxu0 0.0
  %3894 = vmatmul.mubr.f32.gmra.mrb[0].mxu0 %v3804
  %v3895 = vpop.f32.mrb[0].mxu0
  %v3896 = vadd.f32 %v3798, %v3895
  %v3897 = vpop.f32.mrb[0].mxu0
  %3898 = vmatprep.mubr.f32.mxu0 0.0
  %3899 = vmatmul.mubr.f32.gmra.mrb[0].mxu0 %v3807
  %v3900 = vpop.f32.mrb[0].mxu0
  %v3901 = vadd.f32 %v3798, %v3900
  %v3902 = vpop.f32.mrb[0].mxu0
  %3903 = vmatprep.mubr.f32.mxu0 0.0
  %3904 = vmatmul.mubr.f32.gmra.mrb[0].mxu0 %v3810
  %v3905 = vpop.f32.mrb[0].mxu0
  %v3906 = vadd.f32 %v3798, %v3905
  %v3907 = vpop.f32.mrb[0].mxu0
  %3908 = vmatprep.mubr.f32.mxu0 0.0
  %3909 = vmatmul.mubr.f32.gmra.mrb[0].mxu0 %v3813
  %v3910 = vpop.f32.mrb[0].mxu0
  %v3911 = vadd.f32 %v3798, %v3910
  %v3912 = vpop.f32.mrb[0].mxu0
  %3913 = vmatprep.mubr.f32.mxu0 0.0
  %3914 = vmatmul.mubr.f32.gmra.mrb[0].mxu0 %v3816
  %v3915 = vpop.f32.mrb[0].mxu0
  %v3916 = vadd.f32 %v3798, %v3915
  %v3917 = vpop.f32.mrb[0].mxu0
  %3918 = vmatprep.mubr.f32.mxu0 0.0
  %3919 = vmatmul.mubr.f32.gmra.mrb[0].mxu0 %v3819
  %v3920 = vpop.f32.mrb[0].mxu0
  %v3921 = vadd.f32 %v3798, %v3920
  %v3922 = vpop.f32.mrb[0].mxu0
  %3923 = vmatprep.mubr.f32.mxu0 0.0
  %3924 = vmatmul.mubr.f32.gmra.mrb[0].mxu0 %v3822
  %v3925 = vpop.f32.mrb[0].mxu0
  %v3926 = vadd.f32 %v3798, %v3925
  %v3927 = vpop.f32.mrb[0].mxu0
  %3928 = vdwg.mxu0
  %v3929 = vmax.f32 %v3891, 0.0
  %v3930 = vmax.f32 %v3896, 0.0
  %v3931 = vmax.f32 %v3901, 0.0
  %v3932 = vmax.f32 %v3906, 0.0
  %v3933 = vmax.f32 %v3911, 0.0
  %v3934 = vmax.f32 %v3916, 0.0
  %v3935 = vmax.f32 %v3921, 0.0
  %v3936 = vmax.f32 %v3926, 0.0
  %s3937 = scalar_lea.vmem %s7, 64
  %v3938 = vld [vmem:[%s3937] sm:$0xff]
  %v3939 = vld [vmem:[%s3937 + $0x8] sm:$0xff]
  %v3940 = vld [vmem:[%s3937 + $0x10] sm:$0xff]
  %v3941 = vld [vmem:[%s3937 + $0x18] sm:$0xff]
  %v3942 = vld [vmem:[%s3937 + $0x20] sm:$0xff]
  %v3943 = vld [vmem:[%s3937 + $0x28] sm:$0xff]
  %v3944 = vld [vmem:[%s3937 + $0x30] sm:$0xff]
  %v3945 = vld [vmem:[%s3937 + $0x38] sm:$0xff]
  %v3947 = vsel %vm2038, %v3929, 0
  %v3950 = vsel %vm2038, %v3930, 0
  %v3953 = vsel %vm2038, %v3931, 0
  %v3956 = vsel %vm2038, %v3932, 0
  %v3959 = vsel %vm2038, %v3933, 0
  %v3962 = vsel %vm2038, %v3934, 0
  %v3965 = vsel %vm2038, %v3935, 0
  %v3968 = vsel %vm2038, %v3936, 0
  %3970 = vmatprep.subr.mxu0 0.0
  %3971 = vmatpush1.msra.mxu0 %v3938
  %3972 = vmatprep.subr.mxu0 0.0
  %3973 = vmatpush1.msra.mxu0 %v3939
  %3974 = vmatprep.subr.mxu0 0.0
  %3975 = vmatpush1.msra.mxu0 %v3940
  %3976 = vmatprep.subr.mxu0 0.0
  %3977 = vmatpush1.msra.mxu0 %v3941
  %3978 = vmatprep.subr.mxu0 0.0
  %3979 = vmatpush1.msra.mxu0 %v3942
  %3980 = vmatprep.subr.mxu0 0.0
  %3981 = vmatpush1.msra.mxu0 %v3943
  %3982 = vmatprep.subr.mxu0 0.0
  %3983 = vmatpush1.msra.mxu0 %v3944
  %3984 = vmatprep.subr.mxu0 0.0
  %3985 = vmatpush1.msra.mxu0 %v3945
  %3986 = vmatprep.subr.mxu0 0.0
  %3987 = vmatpush1.msra.mxu0 0.0
  %3988 = vmatprep.subr.mxu0 0.0
  %3989 = vmatpush1.msra.mxu0 0.0
  %3990 = vmatprep.subr.mxu0 0.0
  %3991 = vmatpush1.msra.mxu0 0.0
  %3992 = vmatprep.subr.mxu0 0.0
  %3993 = vmatpush1.msra.mxu0 0.0
  %3994 = vmatprep.subr.mxu0 0.0
  %3995 = vmatpush1.msra.mxu0 0.0
  %3996 = vmatprep.subr.mxu0 0.0
  %3997 = vmatpush1.msra.mxu0 0.0
  %3998 = vmatprep.subr.mxu0 0.0
  %3999 = vmatpush1.msra.mxu0 0.0
  %4000 = vmatprep.subr.mxu0 0.0
  %4001 = vmatpush1.msra.mxu0 0.0
  %4002 = vmatprep.subr.mxu0 0.0
  %4003 = vmatpush1.msra.mxu0 0.0
  %4004 = vmatprep.subr.mxu0 0.0
  %4005 = vmatpush1.msra.mxu0 0.0
  %4006 = vmatprep.subr.mxu0 0.0
  %4007 = vmatpush1.msra.mxu0 0.0
  %4008 = vmatprep.subr.mxu0 0.0
  %4009 = vmatpush1.msra.mxu0 0.0
  %4010 = vmatprep.subr.mxu0 0.0
  %4011 = vmatpush1.msra.mxu0 0.0
  %4012 = vmatprep.subr.mxu0 0.0
  %4013 = vmatpush1.msra.mxu0 0.0
  %4014 = vmatprep.subr.mxu0 0.0
  %4015 = vmatpush1.msra.mxu0 0.0
  %4016 = vmatprep.subr.mxu0 0.0
  %4017 = vmatpush1.msra.mxu0 0.0
  %4018 = vmatprep.subr.mxu0 0.0
  %4019 = vmatpush1.msra.mxu0 0.0
  %4020 = vmatprep.subr.mxu0 0.0
  %4021 = vmatpush1.msra.mxu0 0.0
  %4022 = vmatprep.subr.mxu0 0.0
  %4023 = vmatpush1.msra.mxu0 0.0
  %4024 = vmatprep.subr.mxu0 0.0
  %4025 = vmatpush1.msra.mxu0 0.0
  %4026 = vmatprep.subr.mxu0 0.0
  %4027 = vmatpush1.msra.mxu0 0.0
  %4028 = vmatprep.subr.mxu0 0.0
  %4029 = vmatpush1.msra.mxu0 0.0
  %4030 = vmatprep.subr.mxu0 0.0
  %4031 = vmatpush1.msra.mxu0 0.0
  %4032 = vmatprep.subr.mxu0 0.0
  %4033 = vmatpush1.msra.mxu0 0.0
  %4034 = vmatprep.mubr.f32.mxu0 0.0
  %4035 = vmatmul.mubr.f32.gmra.mrb[0].mxu0 %v3947
  %v4036 = vpop.f32.mrb[0].mxu0
  %v4037 = vadd.f32 0.0, %v4036
  %v4038 = vpop.f32.mrb[0].mxu0
  %4039 = vmatprep.mubr.f32.mxu0 0.0
  %4040 = vmatmul.mubr.f32.gmra.mrb[0].mxu0 %v3950
  %v4041 = vpop.f32.mrb[0].mxu0
  %v4042 = vadd.f32 0.0, %v4041
  %v4043 = vpop.f32.mrb[0].mxu0
  %4044 = vmatprep.mubr.f32.mxu0 0.0
  %4045 = vmatmul.mubr.f32.gmra.mrb[0].mxu0 %v3953
  %v4046 = vpop.f32.mrb[0].mxu0
  %v4047 = vadd.f32 0.0, %v4046
  %v4048 = vpop.f32.mrb[0].mxu0
  %4049 = vmatprep.mubr.f32.mxu0 0.0
  %4050 = vmatmul.mubr.f32.gmra.mrb[0].mxu0 %v3956
  %v4051 = vpop.f32.mrb[0].mxu0
  %v4052 = vadd.f32 0.0, %v4051
  %v4053 = vpop.f32.mrb[0].mxu0
  %4054 = vmatprep.mubr.f32.mxu0 0.0
  %4055 = vmatmul.mubr.f32.gmra.mrb[0].mxu0 %v3959
  %v4056 = vpop.f32.mrb[0].mxu0
  %v4057 = vadd.f32 0.0, %v4056
  %v4058 = vpop.f32.mrb[0].mxu0
  %4059 = vmatprep.mubr.f32.mxu0 0.0
  %4060 = vmatmul.mubr.f32.gmra.mrb[0].mxu0 %v3962
  %v4061 = vpop.f32.mrb[0].mxu0
  %v4062 = vadd.f32 0.0, %v4061
  %v4063 = vpop.f32.mrb[0].mxu0
  %4064 = vmatprep.mubr.f32.mxu0 0.0
  %4065 = vmatmul.mubr.f32.gmra.mrb[0].mxu0 %v3965
  %v4066 = vpop.f32.mrb[0].mxu0
  %v4067 = vadd.f32 0.0, %v4066
  %v4068 = vpop.f32.mrb[0].mxu0
  %4069 = vmatprep.mubr.f32.mxu0 0.0
  %4070 = vmatmul.mubr.f32.gmra.mrb[0].mxu0 %v3968
  %v4071 = vpop.f32.mrb[0].mxu0
  %v4072 = vadd.f32 0.0, %v4071
  %v4073 = vpop.f32.mrb[0].mxu0
  %4074 = vdwg.mxu0
  %v4075 = vadd.f32 %v3779, %v4037
  %v4076 = vadd.f32 %v3780, %v4042
  %v4077 = vadd.f32 %v3781, %v4047
  %v4078 = vadd.f32 %v3782, %v4052
  %v4079 = vadd.f32 %v3783, %v4057
  %v4080 = vadd.f32 %v3784, %v4062
  %v4081 = vadd.f32 %v3785, %v4067
  %v4082 = vadd.f32 %v3786, %v4072
  %s4083 = scalar_lea.vmem %s8, 1
  %v4084 = vld [vmem:[%s4083] sm:$0x1]
  %v4086 = vlaneseq
  %v4087 = vshrl.u32 %v4086, 7
  %v4088 = vsub.s32 0, %v4087
  %v4089 = vrot.slane %v4084, %v4088
  %v4091 = vadd.f32 %v4075, %v4089
  %v4092 = vadd.f32 %v4076, %v4089
  %v4093 = vadd.f32 %v4077, %v4089
  %v4094 = vadd.f32 %v4078, %v4089
  %v4095 = vadd.f32 %v4079, %v4089
  %v4096 = vadd.f32 %v4080, %v4089
  %v4097 = vadd.f32 %v4081, %v4089
  %v4098 = vadd.f32 %v4082, %v4089
  %v4099 = vsel %vm290, %v4091, 0.0
  %v4100 = vrot.slane %v4099, 4
  %v4101 = vadd.f32 %v4099, %v4100
  %v4102 = vrot.slane %v4101, 2
  %v4103 = vadd.f32 %v4101, %v4102
  %v4104 = vrot.slane %v4103, 1
  %v4105 = vadd.f32 %v4103, %v4104
  %v4106 = vsel %vm290, %v4092, 0.0
  %v4107 = vrot.slane %v4106, 4
  %v4108 = vadd.f32 %v4106, %v4107
  %v4109 = vrot.slane %v4108, 2
  %v4110 = vadd.f32 %v4108, %v4109
  %v4111 = vrot.slane %v4110, 1
  %v4112 = vadd.f32 %v4110, %v4111
  %v4113 = vsel %vm290, %v4093, 0.0
  %v4114 = vrot.slane %v4113, 4
  %v4115 = vadd.f32 %v4113, %v4114
  %v4116 = vrot.slane %v4115, 2
  %v4117 = vadd.f32 %v4115, %v4116
  %v4118 = vrot.slane %v4117, 1
  %v4119 = vadd.f32 %v4117, %v4118
  %v4120 = vsel %vm290, %v4094, 0.0
  %v4121 = vrot.slane %v4120, 4
  %v4122 = vadd.f32 %v4120, %v4121
  %v4123 = vrot.slane %v4122, 2
  %v4124 = vadd.f32 %v4122, %v4123
  %v4125 = vrot.slane %v4124, 1
  %v4126 = vadd.f32 %v4124, %v4125
  %v4127 = vsel %vm290, %v4095, 0.0
  %v4128 = vrot.slane %v4127, 4
  %v4129 = vadd.f32 %v4127, %v4128
  %v4130 = vrot.slane %v4129, 2
  %v4131 = vadd.f32 %v4129, %v4130
  %v4132 = vrot.slane %v4131, 1
  %v4133 = vadd.f32 %v4131, %v4132
  %v4134 = vsel %vm290, %v4096, 0.0
  %v4135 = vrot.slane %v4134, 4
  %v4136 = vadd.f32 %v4134, %v4135
  %v4137 = vrot.slane %v4136, 2
  %v4138 = vadd.f32 %v4136, %v4137
  %v4139 = vrot.slane %v4138, 1
  %v4140 = vadd.f32 %v4138, %v4139
  %v4141 = vsel %vm290, %v4097, 0.0
  %v4142 = vrot.slane %v4141, 4
  %v4143 = vadd.f32 %v4141, %v4142
  %v4144 = vrot.slane %v4143, 2
  %v4145 = vadd.f32 %v4143, %v4144
  %v4146 = vrot.slane %v4145, 1
  %v4147 = vadd.f32 %v4145, %v4146
  %v4148 = vsel %vm290, %v4098, 0.0
  %v4149 = vrot.slane %v4148, 4
  %v4150 = vadd.f32 %v4148, %v4149
  %v4151 = vrot.slane %v4150, 2
  %v4152 = vadd.f32 %v4150, %v4151
  %v4153 = vrot.slane %v4152, 1
  %v4154 = vadd.f32 %v4152, %v4153
  %v4155 = vrcp.pop 8.0
  %v4156 = vmul.f32 %v4105, %v4155
  %v4157 = vmul.f32 %v4112, %v4155
  %v4158 = vmul.f32 %v4119, %v4155
  %v4159 = vmul.f32 %v4126, %v4155
  %v4160 = vmul.f32 %v4133, %v4155
  %v4161 = vmul.f32 %v4140, %v4155
  %v4162 = vmul.f32 %v4147, %v4155
  %v4163 = vmul.f32 %v4154, %v4155
  %v4164 = vld [vmem:[%s9] sm:$0xff]
  %v4165 = vld [vmem:[%s9 + $0x8] sm:$0xff]
  %v4166 = vld [vmem:[%s9 + $0x10] sm:$0xff]
  %v4167 = vld [vmem:[%s9 + $0x18] sm:$0xff]
  %v4168 = vld [vmem:[%s10] sm:$0x1]
  %v4170 = vlaneseq
  %v4171 = vshrl.u32 %v4170, 7
  %v4172 = vsub.s32 0, %v4171
  %v4173 = vrot.slane %v4168, %v4172
  %vm4183 = vcmask 1041409
  %v4184 = vsel %vm4183, %v4157, %v4156
  %vm4185 = vcmask 1042434
  %v4186 = vsel %vm4185, %v4158, %v4184
  %vm4187 = vcmask 1043459
  %v4188 = vsel %vm4187, %v4159, %v4186
  %vm4189 = vcmask 1044484
  %v4190 = vsel %vm4189, %v4160, %v4188
  %vm4191 = vcmask 1045509
  %v4192 = vsel %vm4191, %v4161, %v4190
  %vm4193 = vcmask 1046534
  %v4194 = vsel %vm4193, %v4162, %v4192
  %vm4195 = vcmask 1047559
  %v4196 = vsel %vm4195, %v4163, %v4194
  %v4197 = vsel %vm290, %v4196, 0
  %4199 = vmatprep.subr.mxu0 0.0
  %4200 = vmatpush1.msra.mxu0 %v4164
  %4201 = vmatprep.subr.mxu0 0.0
  %4202 = vmatpush1.msra.mxu0 %v4165
  %4203 = vmatprep.subr.mxu0 0.0
  %4204 = vmatpush1.msra.mxu0 %v4166
  %4205 = vmatprep.subr.mxu0 0.0
  %4206 = vmatpush1.msra.mxu0 %v4167
  %4207 = vmatprep.subr.mxu0 0.0
  %4208 = vmatpush1.msra.mxu0 0.0
  %4209 = vmatprep.subr.mxu0 0.0
  %4210 = vmatpush1.msra.mxu0 0.0
  %4211 = vmatprep.subr.mxu0 0.0
  %4212 = vmatpush1.msra.mxu0 0.0
  %4213 = vmatprep.subr.mxu0 0.0
  %4214 = vmatpush1.msra.mxu0 0.0
  %4215 = vmatprep.subr.mxu0 0.0
  %4216 = vmatpush1.msra.mxu0 0.0
  %4217 = vmatprep.subr.mxu0 0.0
  %4218 = vmatpush1.msra.mxu0 0.0
  %4219 = vmatprep.subr.mxu0 0.0
  %4220 = vmatpush1.msra.mxu0 0.0
  %4221 = vmatprep.subr.mxu0 0.0
  %4222 = vmatpush1.msra.mxu0 0.0
  %4223 = vmatprep.subr.mxu0 0.0
  %4224 = vmatpush1.msra.mxu0 0.0
  %4225 = vmatprep.subr.mxu0 0.0
  %4226 = vmatpush1.msra.mxu0 0.0
  %4227 = vmatprep.subr.mxu0 0.0
  %4228 = vmatpush1.msra.mxu0 0.0
  %4229 = vmatprep.subr.mxu0 0.0
  %4230 = vmatpush1.msra.mxu0 0.0
  %4231 = vmatprep.subr.mxu0 0.0
  %4232 = vmatpush1.msra.mxu0 0.0
  %4233 = vmatprep.subr.mxu0 0.0
  %4234 = vmatpush1.msra.mxu0 0.0
  %4235 = vmatprep.subr.mxu0 0.0
  %4236 = vmatpush1.msra.mxu0 0.0
  %4237 = vmatprep.subr.mxu0 0.0
  %4238 = vmatpush1.msra.mxu0 0.0
  %4239 = vmatprep.subr.mxu0 0.0
  %4240 = vmatpush1.msra.mxu0 0.0
  %4241 = vmatprep.subr.mxu0 0.0
  %4242 = vmatpush1.msra.mxu0 0.0
  %4243 = vmatprep.subr.mxu0 0.0
  %4244 = vmatpush1.msra.mxu0 0.0
  %4245 = vmatprep.subr.mxu0 0.0
  %4246 = vmatpush1.msra.mxu0 0.0
  %4247 = vmatprep.subr.mxu0 0.0
  %4248 = vmatpush1.msra.mxu0 0.0
  %4249 = vmatprep.subr.mxu0 0.0
  %4250 = vmatpush1.msra.mxu0 0.0
  %4251 = vmatprep.subr.mxu0 0.0
  %4252 = vmatpush1.msra.mxu0 0.0
  %4253 = vmatprep.subr.mxu0 0.0
  %4254 = vmatpush1.msra.mxu0 0.0
  %4255 = vmatprep.subr.mxu0 0.0
  %4256 = vmatpush1.msra.mxu0 0.0
  %4257 = vmatprep.subr.mxu0 0.0
  %4258 = vmatpush1.msra.mxu0 0.0
  %4259 = vmatprep.subr.mxu0 0.0
  %4260 = vmatpush1.msra.mxu0 0.0
  %4261 = vmatprep.subr.mxu0 0.0
  %4262 = vmatpush1.msra.mxu0 0.0
  %4263 = vmatprep.mubr.f32.mxu0 0.0
  %4264 = vmatmul.mubr.f32.gmra.mrb[0].mxu0 %v4197
  %v4265 = vpop.f32.mrb[0].mxu0
  %v4266 = vadd.f32 %v4173, %v4265
  %v4267 = vpop.f32.mrb[0].mxu0
  %4268 = vdwg.mxu0
  %v4269 = vmax.f32 %v4266, 0.0
  %v4270 = vld [vmem:[%s11] sm:$0xff]
  %v4271 = vld [vmem:[%s11 + $0x8] sm:$0xff]
  %v4272 = vld [vmem:[%s11 + $0x10] sm:$0xff]
  %v4273 = vld [vmem:[%s11 + $0x18] sm:$0xff]
  %v4274 = vld [vmem:[%s11 + $0x20] sm:$0xff]
  %v4275 = vld [vmem:[%s11 + $0x28] sm:$0xff]
  %v4276 = vld [vmem:[%s11 + $0x30] sm:$0xff]
  %v4277 = vld [vmem:[%s11 + $0x38] sm:$0xff]
  %v4278 = vld [vmem:[%s12] sm:$0x1]
  %v4280 = vlaneseq
  %v4281 = vshrl.u32 %v4280, 7
  %v4282 = vsub.s32 0, %v4281
  %v4283 = vrot.slane %v4278, %v4282
  %v4286 = vsel %vm2038, %v4269, 0
  %4288 = vmatprep.subr.mxu0 0.0
  %4289 = vmatpush1.msra.mxu0 %v4270
  %4290 = vmatprep.subr.mxu0 0.0
  %4291 = vmatpush1.msra.mxu0 %v4271
  %4292 = vmatprep.subr.mxu0 0.0
  %4293 = vmatpush1.msra.mxu0 %v4272
  %4294 = vmatprep.subr.mxu0 0.0
  %4295 = vmatpush1.msra.mxu0 %v4273
  %4296 = vmatprep.subr.mxu0 0.0
  %4297 = vmatpush1.msra.mxu0 %v4274
  %4298 = vmatprep.subr.mxu0 0.0
  %4299 = vmatpush1.msra.mxu0 %v4275
  %4300 = vmatprep.subr.mxu0 0.0
  %4301 = vmatpush1.msra.mxu0 %v4276
  %4302 = vmatprep.subr.mxu0 0.0
  %4303 = vmatpush1.msra.mxu0 %v4277
  %4304 = vmatprep.subr.mxu0 0.0
  %4305 = vmatpush1.msra.mxu0 0.0
  %4306 = vmatprep.subr.mxu0 0.0
  %4307 = vmatpush1.msra.mxu0 0.0
  %4308 = vmatprep.subr.mxu0 0.0
  %4309 = vmatpush1.msra.mxu0 0.0
  %4310 = vmatprep.subr.mxu0 0.0
  %4311 = vmatpush1.msra.mxu0 0.0
  %4312 = vmatprep.subr.mxu0 0.0
  %4313 = vmatpush1.msra.mxu0 0.0
  %4314 = vmatprep.subr.mxu0 0.0
  %4315 = vmatpush1.msra.mxu0 0.0
  %4316 = vmatprep.subr.mxu0 0.0
  %4317 = vmatpush1.msra.mxu0 0.0
  %4318 = vmatprep.subr.mxu0 0.0
  %4319 = vmatpush1.msra.mxu0 0.0
  %4320 = vmatprep.subr.mxu0 0.0
  %4321 = vmatpush1.msra.mxu0 0.0
  %4322 = vmatprep.subr.mxu0 0.0
  %4323 = vmatpush1.msra.mxu0 0.0
  %4324 = vmatprep.subr.mxu0 0.0
  %4325 = vmatpush1.msra.mxu0 0.0
  %4326 = vmatprep.subr.mxu0 0.0
  %4327 = vmatpush1.msra.mxu0 0.0
  %4328 = vmatprep.subr.mxu0 0.0
  %4329 = vmatpush1.msra.mxu0 0.0
  %4330 = vmatprep.subr.mxu0 0.0
  %4331 = vmatpush1.msra.mxu0 0.0
  %4332 = vmatprep.subr.mxu0 0.0
  %4333 = vmatpush1.msra.mxu0 0.0
  %4334 = vmatprep.subr.mxu0 0.0
  %4335 = vmatpush1.msra.mxu0 0.0
  %4336 = vmatprep.subr.mxu0 0.0
  %4337 = vmatpush1.msra.mxu0 0.0
  %4338 = vmatprep.subr.mxu0 0.0
  %4339 = vmatpush1.msra.mxu0 0.0
  %4340 = vmatprep.subr.mxu0 0.0
  %4341 = vmatpush1.msra.mxu0 0.0
  %4342 = vmatprep.subr.mxu0 0.0
  %4343 = vmatpush1.msra.mxu0 0.0
  %4344 = vmatprep.subr.mxu0 0.0
  %4345 = vmatpush1.msra.mxu0 0.0
  %4346 = vmatprep.subr.mxu0 0.0
  %4347 = vmatpush1.msra.mxu0 0.0
  %4348 = vmatprep.subr.mxu0 0.0
  %4349 = vmatpush1.msra.mxu0 0.0
  %4350 = vmatprep.subr.mxu0 0.0
  %4351 = vmatpush1.msra.mxu0 0.0
  %4352 = vmatprep.mubr.f32.mxu0 0.0
  %4353 = vmatmul.mubr.f32.gmra.mrb[0].mxu0 %v4286
  %v4354 = vpop.f32.mrb[0].mxu0
  %v4355 = vadd.f32 %v4283, %v4354
  %v4356 = vpop.f32.mrb[0].mxu0
  %4357 = vdwg.mxu0
  %vm4358 = vcmask 31744
  %4359 = vst.msk [vmem:[%s13] sm:$0xff] %vm4358, %v4355
  // Predicated region
  $region54: #{tpu_custom_call.1} parent=0 // pred_check
    _
  $region55: #{tpu_custom_call.1} parent=0 // pred_check_branch
    %4361 = sbr.rel (0) target = $region57
  $region56: #{tpu_custom_call.1} parent=0 // pred_region
    _
  $region57: #{tpu_custom_call.1} parent=0 // pred_fallthru
    _
  // Predicated region
  $region58: #{tpu_custom_call.1} parent=0 // pred_check
    _
  $region59: #{tpu_custom_call.1} parent=0 // pred_check_branch
    %4363 = sbr.rel (0) target = $region61
  $region60: #{tpu_custom_call.1} parent=0 // pred_region
    _
  $region61: #{tpu_custom_call.1} parent=0 // pred_fallthru
    _

</llo_original>
